<compile_context>
chip_gen: v7x
topology: tpu7x:2x2x1
jax: 0.10.0
libtpu: 0.0.40
codegen_flags: <defaults>
</compile_context>

<pallas_src>
import functools

import numpy as np
import jax
import jax.numpy as jnp
from jax import lax
from jax.experimental import pallas as pl
from jax.experimental.pallas import tpu as pltpu

K1, C1 = 8, 32            # conv1: kernel_size=8, out_channels=32, in_channels=1
K2, C2 = 5, 64            # conv2: kernel_size=5, out_channels=64, in_channels=32
K12 = K1 + K2 - 1         # 12: receptive field of one conv2 output sample
HALO = K12 - 1            # 11 extra input samples needed per output-time tile


def _cdiv(a, b):
    return -(-a // b)


def _tpu_defaults():
    """(batch_tile, time_tile, vmem_limit_bytes) chosen per TPU generation."""
    try:
        kind = jax.devices()[0].device_kind.lower()
    except Exception:
        kind = ""
    if "v7" in kind or "7x" in kind:
        # 64 MiB physical VMEM, 2 TensorCores per chip.
        return 32, 512, 48 * 1024 * 1024
    if any(g in kind for g in ("v4", "v5", "v6")):
        # 128 MiB physical VMEM.
        return 64, 512, 100 * 1024 * 1024
    return 32, 512, 64 * 1024 * 1024


def dfcnn_kernel(x_ref, halo_ref, wband_ref, b1_ref, w2_ref, b2_ref,
                 wfc_ref, bfc_ref, out_ref, maxacc_ref, *,
                 tt, l2, matmul_dtype, mask_tail):
    t = pl.program_id(1)

    @pl.when(t == 0)
    def _init():                     # fresh running max per batch tile
        maxacc_ref[...] = jnp.full(maxacc_ref.shape, -jnp.inf,
                                   dtype=maxacc_ref.dtype)

    # (bt, tt + HALO) input slab = non-overlapping block + its 11-sample halo.
    x_slab = jnp.concatenate([x_ref[...], halo_ref[0]], axis=1)

    # conv1 fused into the conv2 im2col: 12-wide windows @ banded (12, 160)
    # weight give h1c[b, j, k*C1 + c] = relu(conv1)[b, j+k, c] directly (MXU).
    x_col = jnp.concatenate(
        [x_slab[:, m:m + tt, None] for m in range(K12)], axis=-1)    # (bt, tt, 12)
    h1c = lax.dot_general(x_col.astype(matmul_dtype), wband_ref[...],
                          dimension_numbers=(((2,), (0,)), ((), ())),
                          preferred_element_type=jnp.float32)        # (bt, tt, 160)
    h1c = jnp.maximum(h1c + b1_ref[...][None], 0.0)

    # conv2 as one 160-deep matmul (MXU), bias + ReLU in f32 (VPU).
    h2 = lax.dot_general(h1c.astype(matmul_dtype), w2_ref[...],
                         dimension_numbers=(((2,), (0,)), ((), ())),
                         preferred_element_type=jnp.float32)         # (bt, tt, C2)
    h2 = jnp.maximum(h2 + b2_ref[...][None], 0.0)

    if mask_tail:
        # Zero out positions past the valid conv2 length (ragged last tile).
        # Safe under max-pool since every valid ReLU output is >= 0.
        j = t * tt + lax.broadcasted_iota(jnp.int32, (1, tt, 1), 1)
        h2 = jnp.where(j < l2, h2, 0.0)

    # AdaptiveMaxPool1d(1) folded into a running max (f32 scratch).
    maxacc_ref[...] = jnp.maximum(maxacc_ref[...], jnp.max(h2, axis=1))

    # FC once, on the last time tile (time axis is innermost / sequential).
    @pl.when(t == pl.num_programs(1) - 1)
    def _finalize():
        pooled = maxacc_ref[...]                                     # (bt, C2)
        out = lax.dot_general(pooled.astype(matmul_dtype), wfc_ref[...],
                              dimension_numbers=(((1,), (0,)), ((), ())),
                              preferred_element_type=jnp.float32) + bfc_ref[...]
        out_ref[...] = out.astype(out_ref.dtype)


def dfcnn_forward(x, params, *, batch_tile=None, time_tile=None,
                  matmul_dtype=jnp.bfloat16, vmem_limit_bytes=None):
    """x: (B, L) float32. Returns (B, num_classes) float32.

    The time grid axis carries the running-max reduction and MUST stay the
    innermost ("arbitrary") axis with the per-batch-tile re-init; the batch
    axis is "parallel" (megacore sharded on v7x).  Defaults for tiles and the
    VMEM limit are picked per TPU generation in _tpu_defaults().
    """
    wband, b1c, w2, b2, wfc, bfc = params
    B, L = x.shape
    num_classes = wfc.shape[1]

    bt_def, tt_def, vmem_def = _tpu_defaults()
    batch_tile = bt_def if batch_tile is None else batch_tile
    time_tile = tt_def if time_tile is None else time_tile
    vmem_limit_bytes = vmem_def if vmem_limit_bytes is None else vmem_limit_bytes

    l2 = L - HALO                     # conv2 output length
    assert l2 >= 1, "sequence too short for kernel sizes 8 and 5"

    # ---- time tiling (lane axis): multiple of 128 whenever the axis is tiled
    tt = min(time_tile, l2)
    if tt < l2:
        tt = max(128, (tt // 128) * 128)
    nt = _cdiv(l2, tt)

    # ---- batch tiling (sublane axis)
    bt = min(batch_tile, B)
    if bt >= B and B >= 16:
        bt = (_cdiv(B, 2) + 7) // 8 * 8    # >= 2 batch tiles so both v7x TCs work
    if bt < B:
        bt = max(8, (bt // 8) * 8)         # sublane-aligned when tiling the batch
    b_pad = _cdiv(B, bt) * bt

    # ---- inputs: non-overlapping blocks + tiny per-tile halos (no HBM dup)
    lt = nt * tt                            # samples covered by blocked loads
    l_need = lt + HALO                      # plus the final tile's halo (>= L)
    x_pad = jnp.pad(x, ((0, b_pad - B), (0, l_need - L)))
    x_main = x_pad[:, :lt]                                          # (b_pad, lt)
    halo_idx = (jnp.arange(nt)[:, None] + 1) * tt + jnp.arange(HALO)[None, :]
    halo = jnp.transpose(x_pad[:, halo_idx], (1, 0, 2))             # (nt, b_pad, 11)

    # ---- weights: pad FC to 128 lanes, cast matmul operands once (hoisted)
    ncp = _cdiv(num_classes, 128) * 128
    wfc_p = jnp.pad(wfc, ((0, 0), (0, ncp - num_classes)))
    bfc_p = jnp.pad(bfc, ((0, 0), (0, ncp - num_classes)))
    wband_m = wband.astype(matmul_dtype)
    w2_m = w2.astype(matmul_dtype)
    wfc_m = wfc_p.astype(matmul_dtype)

    kernel = functools.partial(dfcnn_kernel, tt=tt, l2=l2,
                               matmul_dtype=matmul_dtype,
                               mask_tail=(nt * tt > l2))
    out = pl.pallas_call(
        kernel,
        out_shape=jax.ShapeDtypeStruct((b_pad, ncp), jnp.float32),
        grid=(b_pad // bt, nt),
        in_specs=[
            pl.BlockSpec((bt, tt), lambda i, t: (i, t)),
            pl.BlockSpec((1, bt, HALO), lambda i, t: (t, i, 0)),
            pl.BlockSpec((K12, K2 * C1), lambda i, t: (0, 0)),
            pl.BlockSpec((1, K2 * C1), lambda i, t: (0, 0)),
            pl.BlockSpec((K2 * C1, C2), lambda i, t: (0, 0)),
            pl.BlockSpec((1, C2), lambda i, t: (0, 0)),
            pl.BlockSpec((C2, ncp), lambda i, t: (0, 0)),
            pl.BlockSpec((1, ncp), lambda i, t: (0, 0)),
        ],
        out_specs=pl.BlockSpec((bt, ncp), lambda i, t: (i, 0)),
        scratch_shapes=[pltpu.VMEM((bt, C2), jnp.float32)],
        compiler_params=pltpu.CompilerParams(
            dimension_semantics=("parallel", "arbitrary"),
            vmem_limit_bytes=vmem_limit_bytes),
    )(x_main, halo, wband_m, b1c, w2_m, b2, wfc_m, bfc_p)
    return out[:B, :num_classes]


def make_params(key, num_classes):
    """Deterministic synthetic params with the same shapes as the torch module."""
    k = jax.random.split(key, 6)
    # torch shapes: conv1.weight (32,1,8), conv2.weight (64,32,5), fc.weight (C,64)
    w1_t = jax.random.normal(k[0], (C1, 1, K1), jnp.float32) * 0.1
    b1_t = jax.random.normal(k[1], (C1,), jnp.float32) * 0.1
    w2_t = jax.random.normal(k[2], (C2, C1, K2), jnp.float32) * 0.05
    b2_t = jax.random.normal(k[3], (C2,), jnp.float32) * 0.1
    wfc_t = jax.random.normal(k[4], (num_classes, C2), jnp.float32) * 0.1
    bfc_t = jax.random.normal(k[5], (num_classes,), jnp.float32) * 0.1

    # ---- kernel-friendly layouts ----
    # Banded conv1 weight: Wband[m, k*C1 + c] = w1[m-k, c] for 0 <= m-k < K1.
    w1 = np.asarray(w1_t)[:, 0, :].T                               # (K1, C1)
    wband = np.zeros((K12, K2 * C1), np.float32)
    for kk in range(K2):
        wband[kk:kk + K1, kk * C1:(kk + 1) * C1] = w1
    b1c = np.tile(np.asarray(b1_t), K2).reshape(1, K2 * C1)        # (1, 160)
    w2 = jnp.transpose(w2_t, (2, 1, 0)).reshape(K2 * C1, C2)       # (160, 64)
    wfc = jnp.transpose(wfc_t, (1, 0))                             # (64, num_classes)

    params = (jnp.asarray(wband), jnp.asarray(b1c), w2,
              b2_t.reshape(1, C2), wfc, bfc_t.reshape(1, num_classes))
    torch_params = (w1_t, b1_t, w2_t, b2_t, wfc_t, bfc_t)
    return params, torch_params


def ref_forward(x, torch_params):
    """Pure-JAX reference mirroring the PyTorch forward (NCL convs)."""
    w1_t, b1_t, w2_t, b2_t, wfc_t, bfc_t = torch_params
    xb = x[:, None, :]                                             # (B, 1, L)
    dn = ("NCH", "OIH", "NCH")
    h1 = lax.conv_general_dilated(xb, w1_t, (1,), "VALID", dimension_numbers=dn)
    h1 = jnp.maximum(h1 + b1_t[None, :, None], 0.0)
    h2 = lax.conv_general_dilated(h1, w2_t, (1,), "VALID", dimension_numbers=dn)
    h2 = jnp.maximum(h2 + b2_t[None, :, None], 0.0)
    pooled = jnp.max(h2, axis=-1)                                  # (B, 64)
    return pooled @ wfc_t.T + bfc_t


if __name__ == "__main__":
    NUM_CLASSES = 8
    key = jax.random.PRNGKey(0)
    kx1, kx2, kp = jax.random.split(key, 3)
    params, torch_params = make_params(kp, NUM_CLASSES)

    # Case 1: tiny batch / short sequence -> single time tile, single batch tile.
    x1 = jax.random.normal(kx1, (2, 64), jnp.float32)
    ref1 = jax.block_until_ready(ref_forward(x1, torch_params))

    out1_f32 = jax.block_until_ready(
        dfcnn_forward(x1, params, matmul_dtype=jnp.float32))
    np.testing.assert_allclose(np.asarray(out1_f32), np.asarray(ref1),
                               rtol=1e-4, atol=1e-4)

    out1_bf16 = jax.block_until_ready(
        dfcnn_forward(x1, params, matmul_dtype=jnp.bfloat16))
    np.testing.assert_allclose(np.asarray(out1_bf16), np.asarray(ref1),
                               rtol=5e-2, atol=5e-2)

    # Case 2: tiled batch (with padding) + tiled time with a ragged, masked
    # last tile and per-tile halos -> exercises the streamed running-max path.
    x2 = jax.random.normal(kx2, (10, 300), jnp.float32)
    ref2 = jax.block_until_ready(ref_forward(x2, torch_params))
    out2 = jax.block_until_ready(
        dfcnn_forward(x2, params, batch_tile=8, time_tile=128,
                      matmul_dtype=jnp.float32))
    np.testing.assert_allclose(np.asarray(out2), np.asarray(ref2),
                               rtol=1e-4, atol=1e-4)

    print("KERNEL_OK")
</pallas_src>

<mosaic_0001>
module attributes {stable_mosaic.version = 11 : i64} {
  func.func @dfcnn_kernel(%arg0: i32, %arg1: i32, %arg2: memref<2x53xf32, #tpu.memory_space<vmem>>, %arg3: memref<1x2x11xf32, #tpu.memory_space<vmem>>, %arg4: memref<12x160xf32, #tpu.memory_space<vmem>>, %arg5: memref<1x160xf32, #tpu.memory_space<vmem>>, %arg6: memref<160x64xf32, #tpu.memory_space<vmem>>, %arg7: memref<1x64xf32, #tpu.memory_space<vmem>>, %arg8: memref<64x128xf32, #tpu.memory_space<vmem>>, %arg9: memref<1x128xf32, #tpu.memory_space<vmem>>, %arg10: memref<2x128xf32, #tpu.memory_space<vmem>>, %arg11: memref<2x64xf32, #tpu.memory_space<vmem>>) attributes {dimension_semantics = [#tpu.dimension_semantics<parallel>, #tpu.dimension_semantics<arbitrary>], iteration_bounds = array<i64: 1, 1>, scalar_prefetch = 0 : i64, scratch_operands = 1 : i64, tpu.core_type = #tpu.core_type<tc>, window_params = [{transform_indices = @transform_0, window_bounds = array<i64: 2, 53>}, {transform_indices = @transform_1, window_bounds = array<i64: 1, 2, 11>}, {pipeline_mode = #tpu.pipeline_mode<synchronous>, transform_indices = @transform_2, window_bounds = array<i64: 12, 160>}, {pipeline_mode = #tpu.pipeline_mode<synchronous>, transform_indices = @transform_3, window_bounds = array<i64: 1, 160>}, {pipeline_mode = #tpu.pipeline_mode<synchronous>, transform_indices = @transform_4, window_bounds = array<i64: 160, 64>}, {pipeline_mode = #tpu.pipeline_mode<synchronous>, transform_indices = @transform_5, window_bounds = array<i64: 1, 64>}, {pipeline_mode = #tpu.pipeline_mode<synchronous>, transform_indices = @transform_6, window_bounds = array<i64: 64, 128>}, {pipeline_mode = #tpu.pipeline_mode<synchronous>, transform_indices = @transform_7, window_bounds = array<i64: 1, 128>}, {transform_indices = @transform_8, window_bounds = array<i64: 2, 128>}]} {
    %c0_i32 = arith.constant 0 : i32
    %0 = arith.cmpi eq, %arg1, %c0_i32 : i32
    %1 = arith.extui %0 : i1 to i32
    %c0_i32_0 = arith.constant 0 : i32
    %2 = arith.cmpi ne, %1, %c0_i32_0 : i32
    scf.if %2 {
      %cst_23 = arith.constant 0xFF800000 : f32
      %55 = vector.broadcast %cst_23 : f32 to vector<2x64xf32>
      %c0_24 = arith.constant 0 : index
      %c0_25 = arith.constant 0 : index
      %56 = vector.load %arg11[%c0_24, %c0_25] : memref<2x64xf32, #tpu.memory_space<vmem>>, vector<2x64xf32>
      tpu.vector_store %arg11[%c0_24, %c0_25], %55 {strides = array<i32>} : memref<2x64xf32, #tpu.memory_space<vmem>>, vector<2x64xf32>,
    } else {
    }
    %c0 = arith.constant 0 : index
    %c0_1 = arith.constant 0 : index
    %3 = vector.load %arg2[%c0, %c0_1] : memref<2x53xf32, #tpu.memory_space<vmem>>, vector<2x53xf32>
    %c0_2 = arith.constant 0 : index
    %c0_3 = arith.constant 0 : index
    %c0_4 = arith.constant 0 : index
    %4 = vector.load %arg3[%c0_2, %c0_3, %c0_4] : memref<1x2x11xf32, #tpu.memory_space<vmem>>, vector<1x2x11xf32>
    %5 = vector.shape_cast %4 : vector<1x2x11xf32> to vector<2x11xf32>
    %6 = tpu.concatenate %3, %5 in 1 : vector<2x53xf32>, vector<2x11xf32> -> vector<2x64xf32>
    %7 = vector.extract_strided_slice %6 {offsets = [0, 0], sizes = [2, 53], strides = [1, 1]} : vector<2x64xf32> to vector<2x53xf32>
    %8 = vector.shape_cast %7 : vector<2x53xf32> to vector<2x53x1xf32>
    %9 = vector.extract_strided_slice %6 {offsets = [0, 1], sizes = [2, 53], strides = [1, 1]} : vector<2x64xf32> to vector<2x53xf32>
    %10 = vector.shape_cast %9 : vector<2x53xf32> to vector<2x53x1xf32>
    %11 = vector.extract_strided_slice %6 {offsets = [0, 2], sizes = [2, 53], strides = [1, 1]} : vector<2x64xf32> to vector<2x53xf32>
    %12 = vector.shape_cast %11 : vector<2x53xf32> to vector<2x53x1xf32>
    %13 = vector.extract_strided_slice %6 {offsets = [0, 3], sizes = [2, 53], strides = [1, 1]} : vector<2x64xf32> to vector<2x53xf32>
    %14 = vector.shape_cast %13 : vector<2x53xf32> to vector<2x53x1xf32>
    %15 = vector.extract_strided_slice %6 {offsets = [0, 4], sizes = [2, 53], strides = [1, 1]} : vector<2x64xf32> to vector<2x53xf32>
    %16 = vector.shape_cast %15 : vector<2x53xf32> to vector<2x53x1xf32>
    %17 = vector.extract_strided_slice %6 {offsets = [0, 5], sizes = [2, 53], strides = [1, 1]} : vector<2x64xf32> to vector<2x53xf32>
    %18 = vector.shape_cast %17 : vector<2x53xf32> to vector<2x53x1xf32>
    %19 = vector.extract_strided_slice %6 {offsets = [0, 6], sizes = [2, 53], strides = [1, 1]} : vector<2x64xf32> to vector<2x53xf32>
    %20 = vector.shape_cast %19 : vector<2x53xf32> to vector<2x53x1xf32>
    %21 = vector.extract_strided_slice %6 {offsets = [0, 7], sizes = [2, 53], strides = [1, 1]} : vector<2x64xf32> to vector<2x53xf32>
    %22 = vector.shape_cast %21 : vector<2x53xf32> to vector<2x53x1xf32>
    %23 = vector.extract_strided_slice %6 {offsets = [0, 8], sizes = [2, 53], strides = [1, 1]} : vector<2x64xf32> to vector<2x53xf32>
    %24 = vector.shape_cast %23 : vector<2x53xf32> to vector<2x53x1xf32>
    %25 = vector.extract_strided_slice %6 {offsets = [0, 9], sizes = [2, 53], strides = [1, 1]} : vector<2x64xf32> to vector<2x53xf32>
    %26 = vector.shape_cast %25 : vector<2x53xf32> to vector<2x53x1xf32>
    %27 = vector.extract_strided_slice %6 {offsets = [0, 10], sizes = [2, 53], strides = [1, 1]} : vector<2x64xf32> to vector<2x53xf32>
    %28 = vector.shape_cast %27 : vector<2x53xf32> to vector<2x53x1xf32>
    %29 = vector.extract_strided_slice %6 {offsets = [0, 11], sizes = [2, 53], strides = [1, 1]} : vector<2x64xf32> to vector<2x53xf32>
    %30 = vector.shape_cast %29 : vector<2x53xf32> to vector<2x53x1xf32>
    %31 = tpu.concatenate %8, %10, %12, %14, %16, %18, %20, %22, %24, %26, %28, %30 in 2 : vector<2x53x1xf32>, vector<2x53x1xf32>, vector<2x53x1xf32>, vector<2x53x1xf32>, vector<2x53x1xf32>, vector<2x53x1xf32>, vector<2x53x1xf32>, vector<2x53x1xf32>, vector<2x53x1xf32>, vector<2x53x1xf32>, vector<2x53x1xf32>, vector<2x53x1xf32> -> vector<2x53x12xf32>
    %c0_5 = arith.constant 0 : index
    %c0_6 = arith.constant 0 : index
    %32 = vector.load %arg4[%c0_5, %c0_6] : memref<12x160xf32, #tpu.memory_space<vmem>>, vector<12x160xf32>
    %cst = arith.constant dense<0.000000e+00> : vector<2x53x160xf32>
    %33 = tpu.matmul %31, %32, %cst {dimension_numbers = #tpu.dot_dimension_numbers<[2], [0], [0, 1], [1], [0, 0, 0, 1, 1, 1], [], []>} : vector<2x53x12xf32>, vector<12x160xf32>, vector<2x53x160xf32> -> vector<2x53x160xf32>
    %c0_7 = arith.constant 0 : index
    %c0_8 = arith.constant 0 : index
    %34 = vector.load %arg5[%c0_7, %c0_8] : memref<1x160xf32, #tpu.memory_space<vmem>>, vector<1x160xf32>
    %35 = vector.shape_cast %34 : vector<1x160xf32> to vector<1x1x160xf32>
    %36 = vector.broadcast %35 : vector<1x1x160xf32> to vector<2x53x160xf32>
    %37 = arith.addf %33, %36 : vector<2x53x160xf32>
    %cst_9 = arith.constant 0.000000e+00 : f32
    %38 = vector.broadcast %cst_9 : f32 to vector<2x53x160xf32>
    %39 = arith.maximumf %37, %38 : vector<2x53x160xf32>
    %c0_10 = arith.constant 0 : index
    %c0_11 = arith.constant 0 : index
    %40 = vector.load %arg6[%c0_10, %c0_11] : memref<160x64xf32, #tpu.memory_space<vmem>>, vector<160x64xf32>
    %cst_12 = arith.constant dense<0.000000e+00> : vector<2x53x64xf32>
    %41 = tpu.matmul %39, %40, %cst_12 {dimension_numbers = #tpu.dot_dimension_numbers<[2], [0], [0, 1], [1], [0, 0, 0, 1, 1, 1], [], []>} : vector<2x53x160xf32>, vector<160x64xf32>, vector<2x53x64xf32> -> vector<2x53x64xf32>
    %c0_13 = arith.constant 0 : index
    %c0_14 = arith.constant 0 : index
    %42 = vector.load %arg7[%c0_13, %c0_14] : memref<1x64xf32, #tpu.memory_space<vmem>>, vector<1x64xf32>
    %43 = vector.shape_cast %42 : vector<1x64xf32> to vector<1x1x64xf32>
    %44 = vector.broadcast %43 : vector<1x1x64xf32> to vector<2x53x64xf32>
    %45 = arith.addf %41, %44 : vector<2x53x64xf32>
    %cst_15 = arith.constant 0.000000e+00 : f32
    %46 = vector.broadcast %cst_15 : f32 to vector<2x53x64xf32>
    %47 = arith.maximumf %45, %46 : vector<2x53x64xf32>
    %c0_16 = arith.constant 0 : index
    %c0_17 = arith.constant 0 : index
    %48 = vector.load %arg11[%c0_16, %c0_17] : memref<2x64xf32, #tpu.memory_space<vmem>>, vector<2x64xf32>
    %cst_18 = arith.constant dense<0xFF800000> : vector<2x64xf32>
    %49 = vector.multi_reduction <maximumf>, %47, %cst_18 [1] : vector<2x53x64xf32> to vector<2x64xf32>
    %50 = arith.maximumf %48, %49 : vector<2x64xf32>
    %c0_19 = arith.constant 0 : index
    %c0_20 = arith.constant 0 : index
    %51 = vector.load %arg11[%c0_19, %c0_20] : memref<2x64xf32, #tpu.memory_space<vmem>>, vector<2x64xf32>
    tpu.vector_store %arg11[%c0_19, %c0_20], %50 {strides = array<i32>} : memref<2x64xf32, #tpu.memory_space<vmem>>, vector<2x64xf32>,
    %c0_i32_21 = arith.constant 0 : i32
    %52 = arith.cmpi eq, %arg1, %c0_i32_21 : i32
    %53 = arith.extui %52 : i1 to i32
    %c0_i32_22 = arith.constant 0 : i32
    %54 = arith.cmpi ne, %53, %c0_i32_22 : i32
    scf.if %54 {
      %c0_23 = arith.constant 0 : index
      %c0_24 = arith.constant 0 : index
      %55 = vector.load %arg11[%c0_23, %c0_24] : memref<2x64xf32, #tpu.memory_space<vmem>>, vector<2x64xf32>
      %c0_25 = arith.constant 0 : index
      %c0_26 = arith.constant 0 : index
      %56 = vector.load %arg8[%c0_25, %c0_26] : memref<64x128xf32, #tpu.memory_space<vmem>>, vector<64x128xf32>
      %cst_27 = arith.constant dense<0.000000e+00> : vector<2x128xf32>
      %57 = tpu.matmul %55, %56, %cst_27 {dimension_numbers = #tpu.dot_dimension_numbers<[1], [0], [0], [1], [0, 0, 1, 1], [], []>} : vector<2x64xf32>, vector<64x128xf32>, vector<2x128xf32> -> vector<2x128xf32>
      %c0_28 = arith.constant 0 : index
      %c0_29 = arith.constant 0 : index
      %58 = vector.load %arg9[%c0_28, %c0_29] : memref<1x128xf32, #tpu.memory_space<vmem>>, vector<1x128xf32>
      %59 = vector.broadcast %58 : vector<1x128xf32> to vector<2x128xf32>
      %60 = arith.addf %57, %59 : vector<2x128xf32>
      %c0_30 = arith.constant 0 : index
      %c0_31 = arith.constant 0 : index
      %61 = vector.load %arg10[%c0_30, %c0_31] : memref<2x128xf32, #tpu.memory_space<vmem>>, vector<2x128xf32>
      tpu.vector_store %arg10[%c0_30, %c0_31], %60 {strides = array<i32>} : memref<2x128xf32, #tpu.memory_space<vmem>>, vector<2x128xf32>,
    } else {
    }
    return
  }
  func.func @transform_0(%arg0: i32, %arg1: i32) -> (i32, i32) {
    %c0_i32 = arith.constant 0 : i32
    return %arg0, %arg1 : i32, i32
  }
  func.func @transform_1(%arg0: i32, %arg1: i32) -> (i32, i32, i32) {
    %c0_i32 = arith.constant 0 : i32
    %c0_i32_0 = arith.constant 0 : i32
    return %arg1, %arg0, %c0_i32 : i32, i32, i32
  }
  func.func @transform_2(%arg0: i32, %arg1: i32) -> (i32, i32) {
    %c0_i32 = arith.constant 0 : i32
    %c0_i32_0 = arith.constant 0 : i32
    %c0_i32_1 = arith.constant 0 : i32
    return %c0_i32, %c0_i32_0 : i32, i32
  }
  func.func @transform_3(%arg0: i32, %arg1: i32) -> (i32, i32) {
    %c0_i32 = arith.constant 0 : i32
    %c0_i32_0 = arith.constant 0 : i32
    %c0_i32_1 = arith.constant 0 : i32
    return %c0_i32, %c0_i32_0 : i32, i32
  }
  func.func @transform_4(%arg0: i32, %arg1: i32) -> (i32, i32) {
    %c0_i32 = arith.constant 0 : i32
    %c0_i32_0 = arith.constant 0 : i32
    %c0_i32_1 = arith.constant 0 : i32
    return %c0_i32, %c0_i32_0 : i32, i32
  }
  func.func @transform_5(%arg0: i32, %arg1: i32) -> (i32, i32) {
    %c0_i32 = arith.constant 0 : i32
    %c0_i32_0 = arith.constant 0 : i32
    %c0_i32_1 = arith.constant 0 : i32
    return %c0_i32, %c0_i32_0 : i32, i32
  }
  func.func @transform_6(%arg0: i32, %arg1: i32) -> (i32, i32) {
    %c0_i32 = arith.constant 0 : i32
    %c0_i32_0 = arith.constant 0 : i32
    %c0_i32_1 = arith.constant 0 : i32
    return %c0_i32, %c0_i32_0 : i32, i32
  }
  func.func @transform_7(%arg0: i32, %arg1: i32) -> (i32, i32) {
    %c0_i32 = arith.constant 0 : i32
    %c0_i32_0 = arith.constant 0 : i32
    %c0_i32_1 = arith.constant 0 : i32
    return %c0_i32, %c0_i32_0 : i32, i32
  }
  func.func @transform_8(%arg0: i32, %arg1: i32) -> (i32, i32) {
    %c0_i32 = arith.constant 0 : i32
    %c0_i32_0 = arith.constant 0 : i32
    return %arg0, %c0_i32 : i32, i32
  }
}

</mosaic_0001>

<llo_original>
// kernel: tpu_custom_call.1
$region0: #{tpu_custom_call.1}
  #allocation0 [shape = 'u32[]', space=smem, size = 0x4, offset = 0x4, fixed_abs, tag = 'smem constant byte address 0x4 - core index']
  #allocation1 [shape = 'u32[144,128]{1,0:T(1,128)}', space=vmem, size = 0x12000, scoped, tag = 'internal scratch']
  #allocation2 [shape = 'f32[2,64]{1,0:T(2,128)}', space=vmem, size = 0x400, scoped, tag = 'scratch operand']
  %s0 = inlined_call_operand.hbm [shape: f32[2,53], index: 0, kind: input, shape index: {}]
  %s1 = inlined_call_operand.hbm [shape: f32[1,2,11], index: 1, kind: input, shape index: {}]
  %s2 = inlined_call_operand.hbm [shape: f32[12,160], index: 2, kind: input, shape index: {}]
  %s3 = inlined_call_operand.hbm [shape: f32[1,160], index: 3, kind: input, shape index: {}]
  %s4 = inlined_call_operand.hbm [shape: f32[160,64], index: 4, kind: input, shape index: {}]
  %s5 = inlined_call_operand.hbm [shape: f32[1,64], index: 5, kind: input, shape index: {}]
  %s6 = inlined_call_operand.hbm [shape: f32[64,128], index: 6, kind: input, shape index: {}]
  %s7 = inlined_call_operand.hbm [shape: f32[1,128], index: 7, kind: input, shape index: {}]
  %s8 = inlined_call_operand.hbm [shape: f32[2,128], index: 8, kind: output, shape index: {}]
  %s9 = sld [smem:[#allocation0]]
  $region82: #{tpu_custom_call.1} parent=0
    _
  %s11 = ssub.s32 1, %s9
  %s12 = scalar_select 0, %s11, %s9
  $region1: #{tpu_custom_call.1} parent=0
    #allocation3 [shape = 'u8[1024]{0}', space=vmem, size = 0x400, scoped, tag = 'input window, operand 0, single buffered']
    #allocation4 [shape = 's32[1]{0}', space=sflag, size = 0x4, scoped, tag = 'scoped memory for tpu_custom_call.1']
    #allocation5 [shape = 's32[1]{0}', space=sflag, size = 0x4, scoped, tag = 'scoped memory for tpu_custom_call.1']
    #allocation6 [shape = 'u8[1024]{0}', space=vmem, size = 0x400, scoped, tag = 'input window, operand 1, single buffered']
    #allocation7 [shape = 's32[1]{0}', space=sflag, size = 0x4, scoped, tag = 'scoped memory for tpu_custom_call.1']
    #allocation8 [shape = 'u8[16384]{0}', space=vmem, size = 0x4000, scoped, tag = 'input window, operand 2, single buffered']
    #allocation9 [shape = 'u8[1024]{0}', space=vmem, size = 0x400, scoped, tag = 'input window, operand 3, single buffered']
    #allocation10 [shape = 's32[1]{0}', space=sflag, size = 0x4, scoped, tag = 'scoped memory for tpu_custom_call.1']
    #allocation11 [shape = 'u8[81920]{0}', space=vmem, size = 0x14000, scoped, tag = 'input window, operand 4, single buffered']
    #allocation12 [shape = 'u8[512]{0}', space=vmem, size = 0x400, scoped, tag = 'input window, operand 5, single buffered']
    #allocation13 [shape = 's32[1]{0}', space=sflag, size = 0x4, scoped, tag = 'scoped memory for tpu_custom_call.1']
    #allocation14 [shape = 'u8[32768]{0}', space=vmem, size = 0x8000, scoped, tag = 'input window, operand 6, single buffered']
    #allocation15 [shape = 'u8[512]{0}', space=vmem, size = 0x400, scoped, tag = 'input window, operand 7, single buffered']
    #allocation16 [shape = 's32[1]{0}', space=sflag, size = 0x4, scoped, tag = 'scoped memory for tpu_custom_call.1']
    #allocation17 [shape = 'u8[1024]{0}', space=vmem, size = 0x400, scoped, tag = 'output window, operand 0, single buffered']
    %13 = vsyncpa [#allocation4], 0
    %14 = vsyncpa [#allocation7], 0
    %15 = vsyncpa [#allocation10], 0
    %16 = vsyncpa [#allocation13], 0
    %17 = vsyncpa [#allocation16], 0
    %18 = vsyncpa [#allocation5], 0
    // Predicated region
    $region2: #{tpu_custom_call.1} parent=1 // pred_check
      _
    $region3: #{tpu_custom_call.1} parent=1 // pred_check_branch
      %20 = sbr.rel (0) target = $region5
    $region4: #{tpu_custom_call.1} parent=1 // pred_region
      %s22 = ssub.s32 32, 32
      %23 = vsyncadd [#allocation4], %s22
      %s25 = sshll.u32 [#allocation3], 4
      %s26 = int_to_ptr.vmem [resolvable:$true] %s25
      %28 = dma.hbm_to_vmem [thread:$0]  %s0, 32, %s26, [#allocation4]
    $region5: #{tpu_custom_call.1} parent=1 // pred_fallthru
      _
    // Predicated region
    $region6: #{tpu_custom_call.1} parent=1 // pred_check
      _
    $region7: #{tpu_custom_call.1} parent=1 // pred_check_branch
      %30 = sbr.rel (0) target = $region9
    $region8: #{tpu_custom_call.1} parent=1 // pred_region
      %s32 = ssub.s32 32, 32
      %33 = vsyncadd [#allocation7], %s32
      %s35 = sshll.u32 [#allocation6], 4
      %s36 = int_to_ptr.vmem [resolvable:$true] %s35
      %38 = dma.hbm_to_vmem [thread:$0]  %s1, 32, %s36, [#allocation7]
    $region9: #{tpu_custom_call.1} parent=1 // pred_fallthru
      _
    // Predicated region
    $region10: #{tpu_custom_call.1} parent=1 // pred_check
      _
    $region11: #{tpu_custom_call.1} parent=1 // pred_check_branch
      %40 = sbr.rel (0) target = $region13
    $region12: #{tpu_custom_call.1} parent=1 // pred_region
      %s42 = ssub.s32 512, 512
      %43 = vsyncadd [#allocation7], %s42
      %s44 = sshll.u32 [#allocation8], 4
      %s45 = int_to_ptr.vmem [resolvable:$true] %s44
      %50 = dma.hbm_to_vmem [thread:$0]  %s2, 512, %s45, [#allocation7], 256, 256, 16
    $region13: #{tpu_custom_call.1} parent=1 // pred_fallthru
      _
    // Predicated region
    $region14: #{tpu_custom_call.1} parent=1 // pred_check
      _
    $region15: #{tpu_custom_call.1} parent=1 // pred_check_branch
      %52 = sbr.rel (0) target = $region17
    $region16: #{tpu_custom_call.1} parent=1 // pred_region
      %s54 = ssub.s32 32, 32
      %55 = vsyncadd [#allocation10], %s54
      %s57 = sshll.u32 [#allocation9], 4
      %s58 = int_to_ptr.vmem [resolvable:$true] %s57
      %60 = dma.hbm_to_vmem [thread:$0]  %s3, 32, %s58, [#allocation10]
    $region17: #{tpu_custom_call.1} parent=1 // pred_fallthru
      _
    // Predicated region
    $region18: #{tpu_custom_call.1} parent=1 // pred_check
      _
    $region19: #{tpu_custom_call.1} parent=1 // pred_check_branch
      %62 = sbr.rel (0) target = $region21
    $region20: #{tpu_custom_call.1} parent=1 // pred_region
      %s64 = ssub.s32 2560, 2560
      %65 = vsyncadd [#allocation10], %s64
      %s66 = sshll.u32 [#allocation11], 4
      %s67 = int_to_ptr.vmem [resolvable:$true] %s66
      %72 = dma.hbm_to_vmem [thread:$0]  %s4, 2560, %s67, [#allocation10], 128, 128, 8
    $region21: #{tpu_custom_call.1} parent=1 // pred_fallthru
      _
    // Predicated region
    $region22: #{tpu_custom_call.1} parent=1 // pred_check
      _
    $region23: #{tpu_custom_call.1} parent=1 // pred_check_branch
      %74 = sbr.rel (0) target = $region25
    $region24: #{tpu_custom_call.1} parent=1 // pred_region
      %s76 = ssub.s32 16, 16
      %77 = vsyncadd [#allocation13], %s76
      %s79 = sshll.u32 [#allocation12], 4
      %s80 = int_to_ptr.vmem [resolvable:$true] %s79
      %82 = dma.hbm_to_vmem [thread:$0]  %s5, 16, %s80, [#allocation13]
    $region25: #{tpu_custom_call.1} parent=1 // pred_fallthru
      _
    // Predicated region
    $region26: #{tpu_custom_call.1} parent=1 // pred_check
      _
    $region27: #{tpu_custom_call.1} parent=1 // pred_check_branch
      %84 = sbr.rel (0) target = $region29
    $region28: #{tpu_custom_call.1} parent=1 // pred_region
      %s86 = ssub.s32 1024, 1024
      %87 = vsyncadd [#allocation13], %s86
      %s88 = sshll.u32 [#allocation14], 4
      %s89 = int_to_ptr.vmem [resolvable:$true] %s88
      %94 = dma.hbm_to_vmem [thread:$0]  %s6, 1024, %s89, [#allocation13], 128, 128, 8
    $region29: #{tpu_custom_call.1} parent=1 // pred_fallthru
      _
    // Predicated region
    $region30: #{tpu_custom_call.1} parent=1 // pred_check
      _
    $region31: #{tpu_custom_call.1} parent=1 // pred_check_branch
      %96 = sbr.rel (0) target = $region33
    $region32: #{tpu_custom_call.1} parent=1 // pred_region
      %s98 = ssub.s32 16, 16
      %99 = vsyncadd [#allocation16], %s98
      %s101 = sshll.u32 [#allocation15], 4
      %s102 = int_to_ptr.vmem [resolvable:$true] %s101
      %104 = dma.hbm_to_vmem [thread:$0]  %s7, 16, %s102, [#allocation16]
    $region33: #{tpu_custom_call.1} parent=1 // pred_fallthru
      _
    // Predicated region
    $region34: #{tpu_custom_call.1} parent=1 // pred_check
      _
    $region35: #{tpu_custom_call.1} parent=1 // pred_check_branch
      %106 = sbr.rel (0) target = $region37
    $region36: #{tpu_custom_call.1} parent=1 // pred_region
      %107 = dma.done [#allocation4], 32
    $region37: #{tpu_custom_call.1} parent=1 // pred_fallthru
      _
    // Predicated region
    $region38: #{tpu_custom_call.1} parent=1 // pred_check
      _
    $region39: #{tpu_custom_call.1} parent=1 // pred_check_branch
      %109 = sbr.rel (0) target = $region41
    $region40: #{tpu_custom_call.1} parent=1 // pred_region
      %110 = dma.done [#allocation7], 32
    $region41: #{tpu_custom_call.1} parent=1 // pred_fallthru
      _
    // Predicated region
    $region42: #{tpu_custom_call.1} parent=1 // pred_check
      _
    $region43: #{tpu_custom_call.1} parent=1 // pred_check_branch
      %112 = sbr.rel (0) target = $region45
    $region44: #{tpu_custom_call.1} parent=1 // pred_region
      %113 = dma.done [#allocation7], 512
    $region45: #{tpu_custom_call.1} parent=1 // pred_fallthru
      _
    // Predicated region
    $region46: #{tpu_custom_call.1} parent=1 // pred_check
      _
    $region47: #{tpu_custom_call.1} parent=1 // pred_check_branch
      %115 = sbr.rel (0) target = $region49
    $region48: #{tpu_custom_call.1} parent=1 // pred_region
      %116 = dma.done [#allocation10], 32
    $region49: #{tpu_custom_call.1} parent=1 // pred_fallthru
      _
    // Predicated region
    $region50: #{tpu_custom_call.1} parent=1 // pred_check
      _
    $region51: #{tpu_custom_call.1} parent=1 // pred_check_branch
      %118 = sbr.rel (0) target = $region53
    $region52: #{tpu_custom_call.1} parent=1 // pred_region
      %119 = dma.done [#allocation10], 2560
    $region53: #{tpu_custom_call.1} parent=1 // pred_fallthru
      _
    // Predicated region
    $region54: #{tpu_custom_call.1} parent=1 // pred_check
      _
    $region55: #{tpu_custom_call.1} parent=1 // pred_check_branch
      %121 = sbr.rel (0) target = $region57
    $region56: #{tpu_custom_call.1} parent=1 // pred_region
      %122 = dma.done [#allocation13], 16
    $region57: #{tpu_custom_call.1} parent=1 // pred_fallthru
      _
    // Predicated region
    $region58: #{tpu_custom_call.1} parent=1 // pred_check
      _
    $region59: #{tpu_custom_call.1} parent=1 // pred_check_branch
      %124 = sbr.rel (0) target = $region61
    $region60: #{tpu_custom_call.1} parent=1 // pred_region
      %125 = dma.done [#allocation13], 1024
    $region61: #{tpu_custom_call.1} parent=1 // pred_fallthru
      _
    // Predicated region
    $region62: #{tpu_custom_call.1} parent=1 // pred_check
      _
    $region63: #{tpu_custom_call.1} parent=1 // pred_check_branch
      %127 = sbr.rel (0) target = $region65
    $region64: #{tpu_custom_call.1} parent=1 // pred_region
      %128 = dma.done [#allocation16], 16
    $region65: #{tpu_custom_call.1} parent=1 // pred_fallthru
      _
    %p129 = scmp.eq.s32.totalorder 0, 0
    // Predicated region
    $region66: #{tpu_custom_call.1} parent=1 // pred_check
      %p130 = pneg %p129
    $region67: #{tpu_custom_call.1} parent=1 // pred_check_branch
      %132 = sbr.rel (%p130) target = $region69
    $region68: #{tpu_custom_call.1} parent=1 // pred_region
      %vm133 = vcmask 517120
      %134 = vst.msk [vmem:[#allocation2] sm:$0x3] %vm133, -inf
    $region69: #{tpu_custom_call.1} parent=1 // pred_fallthru
      _
    %v135 = vld [vmem:[#allocation3] sm:$0x3]
    %v136 = vld [vmem:[#allocation6] sm:$0x3]
    %138 = vrot.lane.b32.xlu0 %v136, 53
    %v139 = vpop.permute.xlu0 %138
    %vm141 = vcmask 433152
    %v142 = vsel %vm141, %v135, %v139
    %v143 = vlaneseq
    %v144 = vshrl.u32 %v143, 7
    %v145 = vsub.s32 0, %v144
    %v146 = vrot.slane %v142, %v145
    %148 = vbcast.lane.b32.xlu0 %v146, 256
    %v149 = vpop.permute.xlu0 %148
    %s151 = sor.u32 256, 8
    %152 = vbcast.lane.b32.xlu0 %v146, %s151
    %v153 = vpop.permute.xlu0 %152
    %s155 = sor.u32 256, 16
    %156 = vbcast.lane.b32.xlu0 %v146, %s155
    %v157 = vpop.permute.xlu0 %156
    %s159 = sor.u32 256, 24
    %160 = vbcast.lane.b32.xlu0 %v146, %s159
    %v161 = vpop.permute.xlu0 %160
    %s163 = sor.u32 256, 32
    %164 = vbcast.lane.b32.xlu0 %v146, %s163
    %v165 = vpop.permute.xlu0 %164
    %s167 = sor.u32 256, 40
    %168 = vbcast.lane.b32.xlu0 %v146, %s167
    %v169 = vpop.permute.xlu0 %168
    %s171 = sor.u32 256, 48
    %172 = vbcast.lane.b32.xlu0 %v146, %s171
    %v173 = vpop.permute.xlu0 %172
    %v174 = vlaneseq
    %v175 = vshrl.u32 %v174, 7
    %v176 = vsub.s32 1, %v175
    %v177 = vrot.slane %v142, %v176
    %179 = vbcast.lane.b32.xlu0 %v177, 256
    %v180 = vpop.permute.xlu0 %179
    %s182 = sor.u32 256, 8
    %183 = vbcast.lane.b32.xlu0 %v177, %s182
    %v184 = vpop.permute.xlu0 %183
    %s186 = sor.u32 256, 16
    %187 = vbcast.lane.b32.xlu0 %v177, %s186
    %v188 = vpop.permute.xlu0 %187
    %s190 = sor.u32 256, 24
    %191 = vbcast.lane.b32.xlu0 %v177, %s190
    %v192 = vpop.permute.xlu0 %191
    %s194 = sor.u32 256, 32
    %195 = vbcast.lane.b32.xlu0 %v177, %s194
    %v196 = vpop.permute.xlu0 %195
    %s198 = sor.u32 256, 40
    %199 = vbcast.lane.b32.xlu0 %v177, %s198
    %v200 = vpop.permute.xlu0 %199
    %s202 = sor.u32 256, 48
    %203 = vbcast.lane.b32.xlu0 %v177, %s202
    %v204 = vpop.permute.xlu0 %203
    %s206 = sor.u32 256, 1
    %207 = vbcast.lane.b32.xlu0 %v146, %s206
    %v208 = vpop.permute.xlu0 %207
    %s210 = sor.u32 256, 9
    %211 = vbcast.lane.b32.xlu0 %v146, %s210
    %v212 = vpop.permute.xlu0 %211
    %s214 = sor.u32 256, 17
    %215 = vbcast.lane.b32.xlu0 %v146, %s214
    %v216 = vpop.permute.xlu0 %215
    %s218 = sor.u32 256, 25
    %219 = vbcast.lane.b32.xlu0 %v146, %s218
    %v220 = vpop.permute.xlu0 %219
    %s222 = sor.u32 256, 33
    %223 = vbcast.lane.b32.xlu0 %v146, %s222
    %v224 = vpop.permute.xlu0 %223
    %s226 = sor.u32 256, 41
    %227 = vbcast.lane.b32.xlu0 %v146, %s226
    %v228 = vpop.permute.xlu0 %227
    %s230 = sor.u32 256, 49
    %231 = vbcast.lane.b32.xlu0 %v146, %s230
    %v232 = vpop.permute.xlu0 %231
    %s234 = sor.u32 256, 1
    %235 = vbcast.lane.b32.xlu0 %v177, %s234
    %v236 = vpop.permute.xlu0 %235
    %s238 = sor.u32 256, 9
    %239 = vbcast.lane.b32.xlu0 %v177, %s238
    %v240 = vpop.permute.xlu0 %239
    %s242 = sor.u32 256, 17
    %243 = vbcast.lane.b32.xlu0 %v177, %s242
    %v244 = vpop.permute.xlu0 %243
    %s246 = sor.u32 256, 25
    %247 = vbcast.lane.b32.xlu0 %v177, %s246
    %v248 = vpop.permute.xlu0 %247
    %s250 = sor.u32 256, 33
    %251 = vbcast.lane.b32.xlu0 %v177, %s250
    %v252 = vpop.permute.xlu0 %251
    %s254 = sor.u32 256, 41
    %255 = vbcast.lane.b32.xlu0 %v177, %s254
    %v256 = vpop.permute.xlu0 %255
    %s258 = sor.u32 256, 49
    %259 = vbcast.lane.b32.xlu0 %v177, %s258
    %v260 = vpop.permute.xlu0 %259
    %s262 = sor.u32 256, 2
    %263 = vbcast.lane.b32.xlu0 %v146, %s262
    %v264 = vpop.permute.xlu0 %263
    %s266 = sor.u32 256, 10
    %267 = vbcast.lane.b32.xlu0 %v146, %s266
    %v268 = vpop.permute.xlu0 %267
    %s270 = sor.u32 256, 18
    %271 = vbcast.lane.b32.xlu0 %v146, %s270
    %v272 = vpop.permute.xlu0 %271
    %s274 = sor.u32 256, 26
    %275 = vbcast.lane.b32.xlu0 %v146, %s274
    %v276 = vpop.permute.xlu0 %275
    %s278 = sor.u32 256, 34
    %279 = vbcast.lane.b32.xlu0 %v146, %s278
    %v280 = vpop.permute.xlu0 %279
    %s282 = sor.u32 256, 42
    %283 = vbcast.lane.b32.xlu0 %v146, %s282
    %v284 = vpop.permute.xlu0 %283
    %s286 = sor.u32 256, 50
    %287 = vbcast.lane.b32.xlu0 %v146, %s286
    %v288 = vpop.permute.xlu0 %287
    %s290 = sor.u32 256, 2
    %291 = vbcast.lane.b32.xlu0 %v177, %s290
    %v292 = vpop.permute.xlu0 %291
    %s294 = sor.u32 256, 10
    %295 = vbcast.lane.b32.xlu0 %v177, %s294
    %v296 = vpop.permute.xlu0 %295
    %s298 = sor.u32 256, 18
    %299 = vbcast.lane.b32.xlu0 %v177, %s298
    %v300 = vpop.permute.xlu0 %299
    %s302 = sor.u32 256, 26
    %303 = vbcast.lane.b32.xlu0 %v177, %s302
    %v304 = vpop.permute.xlu0 %303
    %s306 = sor.u32 256, 34
    %307 = vbcast.lane.b32.xlu0 %v177, %s306
    %v308 = vpop.permute.xlu0 %307
    %s310 = sor.u32 256, 42
    %311 = vbcast.lane.b32.xlu0 %v177, %s310
    %v312 = vpop.permute.xlu0 %311
    %s314 = sor.u32 256, 50
    %315 = vbcast.lane.b32.xlu0 %v177, %s314
    %v316 = vpop.permute.xlu0 %315
    %s318 = sor.u32 256, 3
    %319 = vbcast.lane.b32.xlu0 %v146, %s318
    %v320 = vpop.permute.xlu0 %319
    %s322 = sor.u32 256, 11
    %323 = vbcast.lane.b32.xlu0 %v146, %s322
    %v324 = vpop.permute.xlu0 %323
    %s326 = sor.u32 256, 19
    %327 = vbcast.lane.b32.xlu0 %v146, %s326
    %v328 = vpop.permute.xlu0 %327
    %s330 = sor.u32 256, 27
    %331 = vbcast.lane.b32.xlu0 %v146, %s330
    %v332 = vpop.permute.xlu0 %331
    %s334 = sor.u32 256, 35
    %335 = vbcast.lane.b32.xlu0 %v146, %s334
    %v336 = vpop.permute.xlu0 %335
    %s338 = sor.u32 256, 43
    %339 = vbcast.lane.b32.xlu0 %v146, %s338
    %v340 = vpop.permute.xlu0 %339
    %s342 = sor.u32 256, 51
    %343 = vbcast.lane.b32.xlu0 %v146, %s342
    %v344 = vpop.permute.xlu0 %343
    %s346 = sor.u32 256, 3
    %347 = vbcast.lane.b32.xlu0 %v177, %s346
    %v348 = vpop.permute.xlu0 %347
    %s350 = sor.u32 256, 11
    %351 = vbcast.lane.b32.xlu0 %v177, %s350
    %v352 = vpop.permute.xlu0 %351
    %s354 = sor.u32 256, 19
    %355 = vbcast.lane.b32.xlu0 %v177, %s354
    %v356 = vpop.permute.xlu0 %355
    %s358 = sor.u32 256, 27
    %359 = vbcast.lane.b32.xlu0 %v177, %s358
    %v360 = vpop.permute.xlu0 %359
    %s362 = sor.u32 256, 35
    %363 = vbcast.lane.b32.xlu0 %v177, %s362
    %v364 = vpop.permute.xlu0 %363
    %s366 = sor.u32 256, 43
    %367 = vbcast.lane.b32.xlu0 %v177, %s366
    %v368 = vpop.permute.xlu0 %367
    %s370 = sor.u32 256, 51
    %371 = vbcast.lane.b32.xlu0 %v177, %s370
    %v372 = vpop.permute.xlu0 %371
    %s374 = sor.u32 256, 4
    %375 = vbcast.lane.b32.xlu0 %v146, %s374
    %v376 = vpop.permute.xlu0 %375
    %s378 = sor.u32 256, 12
    %379 = vbcast.lane.b32.xlu0 %v146, %s378
    %v380 = vpop.permute.xlu0 %379
    %s382 = sor.u32 256, 20
    %383 = vbcast.lane.b32.xlu0 %v146, %s382
    %v384 = vpop.permute.xlu0 %383
    %s386 = sor.u32 256, 28
    %387 = vbcast.lane.b32.xlu0 %v146, %s386
    %v388 = vpop.permute.xlu0 %387
    %s390 = sor.u32 256, 36
    %391 = vbcast.lane.b32.xlu0 %v146, %s390
    %v392 = vpop.permute.xlu0 %391
    %s394 = sor.u32 256, 44
    %395 = vbcast.lane.b32.xlu0 %v146, %s394
    %v396 = vpop.permute.xlu0 %395
    %s398 = sor.u32 256, 52
    %399 = vbcast.lane.b32.xlu0 %v146, %s398
    %v400 = vpop.permute.xlu0 %399
    %s402 = sor.u32 256, 4
    %403 = vbcast.lane.b32.xlu0 %v177, %s402
    %v404 = vpop.permute.xlu0 %403
    %s406 = sor.u32 256, 12
    %407 = vbcast.lane.b32.xlu0 %v177, %s406
    %v408 = vpop.permute.xlu0 %407
    %s410 = sor.u32 256, 20
    %411 = vbcast.lane.b32.xlu0 %v177, %s410
    %v412 = vpop.permute.xlu0 %411
    %s414 = sor.u32 256, 28
    %415 = vbcast.lane.b32.xlu0 %v177, %s414
    %v416 = vpop.permute.xlu0 %415
    %s418 = sor.u32 256, 36
    %419 = vbcast.lane.b32.xlu0 %v177, %s418
    %v420 = vpop.permute.xlu0 %419
    %s422 = sor.u32 256, 44
    %423 = vbcast.lane.b32.xlu0 %v177, %s422
    %v424 = vpop.permute.xlu0 %423
    %s426 = sor.u32 256, 52
    %427 = vbcast.lane.b32.xlu0 %v177, %s426
    %v428 = vpop.permute.xlu0 %427
    %s430 = sor.u32 256, 5
    %431 = vbcast.lane.b32.xlu0 %v146, %s430
    %v432 = vpop.permute.xlu0 %431
    %s434 = sor.u32 256, 13
    %435 = vbcast.lane.b32.xlu0 %v146, %s434
    %v436 = vpop.permute.xlu0 %435
    %s438 = sor.u32 256, 21
    %439 = vbcast.lane.b32.xlu0 %v146, %s438
    %v440 = vpop.permute.xlu0 %439
    %s442 = sor.u32 256, 29
    %443 = vbcast.lane.b32.xlu0 %v146, %s442
    %v444 = vpop.permute.xlu0 %443
    %s446 = sor.u32 256, 37
    %447 = vbcast.lane.b32.xlu0 %v146, %s446
    %v448 = vpop.permute.xlu0 %447
    %s450 = sor.u32 256, 45
    %451 = vbcast.lane.b32.xlu0 %v146, %s450
    %v452 = vpop.permute.xlu0 %451
    %s454 = sor.u32 256, 53
    %455 = vbcast.lane.b32.xlu0 %v146, %s454
    %v456 = vpop.permute.xlu0 %455
    %s458 = sor.u32 256, 5
    %459 = vbcast.lane.b32.xlu0 %v177, %s458
    %v460 = vpop.permute.xlu0 %459
    %s462 = sor.u32 256, 13
    %463 = vbcast.lane.b32.xlu0 %v177, %s462
    %v464 = vpop.permute.xlu0 %463
    %s466 = sor.u32 256, 21
    %467 = vbcast.lane.b32.xlu0 %v177, %s466
    %v468 = vpop.permute.xlu0 %467
    %s470 = sor.u32 256, 29
    %471 = vbcast.lane.b32.xlu0 %v177, %s470
    %v472 = vpop.permute.xlu0 %471
    %s474 = sor.u32 256, 37
    %475 = vbcast.lane.b32.xlu0 %v177, %s474
    %v476 = vpop.permute.xlu0 %475
    %s478 = sor.u32 256, 45
    %479 = vbcast.lane.b32.xlu0 %v177, %s478
    %v480 = vpop.permute.xlu0 %479
    %s482 = sor.u32 256, 53
    %483 = vbcast.lane.b32.xlu0 %v177, %s482
    %v484 = vpop.permute.xlu0 %483
    %s486 = sor.u32 256, 6
    %487 = vbcast.lane.b32.xlu0 %v146, %s486
    %v488 = vpop.permute.xlu0 %487
    %s490 = sor.u32 256, 14
    %491 = vbcast.lane.b32.xlu0 %v146, %s490
    %v492 = vpop.permute.xlu0 %491
    %s494 = sor.u32 256, 22
    %495 = vbcast.lane.b32.xlu0 %v146, %s494
    %v496 = vpop.permute.xlu0 %495
    %s498 = sor.u32 256, 30
    %499 = vbcast.lane.b32.xlu0 %v146, %s498
    %v500 = vpop.permute.xlu0 %499
    %s502 = sor.u32 256, 38
    %503 = vbcast.lane.b32.xlu0 %v146, %s502
    %v504 = vpop.permute.xlu0 %503
    %s506 = sor.u32 256, 46
    %507 = vbcast.lane.b32.xlu0 %v146, %s506
    %v508 = vpop.permute.xlu0 %507
    %s510 = sor.u32 256, 54
    %511 = vbcast.lane.b32.xlu0 %v146, %s510
    %v512 = vpop.permute.xlu0 %511
    %s514 = sor.u32 256, 6
    %515 = vbcast.lane.b32.xlu0 %v177, %s514
    %v516 = vpop.permute.xlu0 %515
    %s518 = sor.u32 256, 14
    %519 = vbcast.lane.b32.xlu0 %v177, %s518
    %v520 = vpop.permute.xlu0 %519
    %s522 = sor.u32 256, 22
    %523 = vbcast.lane.b32.xlu0 %v177, %s522
    %v524 = vpop.permute.xlu0 %523
    %s526 = sor.u32 256, 30
    %527 = vbcast.lane.b32.xlu0 %v177, %s526
    %v528 = vpop.permute.xlu0 %527
    %s530 = sor.u32 256, 38
    %531 = vbcast.lane.b32.xlu0 %v177, %s530
    %v532 = vpop.permute.xlu0 %531
    %s534 = sor.u32 256, 46
    %535 = vbcast.lane.b32.xlu0 %v177, %s534
    %v536 = vpop.permute.xlu0 %535
    %s538 = sor.u32 256, 54
    %539 = vbcast.lane.b32.xlu0 %v177, %s538
    %v540 = vpop.permute.xlu0 %539
    %s542 = sor.u32 256, 7
    %543 = vbcast.lane.b32.xlu0 %v146, %s542
    %v544 = vpop.permute.xlu0 %543
    %s546 = sor.u32 256, 15
    %547 = vbcast.lane.b32.xlu0 %v146, %s546
    %v548 = vpop.permute.xlu0 %547
    %s550 = sor.u32 256, 23
    %551 = vbcast.lane.b32.xlu0 %v146, %s550
    %v552 = vpop.permute.xlu0 %551
    %s554 = sor.u32 256, 31
    %555 = vbcast.lane.b32.xlu0 %v146, %s554
    %v556 = vpop.permute.xlu0 %555
    %s558 = sor.u32 256, 39
    %559 = vbcast.lane.b32.xlu0 %v146, %s558
    %v560 = vpop.permute.xlu0 %559
    %s562 = sor.u32 256, 47
    %563 = vbcast.lane.b32.xlu0 %v146, %s562
    %v564 = vpop.permute.xlu0 %563
    %s566 = sor.u32 256, 55
    %567 = vbcast.lane.b32.xlu0 %v146, %s566
    %v568 = vpop.permute.xlu0 %567
    %s570 = sor.u32 256, 7
    %571 = vbcast.lane.b32.xlu0 %v177, %s570
    %v572 = vpop.permute.xlu0 %571
    %s574 = sor.u32 256, 15
    %575 = vbcast.lane.b32.xlu0 %v177, %s574
    %v576 = vpop.permute.xlu0 %575
    %s578 = sor.u32 256, 23
    %579 = vbcast.lane.b32.xlu0 %v177, %s578
    %v580 = vpop.permute.xlu0 %579
    %s582 = sor.u32 256, 31
    %583 = vbcast.lane.b32.xlu0 %v177, %s582
    %v584 = vpop.permute.xlu0 %583
    %s586 = sor.u32 256, 39
    %587 = vbcast.lane.b32.xlu0 %v177, %s586
    %v588 = vpop.permute.xlu0 %587
    %s590 = sor.u32 256, 47
    %591 = vbcast.lane.b32.xlu0 %v177, %s590
    %v592 = vpop.permute.xlu0 %591
    %s594 = sor.u32 256, 55
    %595 = vbcast.lane.b32.xlu0 %v177, %s594
    %v596 = vpop.permute.xlu0 %595
    %s598 = sor.u32 256, 56
    %599 = vbcast.lane.b32.xlu0 %v146, %s598
    %v600 = vpop.permute.xlu0 %599
    %s602 = sor.u32 256, 56
    %603 = vbcast.lane.b32.xlu0 %v177, %s602
    %v604 = vpop.permute.xlu0 %603
    %s606 = sor.u32 256, 57
    %607 = vbcast.lane.b32.xlu0 %v146, %s606
    %v608 = vpop.permute.xlu0 %607
    %s610 = sor.u32 256, 57
    %611 = vbcast.lane.b32.xlu0 %v177, %s610
    %v612 = vpop.permute.xlu0 %611
    %s614 = sor.u32 256, 58
    %615 = vbcast.lane.b32.xlu0 %v146, %s614
    %v616 = vpop.permute.xlu0 %615
    %s618 = sor.u32 256, 58
    %619 = vbcast.lane.b32.xlu0 %v177, %s618
    %v620 = vpop.permute.xlu0 %619
    %s622 = sor.u32 256, 59
    %623 = vbcast.lane.b32.xlu0 %v146, %s622
    %v624 = vpop.permute.xlu0 %623
    %s626 = sor.u32 256, 59
    %627 = vbcast.lane.b32.xlu0 %v177, %s626
    %v628 = vpop.permute.xlu0 %627
    %vm629 = vcmask 7168
    %v630 = vsel %vm629, %v149, %v208
    %v631 = vsel %vm629, %v153, %v212
    %v632 = vsel %vm629, %v157, %v216
    %v633 = vsel %vm629, %v161, %v220
    %v634 = vsel %vm629, %v165, %v224
    %v635 = vsel %vm629, %v169, %v228
    %v636 = vsel %vm629, %v173, %v232
    %v637 = vsel %vm629, %v180, %v236
    %v638 = vsel %vm629, %v184, %v240
    %v639 = vsel %vm629, %v188, %v244
    %v640 = vsel %vm629, %v192, %v248
    %v641 = vsel %vm629, %v196, %v252
    %v642 = vsel %vm629, %v200, %v256
    %v643 = vsel %vm629, %v204, %v260
    %vm644 = vcmask 15360
    %v645 = vsel %vm644, %v630, %v264
    %v646 = vsel %vm644, %v631, %v268
    %v647 = vsel %vm644, %v632, %v272
    %v648 = vsel %vm644, %v633, %v276
    %v649 = vsel %vm644, %v634, %v280
    %v650 = vsel %vm644, %v635, %v284
    %v651 = vsel %vm644, %v636, %v288
    %v652 = vsel %vm644, %v637, %v292
    %v653 = vsel %vm644, %v638, %v296
    %v654 = vsel %vm644, %v639, %v300
    %v655 = vsel %vm644, %v640, %v304
    %v656 = vsel %vm644, %v641, %v308
    %v657 = vsel %vm644, %v642, %v312
    %v658 = vsel %vm644, %v643, %v316
    %vm659 = vcmask 23552
    %v660 = vsel %vm659, %v645, %v320
    %v661 = vsel %vm659, %v646, %v324
    %v662 = vsel %vm659, %v647, %v328
    %v663 = vsel %vm659, %v648, %v332
    %v664 = vsel %vm659, %v649, %v336
    %v665 = vsel %vm659, %v650, %v340
    %v666 = vsel %vm659, %v651, %v344
    %v667 = vsel %vm659, %v652, %v348
    %v668 = vsel %vm659, %v653, %v352
    %v669 = vsel %vm659, %v654, %v356
    %v670 = vsel %vm659, %v655, %v360
    %v671 = vsel %vm659, %v656, %v364
    %v672 = vsel %vm659, %v657, %v368
    %v673 = vsel %vm659, %v658, %v372
    %vm674 = vcmask 31744
    %v675 = vsel %vm674, %v660, %v376
    %v676 = vsel %vm674, %v661, %v380
    %v677 = vsel %vm674, %v662, %v384
    %v678 = vsel %vm674, %v663, %v388
    %v679 = vsel %vm674, %v664, %v392
    %v680 = vsel %vm674, %v665, %v396
    %v681 = vsel %vm674, %v666, %v400
    %v682 = vsel %vm674, %v667, %v404
    %v683 = vsel %vm674, %v668, %v408
    %v684 = vsel %vm674, %v669, %v412
    %v685 = vsel %vm674, %v670, %v416
    %v686 = vsel %vm674, %v671, %v420
    %v687 = vsel %vm674, %v672, %v424
    %v688 = vsel %vm674, %v673, %v428
    %vm689 = vcmask 39936
    %v690 = vsel %vm689, %v675, %v432
    %v691 = vsel %vm689, %v676, %v436
    %v692 = vsel %vm689, %v677, %v440
    %v693 = vsel %vm689, %v678, %v444
    %v694 = vsel %vm689, %v679, %v448
    %v695 = vsel %vm689, %v680, %v452
    %v696 = vsel %vm689, %v681, %v456
    %v697 = vsel %vm689, %v682, %v460
    %v698 = vsel %vm689, %v683, %v464
    %v699 = vsel %vm689, %v684, %v468
    %v700 = vsel %vm689, %v685, %v472
    %v701 = vsel %vm689, %v686, %v476
    %v702 = vsel %vm689, %v687, %v480
    %v703 = vsel %vm689, %v688, %v484
    %vm704 = vcmask 48128
    %v705 = vsel %vm704, %v690, %v488
    %v706 = vsel %vm704, %v691, %v492
    %v707 = vsel %vm704, %v692, %v496
    %v708 = vsel %vm704, %v693, %v500
    %v709 = vsel %vm704, %v694, %v504
    %v710 = vsel %vm704, %v695, %v508
    %v711 = vsel %vm704, %v696, %v512
    %v712 = vsel %vm704, %v697, %v516
    %v713 = vsel %vm704, %v698, %v520
    %v714 = vsel %vm704, %v699, %v524
    %v715 = vsel %vm704, %v700, %v528
    %v716 = vsel %vm704, %v701, %v532
    %v717 = vsel %vm704, %v702, %v536
    %v718 = vsel %vm704, %v703, %v540
    %vm719 = vcmask 56320
    %v720 = vsel %vm719, %v705, %v544
    %v721 = vsel %vm719, %v706, %v548
    %v722 = vsel %vm719, %v707, %v552
    %v723 = vsel %vm719, %v708, %v556
    %v724 = vsel %vm719, %v709, %v560
    %v725 = vsel %vm719, %v710, %v564
    %v726 = vsel %vm719, %v711, %v568
    %v727 = vsel %vm719, %v712, %v572
    %v728 = vsel %vm719, %v713, %v576
    %v729 = vsel %vm719, %v714, %v580
    %v730 = vsel %vm719, %v715, %v584
    %v731 = vsel %vm719, %v716, %v588
    %v732 = vsel %vm719, %v717, %v592
    %v733 = vsel %vm719, %v718, %v596
    %vm734 = vcmask 64512
    %v735 = vsel %vm734, %v720, %v153
    %v736 = vsel %vm734, %v721, %v157
    %v737 = vsel %vm734, %v722, %v161
    %v738 = vsel %vm734, %v723, %v165
    %v739 = vsel %vm734, %v724, %v169
    %v740 = vsel %vm734, %v725, %v173
    %v741 = vsel %vm734, %v726, %v600
    %v742 = vsel %vm734, %v727, %v184
    %v743 = vsel %vm734, %v728, %v188
    %v744 = vsel %vm734, %v729, %v192
    %v745 = vsel %vm734, %v730, %v196
    %v746 = vsel %vm734, %v731, %v200
    %v747 = vsel %vm734, %v732, %v204
    %v748 = vsel %vm734, %v733, %v604
    %vm749 = vcmask 72704
    %v750 = vsel %vm749, %v735, %v212
    %v751 = vsel %vm749, %v736, %v216
    %v752 = vsel %vm749, %v737, %v220
    %v753 = vsel %vm749, %v738, %v224
    %v754 = vsel %vm749, %v739, %v228
    %v755 = vsel %vm749, %v740, %v232
    %v756 = vsel %vm749, %v741, %v608
    %v757 = vsel %vm749, %v742, %v240
    %v758 = vsel %vm749, %v743, %v244
    %v759 = vsel %vm749, %v744, %v248
    %v760 = vsel %vm749, %v745, %v252
    %v761 = vsel %vm749, %v746, %v256
    %v762 = vsel %vm749, %v747, %v260
    %v763 = vsel %vm749, %v748, %v612
    %vm764 = vcmask 80896
    %v765 = vsel %vm764, %v750, %v268
    %v766 = vsel %vm764, %v751, %v272
    %v767 = vsel %vm764, %v752, %v276
    %v768 = vsel %vm764, %v753, %v280
    %v769 = vsel %vm764, %v754, %v284
    %v770 = vsel %vm764, %v755, %v288
    %v771 = vsel %vm764, %v756, %v616
    %v772 = vsel %vm764, %v757, %v296
    %v773 = vsel %vm764, %v758, %v300
    %v774 = vsel %vm764, %v759, %v304
    %v775 = vsel %vm764, %v760, %v308
    %v776 = vsel %vm764, %v761, %v312
    %v777 = vsel %vm764, %v762, %v316
    %v778 = vsel %vm764, %v763, %v620
    %vm779 = vcmask 89088
    %v780 = vsel %vm779, %v765, %v324
    %v781 = vsel %vm779, %v766, %v328
    %v782 = vsel %vm779, %v767, %v332
    %v783 = vsel %vm779, %v768, %v336
    %v784 = vsel %vm779, %v769, %v340
    %v785 = vsel %vm779, %v770, %v344
    %v786 = vsel %vm779, %v771, %v624
    %v787 = vsel %vm779, %v772, %v352
    %v788 = vsel %vm779, %v773, %v356
    %v789 = vsel %vm779, %v774, %v360
    %v790 = vsel %vm779, %v775, %v364
    %v791 = vsel %vm779, %v776, %v368
    %v792 = vsel %vm779, %v777, %v372
    %v793 = vsel %vm779, %v778, %v628
    %v794 = vld [vmem:[#allocation8] sm:$0xff]
    %v795 = vld [vmem:[#allocation8 + $0x8] sm:$0xff]
    %v796 = vld [vmem:[#allocation8 + $0x10] sm:$0xf]
    %v797 = vld [vmem:[#allocation8 + $0x18] sm:$0xf]
    %v798 = vld [vmem:[#allocation9] sm:$0x3]
    %v800 = vlaneseq
    %v801 = vshrl.u32 %v800, 7
    %v802 = vsub.s32 0, %v801
    %v803 = vrot.slane %v798, %v802
    %v804 = vlaneseq
    %v805 = vshrl.u32 %v804, 7
    %v806 = vsub.s32 1, %v805
    %v807 = vrot.slane %v798, %v806
    %v822 = vcombine.high %v780, %v780
    %v824 = vunpack.c.l.s4 1966171168
    %v825 = vunpack.c.0.s8 %v824
    %v826 = vlaneseq
    %v827 = vshrl.u32 %v826, 7
    %v828 = vsub.s32 %v825, %v827
    %v829 = vrot.slane %v780, %v828
    %v831 = vunpack.c.l.s4 1966171168
    %v832 = vunpack.c.0.s8 %v831
    %v833 = vlaneseq
    %v834 = vshrl.u32 %v833, 7
    %v835 = vsub.s32 %v832, %v834
    %v836 = vrot.slane %v822, %v835
    %v837 = vcombine.high %v829, %v829
    %v838 = vcombine.high %v836, %v836
    %v840 = vunpack.c.l.s4 1966171168
    %v841 = vunpack.c.0.s8 %v840
    %v842 = vlaneseq
    %v843 = vshrl.u32 %v842, 7
    %v844 = vsub.s32 %v841, %v843
    %v845 = vrot.slane %v829, %v844
    %v847 = vunpack.c.l.s4 1966171168
    %v848 = vunpack.c.0.s8 %v847
    %v849 = vlaneseq
    %v850 = vshrl.u32 %v849, 7
    %v851 = vsub.s32 %v848, %v850
    %v852 = vrot.slane %v836, %v851
    %v854 = vunpack.c.l.s4 1966171168
    %v855 = vunpack.c.0.s8 %v854
    %v856 = vlaneseq
    %v857 = vshrl.u32 %v856, 7
    %v858 = vsub.s32 %v855, %v857
    %v859 = vrot.slane %v837, %v858
    %v861 = vunpack.c.l.s4 1966171168
    %v862 = vunpack.c.0.s8 %v861
    %v863 = vlaneseq
    %v864 = vshrl.u32 %v863, 7
    %v865 = vsub.s32 %v862, %v864
    %v866 = vrot.slane %v838, %v865
    %v867 = vcombine.high %v845, %v845
    %v868 = vcombine.high %v852, %v852
    %v869 = vcombine.high %v859, %v859
    %v870 = vcombine.high %v866, %v866
    %v871 = vcombine.high %v781, %v781
    %v873 = vunpack.c.l.s4 1966171168
    %v874 = vunpack.c.0.s8 %v873
    %v875 = vlaneseq
    %v876 = vshrl.u32 %v875, 7
    %v877 = vsub.s32 %v874, %v876
    %v878 = vrot.slane %v781, %v877
    %v880 = vunpack.c.l.s4 1966171168
    %v881 = vunpack.c.0.s8 %v880
    %v882 = vlaneseq
    %v883 = vshrl.u32 %v882, 7
    %v884 = vsub.s32 %v881, %v883
    %v885 = vrot.slane %v871, %v884
    %v886 = vcombine.high %v878, %v878
    %v887 = vcombine.high %v885, %v885
    %v889 = vunpack.c.l.s4 1966171168
    %v890 = vunpack.c.0.s8 %v889
    %v891 = vlaneseq
    %v892 = vshrl.u32 %v891, 7
    %v893 = vsub.s32 %v890, %v892
    %v894 = vrot.slane %v878, %v893
    %v896 = vunpack.c.l.s4 1966171168
    %v897 = vunpack.c.0.s8 %v896
    %v898 = vlaneseq
    %v899 = vshrl.u32 %v898, 7
    %v900 = vsub.s32 %v897, %v899
    %v901 = vrot.slane %v885, %v900
    %v903 = vunpack.c.l.s4 1966171168
    %v904 = vunpack.c.0.s8 %v903
    %v905 = vlaneseq
    %v906 = vshrl.u32 %v905, 7
    %v907 = vsub.s32 %v904, %v906
    %v908 = vrot.slane %v886, %v907
    %v910 = vunpack.c.l.s4 1966171168
    %v911 = vunpack.c.0.s8 %v910
    %v912 = vlaneseq
    %v913 = vshrl.u32 %v912, 7
    %v914 = vsub.s32 %v911, %v913
    %v915 = vrot.slane %v887, %v914
    %v916 = vcombine.high %v894, %v894
    %v917 = vcombine.high %v901, %v901
    %v918 = vcombine.high %v908, %v908
    %v919 = vcombine.high %v915, %v915
    %v920 = vcombine.high %v782, %v782
    %v922 = vunpack.c.l.s4 1966171168
    %v923 = vunpack.c.0.s8 %v922
    %v924 = vlaneseq
    %v925 = vshrl.u32 %v924, 7
    %v926 = vsub.s32 %v923, %v925
    %v927 = vrot.slane %v782, %v926
    %v929 = vunpack.c.l.s4 1966171168
    %v930 = vunpack.c.0.s8 %v929
    %v931 = vlaneseq
    %v932 = vshrl.u32 %v931, 7
    %v933 = vsub.s32 %v930, %v932
    %v934 = vrot.slane %v920, %v933
    %v935 = vcombine.high %v927, %v927
    %v936 = vcombine.high %v934, %v934
    %v938 = vunpack.c.l.s4 1966171168
    %v939 = vunpack.c.0.s8 %v938
    %v940 = vlaneseq
    %v941 = vshrl.u32 %v940, 7
    %v942 = vsub.s32 %v939, %v941
    %v943 = vrot.slane %v927, %v942
    %v945 = vunpack.c.l.s4 1966171168
    %v946 = vunpack.c.0.s8 %v945
    %v947 = vlaneseq
    %v948 = vshrl.u32 %v947, 7
    %v949 = vsub.s32 %v946, %v948
    %v950 = vrot.slane %v934, %v949
    %v952 = vunpack.c.l.s4 1966171168
    %v953 = vunpack.c.0.s8 %v952
    %v954 = vlaneseq
    %v955 = vshrl.u32 %v954, 7
    %v956 = vsub.s32 %v953, %v955
    %v957 = vrot.slane %v935, %v956
    %v959 = vunpack.c.l.s4 1966171168
    %v960 = vunpack.c.0.s8 %v959
    %v961 = vlaneseq
    %v962 = vshrl.u32 %v961, 7
    %v963 = vsub.s32 %v960, %v962
    %v964 = vrot.slane %v936, %v963
    %v965 = vcombine.high %v943, %v943
    %v966 = vcombine.high %v950, %v950
    %v967 = vcombine.high %v957, %v957
    %v968 = vcombine.high %v964, %v964
    %v969 = vcombine.high %v783, %v783
    %v971 = vunpack.c.l.s4 1966171168
    %v972 = vunpack.c.0.s8 %v971
    %v973 = vlaneseq
    %v974 = vshrl.u32 %v973, 7
    %v975 = vsub.s32 %v972, %v974
    %v976 = vrot.slane %v783, %v975
    %v978 = vunpack.c.l.s4 1966171168
    %v979 = vunpack.c.0.s8 %v978
    %v980 = vlaneseq
    %v981 = vshrl.u32 %v980, 7
    %v982 = vsub.s32 %v979, %v981
    %v983 = vrot.slane %v969, %v982
    %v984 = vcombine.high %v976, %v976
    %v985 = vcombine.high %v983, %v983
    %v987 = vunpack.c.l.s4 1966171168
    %v988 = vunpack.c.0.s8 %v987
    %v989 = vlaneseq
    %v990 = vshrl.u32 %v989, 7
    %v991 = vsub.s32 %v988, %v990
    %v992 = vrot.slane %v976, %v991
    %v994 = vunpack.c.l.s4 1966171168
    %v995 = vunpack.c.0.s8 %v994
    %v996 = vlaneseq
    %v997 = vshrl.u32 %v996, 7
    %v998 = vsub.s32 %v995, %v997
    %v999 = vrot.slane %v983, %v998
    %v1001 = vunpack.c.l.s4 1966171168
    %v1002 = vunpack.c.0.s8 %v1001
    %v1003 = vlaneseq
    %v1004 = vshrl.u32 %v1003, 7
    %v1005 = vsub.s32 %v1002, %v1004
    %v1006 = vrot.slane %v984, %v1005
    %v1008 = vunpack.c.l.s4 1966171168
    %v1009 = vunpack.c.0.s8 %v1008
    %v1010 = vlaneseq
    %v1011 = vshrl.u32 %v1010, 7
    %v1012 = vsub.s32 %v1009, %v1011
    %v1013 = vrot.slane %v985, %v1012
    %v1014 = vcombine.high %v992, %v992
    %v1015 = vcombine.high %v999, %v999
    %v1016 = vcombine.high %v1006, %v1006
    %v1017 = vcombine.high %v1013, %v1013
    %v1018 = vcombine.high %v784, %v784
    %v1020 = vunpack.c.l.s4 1966171168
    %v1021 = vunpack.c.0.s8 %v1020
    %v1022 = vlaneseq
    %v1023 = vshrl.u32 %v1022, 7
    %v1024 = vsub.s32 %v1021, %v1023
    %v1025 = vrot.slane %v784, %v1024
    %v1027 = vunpack.c.l.s4 1966171168
    %v1028 = vunpack.c.0.s8 %v1027
    %v1029 = vlaneseq
    %v1030 = vshrl.u32 %v1029, 7
    %v1031 = vsub.s32 %v1028, %v1030
    %v1032 = vrot.slane %v1018, %v1031
    %v1033 = vcombine.high %v1025, %v1025
    %v1034 = vcombine.high %v1032, %v1032
    %v1036 = vunpack.c.l.s4 1966171168
    %v1037 = vunpack.c.0.s8 %v1036
    %v1038 = vlaneseq
    %v1039 = vshrl.u32 %v1038, 7
    %v1040 = vsub.s32 %v1037, %v1039
    %v1041 = vrot.slane %v1025, %v1040
    %v1043 = vunpack.c.l.s4 1966171168
    %v1044 = vunpack.c.0.s8 %v1043
    %v1045 = vlaneseq
    %v1046 = vshrl.u32 %v1045, 7
    %v1047 = vsub.s32 %v1044, %v1046
    %v1048 = vrot.slane %v1032, %v1047
    %v1050 = vunpack.c.l.s4 1966171168
    %v1051 = vunpack.c.0.s8 %v1050
    %v1052 = vlaneseq
    %v1053 = vshrl.u32 %v1052, 7
    %v1054 = vsub.s32 %v1051, %v1053
    %v1055 = vrot.slane %v1033, %v1054
    %v1057 = vunpack.c.l.s4 1966171168
    %v1058 = vunpack.c.0.s8 %v1057
    %v1059 = vlaneseq
    %v1060 = vshrl.u32 %v1059, 7
    %v1061 = vsub.s32 %v1058, %v1060
    %v1062 = vrot.slane %v1034, %v1061
    %v1063 = vcombine.high %v1041, %v1041
    %v1064 = vcombine.high %v1048, %v1048
    %v1065 = vcombine.high %v1055, %v1055
    %v1066 = vcombine.high %v1062, %v1062
    %v1067 = vcombine.high %v785, %v785
    %v1069 = vunpack.c.l.s4 1966171168
    %v1070 = vunpack.c.0.s8 %v1069
    %v1071 = vlaneseq
    %v1072 = vshrl.u32 %v1071, 7
    %v1073 = vsub.s32 %v1070, %v1072
    %v1074 = vrot.slane %v785, %v1073
    %v1076 = vunpack.c.l.s4 1966171168
    %v1077 = vunpack.c.0.s8 %v1076
    %v1078 = vlaneseq
    %v1079 = vshrl.u32 %v1078, 7
    %v1080 = vsub.s32 %v1077, %v1079
    %v1081 = vrot.slane %v1067, %v1080
    %v1082 = vcombine.high %v1074, %v1074
    %v1083 = vcombine.high %v1081, %v1081
    %v1085 = vunpack.c.l.s4 1966171168
    %v1086 = vunpack.c.0.s8 %v1085
    %v1087 = vlaneseq
    %v1088 = vshrl.u32 %v1087, 7
    %v1089 = vsub.s32 %v1086, %v1088
    %v1090 = vrot.slane %v1074, %v1089
    %v1092 = vunpack.c.l.s4 1966171168
    %v1093 = vunpack.c.0.s8 %v1092
    %v1094 = vlaneseq
    %v1095 = vshrl.u32 %v1094, 7
    %v1096 = vsub.s32 %v1093, %v1095
    %v1097 = vrot.slane %v1081, %v1096
    %v1099 = vunpack.c.l.s4 1966171168
    %v1100 = vunpack.c.0.s8 %v1099
    %v1101 = vlaneseq
    %v1102 = vshrl.u32 %v1101, 7
    %v1103 = vsub.s32 %v1100, %v1102
    %v1104 = vrot.slane %v1082, %v1103
    %v1106 = vunpack.c.l.s4 1966171168
    %v1107 = vunpack.c.0.s8 %v1106
    %v1108 = vlaneseq
    %v1109 = vshrl.u32 %v1108, 7
    %v1110 = vsub.s32 %v1107, %v1109
    %v1111 = vrot.slane %v1083, %v1110
    %v1112 = vcombine.high %v1090, %v1090
    %v1113 = vcombine.high %v1097, %v1097
    %v1114 = vcombine.high %v1104, %v1104
    %v1115 = vcombine.high %v1111, %v1111
    %v1116 = vcombine.high %v786, %v786
    %v1118 = vunpack.c.l.s4 1966171168
    %v1119 = vunpack.c.0.s8 %v1118
    %v1120 = vlaneseq
    %v1121 = vshrl.u32 %v1120, 7
    %v1122 = vsub.s32 %v1119, %v1121
    %v1123 = vrot.slane %v786, %v1122
    %v1125 = vunpack.c.l.s4 1966171168
    %v1126 = vunpack.c.0.s8 %v1125
    %v1127 = vlaneseq
    %v1128 = vshrl.u32 %v1127, 7
    %v1129 = vsub.s32 %v1126, %v1128
    %v1130 = vrot.slane %v1116, %v1129
    %v1131 = vcombine.high %v1123, %v1123
    %v1133 = vunpack.c.l.s4 1966171168
    %v1134 = vunpack.c.0.s8 %v1133
    %v1135 = vlaneseq
    %v1136 = vshrl.u32 %v1135, 7
    %v1137 = vsub.s32 %v1134, %v1136
    %v1138 = vrot.slane %v1123, %v1137
    %v1140 = vunpack.c.l.s4 1966171168
    %v1141 = vunpack.c.0.s8 %v1140
    %v1142 = vlaneseq
    %v1143 = vshrl.u32 %v1142, 7
    %v1144 = vsub.s32 %v1141, %v1143
    %v1145 = vrot.slane %v1130, %v1144
    %v1147 = vunpack.c.l.s4 1966171168
    %v1148 = vunpack.c.0.s8 %v1147
    %v1149 = vlaneseq
    %v1150 = vshrl.u32 %v1149, 7
    %v1151 = vsub.s32 %v1148, %v1150
    %v1152 = vrot.slane %v1131, %v1151
    %v1153 = vcombine.high %v1138, %v1138
    %v1154 = vcombine.high %v1152, %v1152
    %v1155 = vcombine.high %v787, %v787
    %v1157 = vunpack.c.l.s4 1966171168
    %v1158 = vunpack.c.0.s8 %v1157
    %v1159 = vlaneseq
    %v1160 = vshrl.u32 %v1159, 7
    %v1161 = vsub.s32 %v1158, %v1160
    %v1162 = vrot.slane %v787, %v1161
    %v1164 = vunpack.c.l.s4 1966171168
    %v1165 = vunpack.c.0.s8 %v1164
    %v1166 = vlaneseq
    %v1167 = vshrl.u32 %v1166, 7
    %v1168 = vsub.s32 %v1165, %v1167
    %v1169 = vrot.slane %v1155, %v1168
    %v1170 = vcombine.high %v1162, %v1162
    %v1171 = vcombine.high %v1169, %v1169
    %v1173 = vunpack.c.l.s4 1966171168
    %v1174 = vunpack.c.0.s8 %v1173
    %v1175 = vlaneseq
    %v1176 = vshrl.u32 %v1175, 7
    %v1177 = vsub.s32 %v1174, %v1176
    %v1178 = vrot.slane %v1162, %v1177
    %v1180 = vunpack.c.l.s4 1966171168
    %v1181 = vunpack.c.0.s8 %v1180
    %v1182 = vlaneseq
    %v1183 = vshrl.u32 %v1182, 7
    %v1184 = vsub.s32 %v1181, %v1183
    %v1185 = vrot.slane %v1169, %v1184
    %v1187 = vunpack.c.l.s4 1966171168
    %v1188 = vunpack.c.0.s8 %v1187
    %v1189 = vlaneseq
    %v1190 = vshrl.u32 %v1189, 7
    %v1191 = vsub.s32 %v1188, %v1190
    %v1192 = vrot.slane %v1170, %v1191
    %v1194 = vunpack.c.l.s4 1966171168
    %v1195 = vunpack.c.0.s8 %v1194
    %v1196 = vlaneseq
    %v1197 = vshrl.u32 %v1196, 7
    %v1198 = vsub.s32 %v1195, %v1197
    %v1199 = vrot.slane %v1171, %v1198
    %v1200 = vcombine.high %v1178, %v1178
    %v1201 = vcombine.high %v1185, %v1185
    %v1202 = vcombine.high %v1192, %v1192
    %v1203 = vcombine.high %v1199, %v1199
    %v1204 = vcombine.high %v788, %v788
    %v1206 = vunpack.c.l.s4 1966171168
    %v1207 = vunpack.c.0.s8 %v1206
    %v1208 = vlaneseq
    %v1209 = vshrl.u32 %v1208, 7
    %v1210 = vsub.s32 %v1207, %v1209
    %v1211 = vrot.slane %v788, %v1210
    %v1213 = vunpack.c.l.s4 1966171168
    %v1214 = vunpack.c.0.s8 %v1213
    %v1215 = vlaneseq
    %v1216 = vshrl.u32 %v1215, 7
    %v1217 = vsub.s32 %v1214, %v1216
    %v1218 = vrot.slane %v1204, %v1217
    %v1219 = vcombine.high %v1211, %v1211
    %v1220 = vcombine.high %v1218, %v1218
    %v1222 = vunpack.c.l.s4 1966171168
    %v1223 = vunpack.c.0.s8 %v1222
    %v1224 = vlaneseq
    %v1225 = vshrl.u32 %v1224, 7
    %v1226 = vsub.s32 %v1223, %v1225
    %v1227 = vrot.slane %v1211, %v1226
    %v1229 = vunpack.c.l.s4 1966171168
    %v1230 = vunpack.c.0.s8 %v1229
    %v1231 = vlaneseq
    %v1232 = vshrl.u32 %v1231, 7
    %v1233 = vsub.s32 %v1230, %v1232
    %v1234 = vrot.slane %v1218, %v1233
    %v1236 = vunpack.c.l.s4 1966171168
    %v1237 = vunpack.c.0.s8 %v1236
    %v1238 = vlaneseq
    %v1239 = vshrl.u32 %v1238, 7
    %v1240 = vsub.s32 %v1237, %v1239
    %v1241 = vrot.slane %v1219, %v1240
    %v1243 = vunpack.c.l.s4 1966171168
    %v1244 = vunpack.c.0.s8 %v1243
    %v1245 = vlaneseq
    %v1246 = vshrl.u32 %v1245, 7
    %v1247 = vsub.s32 %v1244, %v1246
    %v1248 = vrot.slane %v1220, %v1247
    %v1249 = vcombine.high %v1227, %v1227
    %v1250 = vcombine.high %v1234, %v1234
    %v1251 = vcombine.high %v1241, %v1241
    %v1252 = vcombine.high %v1248, %v1248
    %v1253 = vcombine.high %v789, %v789
    %v1255 = vunpack.c.l.s4 1966171168
    %v1256 = vunpack.c.0.s8 %v1255
    %v1257 = vlaneseq
    %v1258 = vshrl.u32 %v1257, 7
    %v1259 = vsub.s32 %v1256, %v1258
    %v1260 = vrot.slane %v789, %v1259
    %v1262 = vunpack.c.l.s4 1966171168
    %v1263 = vunpack.c.0.s8 %v1262
    %v1264 = vlaneseq
    %v1265 = vshrl.u32 %v1264, 7
    %v1266 = vsub.s32 %v1263, %v1265
    %v1267 = vrot.slane %v1253, %v1266
    %v1268 = vcombine.high %v1260, %v1260
    %v1269 = vcombine.high %v1267, %v1267
    %v1271 = vunpack.c.l.s4 1966171168
    %v1272 = vunpack.c.0.s8 %v1271
    %v1273 = vlaneseq
    %v1274 = vshrl.u32 %v1273, 7
    %v1275 = vsub.s32 %v1272, %v1274
    %v1276 = vrot.slane %v1260, %v1275
    %v1278 = vunpack.c.l.s4 1966171168
    %v1279 = vunpack.c.0.s8 %v1278
    %v1280 = vlaneseq
    %v1281 = vshrl.u32 %v1280, 7
    %v1282 = vsub.s32 %v1279, %v1281
    %v1283 = vrot.slane %v1267, %v1282
    %v1285 = vunpack.c.l.s4 1966171168
    %v1286 = vunpack.c.0.s8 %v1285
    %v1287 = vlaneseq
    %v1288 = vshrl.u32 %v1287, 7
    %v1289 = vsub.s32 %v1286, %v1288
    %v1290 = vrot.slane %v1268, %v1289
    %v1292 = vunpack.c.l.s4 1966171168
    %v1293 = vunpack.c.0.s8 %v1292
    %v1294 = vlaneseq
    %v1295 = vshrl.u32 %v1294, 7
    %v1296 = vsub.s32 %v1293, %v1295
    %v1297 = vrot.slane %v1269, %v1296
    %v1298 = vcombine.high %v1276, %v1276
    %v1299 = vcombine.high %v1283, %v1283
    %v1300 = vcombine.high %v1290, %v1290
    %v1301 = vcombine.high %v1297, %v1297
    %v1302 = vcombine.high %v790, %v790
    %v1304 = vunpack.c.l.s4 1966171168
    %v1305 = vunpack.c.0.s8 %v1304
    %v1306 = vlaneseq
    %v1307 = vshrl.u32 %v1306, 7
    %v1308 = vsub.s32 %v1305, %v1307
    %v1309 = vrot.slane %v790, %v1308
    %v1311 = vunpack.c.l.s4 1966171168
    %v1312 = vunpack.c.0.s8 %v1311
    %v1313 = vlaneseq
    %v1314 = vshrl.u32 %v1313, 7
    %v1315 = vsub.s32 %v1312, %v1314
    %v1316 = vrot.slane %v1302, %v1315
    %v1317 = vcombine.high %v1309, %v1309
    %v1318 = vcombine.high %v1316, %v1316
    %v1320 = vunpack.c.l.s4 1966171168
    %v1321 = vunpack.c.0.s8 %v1320
    %v1322 = vlaneseq
    %v1323 = vshrl.u32 %v1322, 7
    %v1324 = vsub.s32 %v1321, %v1323
    %v1325 = vrot.slane %v1309, %v1324
    %v1327 = vunpack.c.l.s4 1966171168
    %v1328 = vunpack.c.0.s8 %v1327
    %v1329 = vlaneseq
    %v1330 = vshrl.u32 %v1329, 7
    %v1331 = vsub.s32 %v1328, %v1330
    %v1332 = vrot.slane %v1316, %v1331
    %v1334 = vunpack.c.l.s4 1966171168
    %v1335 = vunpack.c.0.s8 %v1334
    %v1336 = vlaneseq
    %v1337 = vshrl.u32 %v1336, 7
    %v1338 = vsub.s32 %v1335, %v1337
    %v1339 = vrot.slane %v1317, %v1338
    %v1341 = vunpack.c.l.s4 1966171168
    %v1342 = vunpack.c.0.s8 %v1341
    %v1343 = vlaneseq
    %v1344 = vshrl.u32 %v1343, 7
    %v1345 = vsub.s32 %v1342, %v1344
    %v1346 = vrot.slane %v1318, %v1345
    %v1347 = vcombine.high %v1325, %v1325
    %v1348 = vcombine.high %v1332, %v1332
    %v1349 = vcombine.high %v1339, %v1339
    %v1350 = vcombine.high %v1346, %v1346
    %v1351 = vcombine.high %v791, %v791
    %v1353 = vunpack.c.l.s4 1966171168
    %v1354 = vunpack.c.0.s8 %v1353
    %v1355 = vlaneseq
    %v1356 = vshrl.u32 %v1355, 7
    %v1357 = vsub.s32 %v1354, %v1356
    %v1358 = vrot.slane %v791, %v1357
    %v1360 = vunpack.c.l.s4 1966171168
    %v1361 = vunpack.c.0.s8 %v1360
    %v1362 = vlaneseq
    %v1363 = vshrl.u32 %v1362, 7
    %v1364 = vsub.s32 %v1361, %v1363
    %v1365 = vrot.slane %v1351, %v1364
    %v1366 = vcombine.high %v1358, %v1358
    %v1367 = vcombine.high %v1365, %v1365
    %v1369 = vunpack.c.l.s4 1966171168
    %v1370 = vunpack.c.0.s8 %v1369
    %v1371 = vlaneseq
    %v1372 = vshrl.u32 %v1371, 7
    %v1373 = vsub.s32 %v1370, %v1372
    %v1374 = vrot.slane %v1358, %v1373
    %v1376 = vunpack.c.l.s4 1966171168
    %v1377 = vunpack.c.0.s8 %v1376
    %v1378 = vlaneseq
    %v1379 = vshrl.u32 %v1378, 7
    %v1380 = vsub.s32 %v1377, %v1379
    %v1381 = vrot.slane %v1365, %v1380
    %v1383 = vunpack.c.l.s4 1966171168
    %v1384 = vunpack.c.0.s8 %v1383
    %v1385 = vlaneseq
    %v1386 = vshrl.u32 %v1385, 7
    %v1387 = vsub.s32 %v1384, %v1386
    %v1388 = vrot.slane %v1366, %v1387
    %v1390 = vunpack.c.l.s4 1966171168
    %v1391 = vunpack.c.0.s8 %v1390
    %v1392 = vlaneseq
    %v1393 = vshrl.u32 %v1392, 7
    %v1394 = vsub.s32 %v1391, %v1393
    %v1395 = vrot.slane %v1367, %v1394
    %v1396 = vcombine.high %v1374, %v1374
    %v1397 = vcombine.high %v1381, %v1381
    %v1398 = vcombine.high %v1388, %v1388
    %v1399 = vcombine.high %v1395, %v1395
    %v1400 = vcombine.high %v792, %v792
    %v1402 = vunpack.c.l.s4 1966171168
    %v1403 = vunpack.c.0.s8 %v1402
    %v1404 = vlaneseq
    %v1405 = vshrl.u32 %v1404, 7
    %v1406 = vsub.s32 %v1403, %v1405
    %v1407 = vrot.slane %v792, %v1406
    %v1409 = vunpack.c.l.s4 1966171168
    %v1410 = vunpack.c.0.s8 %v1409
    %v1411 = vlaneseq
    %v1412 = vshrl.u32 %v1411, 7
    %v1413 = vsub.s32 %v1410, %v1412
    %v1414 = vrot.slane %v1400, %v1413
    %v1415 = vcombine.high %v1407, %v1407
    %v1416 = vcombine.high %v1414, %v1414
    %v1418 = vunpack.c.l.s4 1966171168
    %v1419 = vunpack.c.0.s8 %v1418
    %v1420 = vlaneseq
    %v1421 = vshrl.u32 %v1420, 7
    %v1422 = vsub.s32 %v1419, %v1421
    %v1423 = vrot.slane %v1407, %v1422
    %v1425 = vunpack.c.l.s4 1966171168
    %v1426 = vunpack.c.0.s8 %v1425
    %v1427 = vlaneseq
    %v1428 = vshrl.u32 %v1427, 7
    %v1429 = vsub.s32 %v1426, %v1428
    %v1430 = vrot.slane %v1414, %v1429
    %v1432 = vunpack.c.l.s4 1966171168
    %v1433 = vunpack.c.0.s8 %v1432
    %v1434 = vlaneseq
    %v1435 = vshrl.u32 %v1434, 7
    %v1436 = vsub.s32 %v1433, %v1435
    %v1437 = vrot.slane %v1415, %v1436
    %v1439 = vunpack.c.l.s4 1966171168
    %v1440 = vunpack.c.0.s8 %v1439
    %v1441 = vlaneseq
    %v1442 = vshrl.u32 %v1441, 7
    %v1443 = vsub.s32 %v1440, %v1442
    %v1444 = vrot.slane %v1416, %v1443
    %v1445 = vcombine.high %v1423, %v1423
    %v1446 = vcombine.high %v1430, %v1430
    %v1447 = vcombine.high %v1437, %v1437
    %v1448 = vcombine.high %v1444, %v1444
    %v1449 = vcombine.high %v793, %v793
    %v1451 = vunpack.c.l.s4 1966171168
    %v1452 = vunpack.c.0.s8 %v1451
    %v1453 = vlaneseq
    %v1454 = vshrl.u32 %v1453, 7
    %v1455 = vsub.s32 %v1452, %v1454
    %v1456 = vrot.slane %v793, %v1455
    %v1458 = vunpack.c.l.s4 1966171168
    %v1459 = vunpack.c.0.s8 %v1458
    %v1460 = vlaneseq
    %v1461 = vshrl.u32 %v1460, 7
    %v1462 = vsub.s32 %v1459, %v1461
    %v1463 = vrot.slane %v1449, %v1462
    %v1464 = vcombine.high %v1456, %v1456
    %v1466 = vunpack.c.l.s4 1966171168
    %v1467 = vunpack.c.0.s8 %v1466
    %v1468 = vlaneseq
    %v1469 = vshrl.u32 %v1468, 7
    %v1470 = vsub.s32 %v1467, %v1469
    %v1471 = vrot.slane %v1456, %v1470
    %v1473 = vunpack.c.l.s4 1966171168
    %v1474 = vunpack.c.0.s8 %v1473
    %v1475 = vlaneseq
    %v1476 = vshrl.u32 %v1475, 7
    %v1477 = vsub.s32 %v1474, %v1476
    %v1478 = vrot.slane %v1463, %v1477
    %v1480 = vunpack.c.l.s4 1966171168
    %v1481 = vunpack.c.0.s8 %v1480
    %v1482 = vlaneseq
    %v1483 = vshrl.u32 %v1482, 7
    %v1484 = vsub.s32 %v1481, %v1483
    %v1485 = vrot.slane %v1464, %v1484
    %v1486 = vcombine.high %v1471, %v1471
    %v1487 = vcombine.high %v1485, %v1485
    %v1488 = vcombine.low %v803, %v807
    %v1489 = vcombine.high %v803, %v807
    %v1491 = vunpack.c.l.s4 1966171168
    %v1492 = vunpack.c.0.s8 %v1491
    %v1493 = vlaneseq
    %v1494 = vshrl.u32 %v1493, 7
    %v1495 = vsub.s32 %v1492, %v1494
    %v1496 = vrot.slane %v1488, %v1495
    %v1498 = vunpack.c.l.s4 1966171168
    %v1499 = vunpack.c.0.s8 %v1498
    %v1500 = vlaneseq
    %v1501 = vshrl.u32 %v1500, 7
    %v1502 = vsub.s32 %v1499, %v1501
    %v1503 = vrot.slane %v1489, %v1502
    %v1504 = vcombine.high %v1496, %v1496
    %v1505 = vcombine.high %v1503, %v1503
    %v1507 = vunpack.c.l.s4 1966171168
    %v1508 = vunpack.c.0.s8 %v1507
    %v1509 = vlaneseq
    %v1510 = vshrl.u32 %v1509, 7
    %v1511 = vsub.s32 %v1508, %v1510
    %v1512 = vrot.slane %v1496, %v1511
    %v1514 = vunpack.c.l.s4 1966171168
    %v1515 = vunpack.c.0.s8 %v1514
    %v1516 = vlaneseq
    %v1517 = vshrl.u32 %v1516, 7
    %v1518 = vsub.s32 %v1515, %v1517
    %v1519 = vrot.slane %v1503, %v1518
    %v1521 = vunpack.c.l.s4 1966171168
    %v1522 = vunpack.c.0.s8 %v1521
    %v1523 = vlaneseq
    %v1524 = vshrl.u32 %v1523, 7
    %v1525 = vsub.s32 %v1522, %v1524
    %v1526 = vrot.slane %v1504, %v1525
    %v1528 = vunpack.c.l.s4 1966171168
    %v1529 = vunpack.c.0.s8 %v1528
    %v1530 = vlaneseq
    %v1531 = vshrl.u32 %v1530, 7
    %v1532 = vsub.s32 %v1529, %v1531
    %v1533 = vrot.slane %v1505, %v1532
    %v1534 = vcombine.high %v1512, %v1512
    %v1535 = vcombine.high %v1519, %v1519
    %v1536 = vcombine.high %v1526, %v1526
    %v1537 = vcombine.high %v1533, %v1533
    %v1538 = vcombine.low %v845, %v859
    %v1539 = vcombine.low %v867, %v869
    %v1540 = vcombine.low %v852, %v866
    %v1541 = vcombine.low %v868, %v870
    %v1543 = vunpack.c.l.s4 1966171168
    %v1544 = vunpack.c.0.s8 %v1543
    %v1545 = vlaneseq
    %v1546 = vshrl.u32 %v1545, 7
    %v1547 = vsub.s32 %v1544, %v1546
    %v1548 = vrot.slane %v1538, %v1547
    %v1550 = vunpack.c.l.s4 1966171168
    %v1551 = vunpack.c.0.s8 %v1550
    %v1552 = vlaneseq
    %v1553 = vshrl.u32 %v1552, 7
    %v1554 = vsub.s32 %v1551, %v1553
    %v1555 = vrot.slane %v1539, %v1554
    %v1557 = vunpack.c.l.s4 1966171168
    %v1558 = vunpack.c.0.s8 %v1557
    %v1559 = vlaneseq
    %v1560 = vshrl.u32 %v1559, 7
    %v1561 = vsub.s32 %v1558, %v1560
    %v1562 = vrot.slane %v1540, %v1561
    %v1564 = vunpack.c.l.s4 1966171168
    %v1565 = vunpack.c.0.s8 %v1564
    %v1566 = vlaneseq
    %v1567 = vshrl.u32 %v1566, 7
    %v1568 = vsub.s32 %v1565, %v1567
    %v1569 = vrot.slane %v1541, %v1568
    %v1570 = vcombine.low %v1548, %v1555
    %v1571 = vcombine.low %v1562, %v1569
    %v1573 = vunpack.c.l.s4 1966171168
    %v1574 = vunpack.c.0.s8 %v1573
    %v1575 = vlaneseq
    %v1576 = vshrl.u32 %v1575, 7
    %v1577 = vsub.s32 %v1574, %v1576
    %v1578 = vrot.slane %v1570, %v1577
    %v1580 = vunpack.c.l.s4 1966171168
    %v1581 = vunpack.c.0.s8 %v1580
    %v1582 = vlaneseq
    %v1583 = vshrl.u32 %v1582, 7
    %v1584 = vsub.s32 %v1581, %v1583
    %v1585 = vrot.slane %v1571, %v1584
    %v1586 = vcombine.low %v1578, %v1585
    %v1587 = vcombine.low %v894, %v908
    %v1588 = vcombine.low %v916, %v918
    %v1589 = vcombine.low %v901, %v915
    %v1590 = vcombine.low %v917, %v919
    %v1592 = vunpack.c.l.s4 1966171168
    %v1593 = vunpack.c.0.s8 %v1592
    %v1594 = vlaneseq
    %v1595 = vshrl.u32 %v1594, 7
    %v1596 = vsub.s32 %v1593, %v1595
    %v1597 = vrot.slane %v1587, %v1596
    %v1599 = vunpack.c.l.s4 1966171168
    %v1600 = vunpack.c.0.s8 %v1599
    %v1601 = vlaneseq
    %v1602 = vshrl.u32 %v1601, 7
    %v1603 = vsub.s32 %v1600, %v1602
    %v1604 = vrot.slane %v1588, %v1603
    %v1606 = vunpack.c.l.s4 1966171168
    %v1607 = vunpack.c.0.s8 %v1606
    %v1608 = vlaneseq
    %v1609 = vshrl.u32 %v1608, 7
    %v1610 = vsub.s32 %v1607, %v1609
    %v1611 = vrot.slane %v1589, %v1610
    %v1613 = vunpack.c.l.s4 1966171168
    %v1614 = vunpack.c.0.s8 %v1613
    %v1615 = vlaneseq
    %v1616 = vshrl.u32 %v1615, 7
    %v1617 = vsub.s32 %v1614, %v1616
    %v1618 = vrot.slane %v1590, %v1617
    %v1619 = vcombine.low %v1597, %v1604
    %v1620 = vcombine.low %v1611, %v1618
    %v1622 = vunpack.c.l.s4 1966171168
    %v1623 = vunpack.c.0.s8 %v1622
    %v1624 = vlaneseq
    %v1625 = vshrl.u32 %v1624, 7
    %v1626 = vsub.s32 %v1623, %v1625
    %v1627 = vrot.slane %v1619, %v1626
    %v1629 = vunpack.c.l.s4 1966171168
    %v1630 = vunpack.c.0.s8 %v1629
    %v1631 = vlaneseq
    %v1632 = vshrl.u32 %v1631, 7
    %v1633 = vsub.s32 %v1630, %v1632
    %v1634 = vrot.slane %v1620, %v1633
    %v1635 = vcombine.low %v1627, %v1634
    %v1636 = vcombine.low %v943, %v957
    %v1637 = vcombine.low %v965, %v967
    %v1638 = vcombine.low %v950, %v964
    %v1639 = vcombine.low %v966, %v968
    %v1641 = vunpack.c.l.s4 1966171168
    %v1642 = vunpack.c.0.s8 %v1641
    %v1643 = vlaneseq
    %v1644 = vshrl.u32 %v1643, 7
    %v1645 = vsub.s32 %v1642, %v1644
    %v1646 = vrot.slane %v1636, %v1645
    %v1648 = vunpack.c.l.s4 1966171168
    %v1649 = vunpack.c.0.s8 %v1648
    %v1650 = vlaneseq
    %v1651 = vshrl.u32 %v1650, 7
    %v1652 = vsub.s32 %v1649, %v1651
    %v1653 = vrot.slane %v1637, %v1652
    %v1655 = vunpack.c.l.s4 1966171168
    %v1656 = vunpack.c.0.s8 %v1655
    %v1657 = vlaneseq
    %v1658 = vshrl.u32 %v1657, 7
    %v1659 = vsub.s32 %v1656, %v1658
    %v1660 = vrot.slane %v1638, %v1659
    %v1662 = vunpack.c.l.s4 1966171168
    %v1663 = vunpack.c.0.s8 %v1662
    %v1664 = vlaneseq
    %v1665 = vshrl.u32 %v1664, 7
    %v1666 = vsub.s32 %v1663, %v1665
    %v1667 = vrot.slane %v1639, %v1666
    %v1668 = vcombine.low %v1646, %v1653
    %v1669 = vcombine.low %v1660, %v1667
    %v1671 = vunpack.c.l.s4 1966171168
    %v1672 = vunpack.c.0.s8 %v1671
    %v1673 = vlaneseq
    %v1674 = vshrl.u32 %v1673, 7
    %v1675 = vsub.s32 %v1672, %v1674
    %v1676 = vrot.slane %v1668, %v1675
    %v1678 = vunpack.c.l.s4 1966171168
    %v1679 = vunpack.c.0.s8 %v1678
    %v1680 = vlaneseq
    %v1681 = vshrl.u32 %v1680, 7
    %v1682 = vsub.s32 %v1679, %v1681
    %v1683 = vrot.slane %v1669, %v1682
    %v1684 = vcombine.low %v1676, %v1683
    %v1685 = vcombine.low %v992, %v1006
    %v1686 = vcombine.low %v1014, %v1016
    %v1687 = vcombine.low %v999, %v1013
    %v1688 = vcombine.low %v1015, %v1017
    %v1690 = vunpack.c.l.s4 1966171168
    %v1691 = vunpack.c.0.s8 %v1690
    %v1692 = vlaneseq
    %v1693 = vshrl.u32 %v1692, 7
    %v1694 = vsub.s32 %v1691, %v1693
    %v1695 = vrot.slane %v1685, %v1694
    %v1697 = vunpack.c.l.s4 1966171168
    %v1698 = vunpack.c.0.s8 %v1697
    %v1699 = vlaneseq
    %v1700 = vshrl.u32 %v1699, 7
    %v1701 = vsub.s32 %v1698, %v1700
    %v1702 = vrot.slane %v1686, %v1701
    %v1704 = vunpack.c.l.s4 1966171168
    %v1705 = vunpack.c.0.s8 %v1704
    %v1706 = vlaneseq
    %v1707 = vshrl.u32 %v1706, 7
    %v1708 = vsub.s32 %v1705, %v1707
    %v1709 = vrot.slane %v1687, %v1708
    %v1711 = vunpack.c.l.s4 1966171168
    %v1712 = vunpack.c.0.s8 %v1711
    %v1713 = vlaneseq
    %v1714 = vshrl.u32 %v1713, 7
    %v1715 = vsub.s32 %v1712, %v1714
    %v1716 = vrot.slane %v1688, %v1715
    %v1717 = vcombine.low %v1695, %v1702
    %v1718 = vcombine.low %v1709, %v1716
    %v1720 = vunpack.c.l.s4 1966171168
    %v1721 = vunpack.c.0.s8 %v1720
    %v1722 = vlaneseq
    %v1723 = vshrl.u32 %v1722, 7
    %v1724 = vsub.s32 %v1721, %v1723
    %v1725 = vrot.slane %v1717, %v1724
    %v1727 = vunpack.c.l.s4 1966171168
    %v1728 = vunpack.c.0.s8 %v1727
    %v1729 = vlaneseq
    %v1730 = vshrl.u32 %v1729, 7
    %v1731 = vsub.s32 %v1728, %v1730
    %v1732 = vrot.slane %v1718, %v1731
    %v1733 = vcombine.low %v1725, %v1732
    %v1734 = vcombine.low %v1041, %v1055
    %v1735 = vcombine.low %v1063, %v1065
    %v1736 = vcombine.low %v1048, %v1062
    %v1737 = vcombine.low %v1064, %v1066
    %v1739 = vunpack.c.l.s4 1966171168
    %v1740 = vunpack.c.0.s8 %v1739
    %v1741 = vlaneseq
    %v1742 = vshrl.u32 %v1741, 7
    %v1743 = vsub.s32 %v1740, %v1742
    %v1744 = vrot.slane %v1734, %v1743
    %v1746 = vunpack.c.l.s4 1966171168
    %v1747 = vunpack.c.0.s8 %v1746
    %v1748 = vlaneseq
    %v1749 = vshrl.u32 %v1748, 7
    %v1750 = vsub.s32 %v1747, %v1749
    %v1751 = vrot.slane %v1735, %v1750
    %v1753 = vunpack.c.l.s4 1966171168
    %v1754 = vunpack.c.0.s8 %v1753
    %v1755 = vlaneseq
    %v1756 = vshrl.u32 %v1755, 7
    %v1757 = vsub.s32 %v1754, %v1756
    %v1758 = vrot.slane %v1736, %v1757
    %v1760 = vunpack.c.l.s4 1966171168
    %v1761 = vunpack.c.0.s8 %v1760
    %v1762 = vlaneseq
    %v1763 = vshrl.u32 %v1762, 7
    %v1764 = vsub.s32 %v1761, %v1763
    %v1765 = vrot.slane %v1737, %v1764
    %v1766 = vcombine.low %v1744, %v1751
    %v1767 = vcombine.low %v1758, %v1765
    %v1769 = vunpack.c.l.s4 1966171168
    %v1770 = vunpack.c.0.s8 %v1769
    %v1771 = vlaneseq
    %v1772 = vshrl.u32 %v1771, 7
    %v1773 = vsub.s32 %v1770, %v1772
    %v1774 = vrot.slane %v1766, %v1773
    %v1776 = vunpack.c.l.s4 1966171168
    %v1777 = vunpack.c.0.s8 %v1776
    %v1778 = vlaneseq
    %v1779 = vshrl.u32 %v1778, 7
    %v1780 = vsub.s32 %v1777, %v1779
    %v1781 = vrot.slane %v1767, %v1780
    %v1782 = vcombine.low %v1774, %v1781
    %v1783 = vcombine.low %v1090, %v1104
    %v1784 = vcombine.low %v1112, %v1114
    %v1785 = vcombine.low %v1097, %v1111
    %v1786 = vcombine.low %v1113, %v1115
    %v1788 = vunpack.c.l.s4 1966171168
    %v1789 = vunpack.c.0.s8 %v1788
    %v1790 = vlaneseq
    %v1791 = vshrl.u32 %v1790, 7
    %v1792 = vsub.s32 %v1789, %v1791
    %v1793 = vrot.slane %v1783, %v1792
    %v1795 = vunpack.c.l.s4 1966171168
    %v1796 = vunpack.c.0.s8 %v1795
    %v1797 = vlaneseq
    %v1798 = vshrl.u32 %v1797, 7
    %v1799 = vsub.s32 %v1796, %v1798
    %v1800 = vrot.slane %v1784, %v1799
    %v1802 = vunpack.c.l.s4 1966171168
    %v1803 = vunpack.c.0.s8 %v1802
    %v1804 = vlaneseq
    %v1805 = vshrl.u32 %v1804, 7
    %v1806 = vsub.s32 %v1803, %v1805
    %v1807 = vrot.slane %v1785, %v1806
    %v1809 = vunpack.c.l.s4 1966171168
    %v1810 = vunpack.c.0.s8 %v1809
    %v1811 = vlaneseq
    %v1812 = vshrl.u32 %v1811, 7
    %v1813 = vsub.s32 %v1810, %v1812
    %v1814 = vrot.slane %v1786, %v1813
    %v1815 = vcombine.low %v1793, %v1800
    %v1816 = vcombine.low %v1807, %v1814
    %v1818 = vunpack.c.l.s4 1966171168
    %v1819 = vunpack.c.0.s8 %v1818
    %v1820 = vlaneseq
    %v1821 = vshrl.u32 %v1820, 7
    %v1822 = vsub.s32 %v1819, %v1821
    %v1823 = vrot.slane %v1815, %v1822
    %v1825 = vunpack.c.l.s4 1966171168
    %v1826 = vunpack.c.0.s8 %v1825
    %v1827 = vlaneseq
    %v1828 = vshrl.u32 %v1827, 7
    %v1829 = vsub.s32 %v1826, %v1828
    %v1830 = vrot.slane %v1816, %v1829
    %v1831 = vcombine.low %v1823, %v1830
    %v1832 = vcombine.low %v1138, %v1152
    %v1833 = vcombine.low %v1153, %v1154
    %v1834 = vcombine.low %v1145, %v1178
    %v1835 = vcombine.low %v1192, %v1200
    %v1837 = vunpack.c.l.s4 1966171168
    %v1838 = vunpack.c.0.s8 %v1837
    %v1839 = vlaneseq
    %v1840 = vshrl.u32 %v1839, 7
    %v1841 = vsub.s32 %v1838, %v1840
    %v1842 = vrot.slane %v1832, %v1841
    %v1844 = vunpack.c.l.s4 1966171168
    %v1845 = vunpack.c.0.s8 %v1844
    %v1846 = vlaneseq
    %v1847 = vshrl.u32 %v1846, 7
    %v1848 = vsub.s32 %v1845, %v1847
    %v1849 = vrot.slane %v1833, %v1848
    %v1851 = vunpack.c.l.s4 1966171168
    %v1852 = vunpack.c.0.s8 %v1851
    %v1853 = vlaneseq
    %v1854 = vshrl.u32 %v1853, 7
    %v1855 = vsub.s32 %v1852, %v1854
    %v1856 = vrot.slane %v1834, %v1855
    %v1858 = vunpack.c.l.s4 1966171168
    %v1859 = vunpack.c.0.s8 %v1858
    %v1860 = vlaneseq
    %v1861 = vshrl.u32 %v1860, 7
    %v1862 = vsub.s32 %v1859, %v1861
    %v1863 = vrot.slane %v1835, %v1862
    %v1864 = vcombine.low %v1842, %v1849
    %v1865 = vcombine.low %v1856, %v1863
    %v1867 = vunpack.c.l.s4 1966171168
    %v1868 = vunpack.c.0.s8 %v1867
    %v1869 = vlaneseq
    %v1870 = vshrl.u32 %v1869, 7
    %v1871 = vsub.s32 %v1868, %v1870
    %v1872 = vrot.slane %v1864, %v1871
    %v1874 = vunpack.c.l.s4 1966171168
    %v1875 = vunpack.c.0.s8 %v1874
    %v1876 = vlaneseq
    %v1877 = vshrl.u32 %v1876, 7
    %v1878 = vsub.s32 %v1875, %v1877
    %v1879 = vrot.slane %v1865, %v1878
    %v1880 = vcombine.low %v1872, %v1879
    %v1881 = vcombine.low %v1202, %v1185
    %v1882 = vcombine.low %v1199, %v1201
    %v1883 = vcombine.low %v1203, %v1227
    %v1884 = vcombine.low %v1241, %v1249
    %v1886 = vunpack.c.l.s4 1966171168
    %v1887 = vunpack.c.0.s8 %v1886
    %v1888 = vlaneseq
    %v1889 = vshrl.u32 %v1888, 7
    %v1890 = vsub.s32 %v1887, %v1889
    %v1891 = vrot.slane %v1881, %v1890
    %v1893 = vunpack.c.l.s4 1966171168
    %v1894 = vunpack.c.0.s8 %v1893
    %v1895 = vlaneseq
    %v1896 = vshrl.u32 %v1895, 7
    %v1897 = vsub.s32 %v1894, %v1896
    %v1898 = vrot.slane %v1882, %v1897
    %v1900 = vunpack.c.l.s4 1966171168
    %v1901 = vunpack.c.0.s8 %v1900
    %v1902 = vlaneseq
    %v1903 = vshrl.u32 %v1902, 7
    %v1904 = vsub.s32 %v1901, %v1903
    %v1905 = vrot.slane %v1883, %v1904
    %v1907 = vunpack.c.l.s4 1966171168
    %v1908 = vunpack.c.0.s8 %v1907
    %v1909 = vlaneseq
    %v1910 = vshrl.u32 %v1909, 7
    %v1911 = vsub.s32 %v1908, %v1910
    %v1912 = vrot.slane %v1884, %v1911
    %v1913 = vcombine.low %v1891, %v1898
    %v1914 = vcombine.low %v1905, %v1912
    %v1916 = vunpack.c.l.s4 1966171168
    %v1917 = vunpack.c.0.s8 %v1916
    %v1918 = vlaneseq
    %v1919 = vshrl.u32 %v1918, 7
    %v1920 = vsub.s32 %v1917, %v1919
    %v1921 = vrot.slane %v1913, %v1920
    %v1923 = vunpack.c.l.s4 1966171168
    %v1924 = vunpack.c.0.s8 %v1923
    %v1925 = vlaneseq
    %v1926 = vshrl.u32 %v1925, 7
    %v1927 = vsub.s32 %v1924, %v1926
    %v1928 = vrot.slane %v1914, %v1927
    %v1929 = vcombine.low %v1921, %v1928
    %v1930 = vcombine.low %v1251, %v1234
    %v1931 = vcombine.low %v1248, %v1250
    %v1932 = vcombine.low %v1252, %v1276
    %v1933 = vcombine.low %v1290, %v1298
    %v1935 = vunpack.c.l.s4 1966171168
    %v1936 = vunpack.c.0.s8 %v1935
    %v1937 = vlaneseq
    %v1938 = vshrl.u32 %v1937, 7
    %v1939 = vsub.s32 %v1936, %v1938
    %v1940 = vrot.slane %v1930, %v1939
    %v1942 = vunpack.c.l.s4 1966171168
    %v1943 = vunpack.c.0.s8 %v1942
    %v1944 = vlaneseq
    %v1945 = vshrl.u32 %v1944, 7
    %v1946 = vsub.s32 %v1943, %v1945
    %v1947 = vrot.slane %v1931, %v1946
    %v1949 = vunpack.c.l.s4 1966171168
    %v1950 = vunpack.c.0.s8 %v1949
    %v1951 = vlaneseq
    %v1952 = vshrl.u32 %v1951, 7
    %v1953 = vsub.s32 %v1950, %v1952
    %v1954 = vrot.slane %v1932, %v1953
    %v1956 = vunpack.c.l.s4 1966171168
    %v1957 = vunpack.c.0.s8 %v1956
    %v1958 = vlaneseq
    %v1959 = vshrl.u32 %v1958, 7
    %v1960 = vsub.s32 %v1957, %v1959
    %v1961 = vrot.slane %v1933, %v1960
    %v1962 = vcombine.low %v1940, %v1947
    %v1963 = vcombine.low %v1954, %v1961
    %v1965 = vunpack.c.l.s4 1966171168
    %v1966 = vunpack.c.0.s8 %v1965
    %v1967 = vlaneseq
    %v1968 = vshrl.u32 %v1967, 7
    %v1969 = vsub.s32 %v1966, %v1968
    %v1970 = vrot.slane %v1962, %v1969
    %v1972 = vunpack.c.l.s4 1966171168
    %v1973 = vunpack.c.0.s8 %v1972
    %v1974 = vlaneseq
    %v1975 = vshrl.u32 %v1974, 7
    %v1976 = vsub.s32 %v1973, %v1975
    %v1977 = vrot.slane %v1963, %v1976
    %v1978 = vcombine.low %v1970, %v1977
    %v1979 = vcombine.low %v1300, %v1283
    %v1980 = vcombine.low %v1297, %v1299
    %v1981 = vcombine.low %v1301, %v1325
    %v1982 = vcombine.low %v1339, %v1347
    %v1984 = vunpack.c.l.s4 1966171168
    %v1985 = vunpack.c.0.s8 %v1984
    %v1986 = vlaneseq
    %v1987 = vshrl.u32 %v1986, 7
    %v1988 = vsub.s32 %v1985, %v1987
    %v1989 = vrot.slane %v1979, %v1988
    %v1991 = vunpack.c.l.s4 1966171168
    %v1992 = vunpack.c.0.s8 %v1991
    %v1993 = vlaneseq
    %v1994 = vshrl.u32 %v1993, 7
    %v1995 = vsub.s32 %v1992, %v1994
    %v1996 = vrot.slane %v1980, %v1995
    %v1998 = vunpack.c.l.s4 1966171168
    %v1999 = vunpack.c.0.s8 %v1998
    %v2000 = vlaneseq
    %v2001 = vshrl.u32 %v2000, 7
    %v2002 = vsub.s32 %v1999, %v2001
    %v2003 = vrot.slane %v1981, %v2002
    %v2005 = vunpack.c.l.s4 1966171168
    %v2006 = vunpack.c.0.s8 %v2005
    %v2007 = vlaneseq
    %v2008 = vshrl.u32 %v2007, 7
    %v2009 = vsub.s32 %v2006, %v2008
    %v2010 = vrot.slane %v1982, %v2009
    %v2011 = vcombine.low %v1989, %v1996
    %v2012 = vcombine.low %v2003, %v2010
    %v2014 = vunpack.c.l.s4 1966171168
    %v2015 = vunpack.c.0.s8 %v2014
    %v2016 = vlaneseq
    %v2017 = vshrl.u32 %v2016, 7
    %v2018 = vsub.s32 %v2015, %v2017
    %v2019 = vrot.slane %v2011, %v2018
    %v2021 = vunpack.c.l.s4 1966171168
    %v2022 = vunpack.c.0.s8 %v2021
    %v2023 = vlaneseq
    %v2024 = vshrl.u32 %v2023, 7
    %v2025 = vsub.s32 %v2022, %v2024
    %v2026 = vrot.slane %v2012, %v2025
    %v2027 = vcombine.low %v2019, %v2026
    %v2028 = vcombine.low %v1349, %v1332
    %v2029 = vcombine.low %v1346, %v1348
    %v2030 = vcombine.low %v1350, %v1374
    %v2031 = vcombine.low %v1388, %v1396
    %v2033 = vunpack.c.l.s4 1966171168
    %v2034 = vunpack.c.0.s8 %v2033
    %v2035 = vlaneseq
    %v2036 = vshrl.u32 %v2035, 7
    %v2037 = vsub.s32 %v2034, %v2036
    %v2038 = vrot.slane %v2028, %v2037
    %v2040 = vunpack.c.l.s4 1966171168
    %v2041 = vunpack.c.0.s8 %v2040
    %v2042 = vlaneseq
    %v2043 = vshrl.u32 %v2042, 7
    %v2044 = vsub.s32 %v2041, %v2043
    %v2045 = vrot.slane %v2029, %v2044
    %v2047 = vunpack.c.l.s4 1966171168
    %v2048 = vunpack.c.0.s8 %v2047
    %v2049 = vlaneseq
    %v2050 = vshrl.u32 %v2049, 7
    %v2051 = vsub.s32 %v2048, %v2050
    %v2052 = vrot.slane %v2030, %v2051
    %v2054 = vunpack.c.l.s4 1966171168
    %v2055 = vunpack.c.0.s8 %v2054
    %v2056 = vlaneseq
    %v2057 = vshrl.u32 %v2056, 7
    %v2058 = vsub.s32 %v2055, %v2057
    %v2059 = vrot.slane %v2031, %v2058
    %v2060 = vcombine.low %v2038, %v2045
    %v2061 = vcombine.low %v2052, %v2059
    %v2063 = vunpack.c.l.s4 1966171168
    %v2064 = vunpack.c.0.s8 %v2063
    %v2065 = vlaneseq
    %v2066 = vshrl.u32 %v2065, 7
    %v2067 = vsub.s32 %v2064, %v2066
    %v2068 = vrot.slane %v2060, %v2067
    %v2070 = vunpack.c.l.s4 1966171168
    %v2071 = vunpack.c.0.s8 %v2070
    %v2072 = vlaneseq
    %v2073 = vshrl.u32 %v2072, 7
    %v2074 = vsub.s32 %v2071, %v2073
    %v2075 = vrot.slane %v2061, %v2074
    %v2076 = vcombine.low %v2068, %v2075
    %v2077 = vcombine.low %v1398, %v1381
    %v2078 = vcombine.low %v1395, %v1397
    %v2079 = vcombine.low %v1399, %v1423
    %v2080 = vcombine.low %v1437, %v1445
    %v2082 = vunpack.c.l.s4 1966171168
    %v2083 = vunpack.c.0.s8 %v2082
    %v2084 = vlaneseq
    %v2085 = vshrl.u32 %v2084, 7
    %v2086 = vsub.s32 %v2083, %v2085
    %v2087 = vrot.slane %v2077, %v2086
    %v2089 = vunpack.c.l.s4 1966171168
    %v2090 = vunpack.c.0.s8 %v2089
    %v2091 = vlaneseq
    %v2092 = vshrl.u32 %v2091, 7
    %v2093 = vsub.s32 %v2090, %v2092
    %v2094 = vrot.slane %v2078, %v2093
    %v2096 = vunpack.c.l.s4 1966171168
    %v2097 = vunpack.c.0.s8 %v2096
    %v2098 = vlaneseq
    %v2099 = vshrl.u32 %v2098, 7
    %v2100 = vsub.s32 %v2097, %v2099
    %v2101 = vrot.slane %v2079, %v2100
    %v2103 = vunpack.c.l.s4 1966171168
    %v2104 = vunpack.c.0.s8 %v2103
    %v2105 = vlaneseq
    %v2106 = vshrl.u32 %v2105, 7
    %v2107 = vsub.s32 %v2104, %v2106
    %v2108 = vrot.slane %v2080, %v2107
    %v2109 = vcombine.low %v2087, %v2094
    %v2110 = vcombine.low %v2101, %v2108
    %v2112 = vunpack.c.l.s4 1966171168
    %v2113 = vunpack.c.0.s8 %v2112
    %v2114 = vlaneseq
    %v2115 = vshrl.u32 %v2114, 7
    %v2116 = vsub.s32 %v2113, %v2115
    %v2117 = vrot.slane %v2109, %v2116
    %v2119 = vunpack.c.l.s4 1966171168
    %v2120 = vunpack.c.0.s8 %v2119
    %v2121 = vlaneseq
    %v2122 = vshrl.u32 %v2121, 7
    %v2123 = vsub.s32 %v2120, %v2122
    %v2124 = vrot.slane %v2110, %v2123
    %v2125 = vcombine.low %v2117, %v2124
    %v2126 = vcombine.low %v1447, %v1430
    %v2127 = vcombine.low %v1444, %v1446
    %v2128 = vcombine.low %v1448, %v1471
    %v2129 = vcombine.low %v1485, %v1486
    %v2131 = vunpack.c.l.s4 1966171168
    %v2132 = vunpack.c.0.s8 %v2131
    %v2133 = vlaneseq
    %v2134 = vshrl.u32 %v2133, 7
    %v2135 = vsub.s32 %v2132, %v2134
    %v2136 = vrot.slane %v2126, %v2135
    %v2138 = vunpack.c.l.s4 1966171168
    %v2139 = vunpack.c.0.s8 %v2138
    %v2140 = vlaneseq
    %v2141 = vshrl.u32 %v2140, 7
    %v2142 = vsub.s32 %v2139, %v2141
    %v2143 = vrot.slane %v2127, %v2142
    %v2145 = vunpack.c.l.s4 1966171168
    %v2146 = vunpack.c.0.s8 %v2145
    %v2147 = vlaneseq
    %v2148 = vshrl.u32 %v2147, 7
    %v2149 = vsub.s32 %v2146, %v2148
    %v2150 = vrot.slane %v2128, %v2149
    %v2152 = vunpack.c.l.s4 1966171168
    %v2153 = vunpack.c.0.s8 %v2152
    %v2154 = vlaneseq
    %v2155 = vshrl.u32 %v2154, 7
    %v2156 = vsub.s32 %v2153, %v2155
    %v2157 = vrot.slane %v2129, %v2156
    %v2158 = vcombine.low %v2136, %v2143
    %v2159 = vcombine.low %v2150, %v2157
    %v2161 = vunpack.c.l.s4 1966171168
    %v2162 = vunpack.c.0.s8 %v2161
    %v2163 = vlaneseq
    %v2164 = vshrl.u32 %v2163, 7
    %v2165 = vsub.s32 %v2162, %v2164
    %v2166 = vrot.slane %v2158, %v2165
    %v2168 = vunpack.c.l.s4 1966171168
    %v2169 = vunpack.c.0.s8 %v2168
    %v2170 = vlaneseq
    %v2171 = vshrl.u32 %v2170, 7
    %v2172 = vsub.s32 %v2169, %v2171
    %v2173 = vrot.slane %v2159, %v2172
    %v2174 = vcombine.low %v2166, %v2173
    %v2175 = vcombine.low %v1487, %v1478
    %v2177 = vunpack.c.l.s4 1966171168
    %v2178 = vunpack.c.0.s8 %v2177
    %v2179 = vlaneseq
    %v2180 = vshrl.u32 %v2179, 7
    %v2181 = vsub.s32 %v2178, %v2180
    %v2182 = vrot.slane %v2175, %v2181
    %v2184 = vunpack.c.l.s4 1966171168
    %v2185 = vunpack.c.0.s8 %v2184
    %v2186 = vlaneseq
    %v2187 = vshrl.u32 %v2186, 7
    %v2188 = vsub.s32 %v2185, %v2187
    %v2189 = vrot.slane %v2182, %v2188
    %v2190 = vcombine.low %v1512, %v1526
    %v2191 = vcombine.low %v1534, %v1536
    %v2192 = vcombine.low %v1519, %v1533
    %v2193 = vcombine.low %v1535, %v1537
    %v2195 = vunpack.c.l.s4 1966171168
    %v2196 = vunpack.c.0.s8 %v2195
    %v2197 = vlaneseq
    %v2198 = vshrl.u32 %v2197, 7
    %v2199 = vsub.s32 %v2196, %v2198
    %v2200 = vrot.slane %v2190, %v2199
    %v2202 = vunpack.c.l.s4 1966171168
    %v2203 = vunpack.c.0.s8 %v2202
    %v2204 = vlaneseq
    %v2205 = vshrl.u32 %v2204, 7
    %v2206 = vsub.s32 %v2203, %v2205
    %v2207 = vrot.slane %v2191, %v2206
    %v2209 = vunpack.c.l.s4 1966171168
    %v2210 = vunpack.c.0.s8 %v2209
    %v2211 = vlaneseq
    %v2212 = vshrl.u32 %v2211, 7
    %v2213 = vsub.s32 %v2210, %v2212
    %v2214 = vrot.slane %v2192, %v2213
    %v2216 = vunpack.c.l.s4 1966171168
    %v2217 = vunpack.c.0.s8 %v2216
    %v2218 = vlaneseq
    %v2219 = vshrl.u32 %v2218, 7
    %v2220 = vsub.s32 %v2217, %v2219
    %v2221 = vrot.slane %v2193, %v2220
    %v2222 = vcombine.low %v2200, %v2207
    %v2223 = vcombine.high %v2200, %v2207
    %v2224 = vcombine.low %v2214, %v2221
    %v2225 = vcombine.high %v2214, %v2221
    %v2227 = vunpack.c.l.s4 1966171168
    %v2228 = vunpack.c.0.s8 %v2227
    %v2229 = vlaneseq
    %v2230 = vshrl.u32 %v2229, 7
    %v2231 = vsub.s32 %v2228, %v2230
    %v2232 = vrot.slane %v2222, %v2231
    %v2234 = vunpack.c.l.s4 1966171168
    %v2235 = vunpack.c.0.s8 %v2234
    %v2236 = vlaneseq
    %v2237 = vshrl.u32 %v2236, 7
    %v2238 = vsub.s32 %v2235, %v2237
    %v2239 = vrot.slane %v2223, %v2238
    %v2241 = vunpack.c.l.s4 1966171168
    %v2242 = vunpack.c.0.s8 %v2241
    %v2243 = vlaneseq
    %v2244 = vshrl.u32 %v2243, 7
    %v2245 = vsub.s32 %v2242, %v2244
    %v2246 = vrot.slane %v2224, %v2245
    %v2248 = vunpack.c.l.s4 1966171168
    %v2249 = vunpack.c.0.s8 %v2248
    %v2250 = vlaneseq
    %v2251 = vshrl.u32 %v2250, 7
    %v2252 = vsub.s32 %v2249, %v2251
    %v2253 = vrot.slane %v2225, %v2252
    %v2254 = vcombine.low %v2232, %v2246
    %v2255 = vcombine.low %v2239, %v2253
    %v2256 = vcombine.low %v1519, %v1512
    %v2257 = vcombine.low %v1526, %v1534
    %v2259 = vunpack.c.l.s4 1966171168
    %v2260 = vunpack.c.0.s8 %v2259
    %v2261 = vlaneseq
    %v2262 = vshrl.u32 %v2261, 7
    %v2263 = vsub.s32 %v2260, %v2262
    %v2264 = vrot.slane %v2256, %v2263
    %v2266 = vunpack.c.l.s4 1966171168
    %v2267 = vunpack.c.0.s8 %v2266
    %v2268 = vlaneseq
    %v2269 = vshrl.u32 %v2268, 7
    %v2270 = vsub.s32 %v2267, %v2269
    %v2271 = vrot.slane %v2257, %v2270
    %v2272 = vcombine.low %v2264, %v2271
    %v2273 = vcombine.high %v2264, %v2271
    %v2275 = vunpack.c.l.s4 1966171168
    %v2276 = vunpack.c.0.s8 %v2275
    %v2277 = vlaneseq
    %v2278 = vshrl.u32 %v2277, 7
    %v2279 = vsub.s32 %v2276, %v2278
    %v2280 = vrot.slane %v2272, %v2279
    %v2282 = vunpack.c.l.s4 1966171168
    %v2283 = vunpack.c.0.s8 %v2282
    %v2284 = vlaneseq
    %v2285 = vshrl.u32 %v2284, 7
    %v2286 = vsub.s32 %v2283, %v2285
    %v2287 = vrot.slane %v2273, %v2286
    %v2288 = vcombine.low %v2232, %v2280
    %v2289 = vcombine.low %v2239, %v2287
    %v2290 = vcombine.low %v1536, %v1519
    %v2291 = vcombine.low %v1533, %v1535
    %v2292 = vcombine.low %v1537, %v1512
    %v2294 = vunpack.c.l.s4 1966171168
    %v2295 = vunpack.c.0.s8 %v2294
    %v2296 = vlaneseq
    %v2297 = vshrl.u32 %v2296, 7
    %v2298 = vsub.s32 %v2295, %v2297
    %v2299 = vrot.slane %v2290, %v2298
    %v2301 = vunpack.c.l.s4 1966171168
    %v2302 = vunpack.c.0.s8 %v2301
    %v2303 = vlaneseq
    %v2304 = vshrl.u32 %v2303, 7
    %v2305 = vsub.s32 %v2302, %v2304
    %v2306 = vrot.slane %v2291, %v2305
    %v2308 = vunpack.c.l.s4 1966171168
    %v2309 = vunpack.c.0.s8 %v2308
    %v2310 = vlaneseq
    %v2311 = vshrl.u32 %v2310, 7
    %v2312 = vsub.s32 %v2309, %v2311
    %v2313 = vrot.slane %v2292, %v2312
    %v2314 = vcombine.low %v2299, %v2306
    %v2315 = vcombine.high %v2299, %v2306
    %v2316 = vcombine.low %v2313, %v2271
    %v2317 = vcombine.high %v2313, %v2271
    %v2319 = vunpack.c.l.s4 1966171168
    %v2320 = vunpack.c.0.s8 %v2319
    %v2321 = vlaneseq
    %v2322 = vshrl.u32 %v2321, 7
    %v2323 = vsub.s32 %v2320, %v2322
    %v2324 = vrot.slane %v2314, %v2323
    %v2326 = vunpack.c.l.s4 1966171168
    %v2327 = vunpack.c.0.s8 %v2326
    %v2328 = vlaneseq
    %v2329 = vshrl.u32 %v2328, 7
    %v2330 = vsub.s32 %v2327, %v2329
    %v2331 = vrot.slane %v2315, %v2330
    %v2333 = vunpack.c.l.s4 1966171168
    %v2334 = vunpack.c.0.s8 %v2333
    %v2335 = vlaneseq
    %v2336 = vshrl.u32 %v2335, 7
    %v2337 = vsub.s32 %v2334, %v2336
    %v2338 = vrot.slane %v2316, %v2337
    %v2340 = vunpack.c.l.s4 1966171168
    %v2341 = vunpack.c.0.s8 %v2340
    %v2342 = vlaneseq
    %v2343 = vshrl.u32 %v2342, 7
    %v2344 = vsub.s32 %v2341, %v2343
    %v2345 = vrot.slane %v2317, %v2344
    %v2346 = vcombine.low %v2324, %v2338
    %v2347 = vcombine.low %v2331, %v2345
    %v2348 = vcombine.high %v2299, %v2299
    %v2350 = vunpack.c.l.s4 1966171168
    %v2351 = vunpack.c.0.s8 %v2350
    %v2352 = vlaneseq
    %v2353 = vshrl.u32 %v2352, 7
    %v2354 = vsub.s32 %v2351, %v2353
    %v2355 = vrot.slane %v2299, %v2354
    %v2357 = vunpack.c.l.s4 1966171168
    %v2358 = vunpack.c.0.s8 %v2357
    %v2359 = vlaneseq
    %v2360 = vshrl.u32 %v2359, 7
    %v2361 = vsub.s32 %v2358, %v2360
    %v2362 = vrot.slane %v2348, %v2361
    %vm2371 = vcmask 97280
    %v2372 = vsel %vm2371, %v1586, 0
    %v2374 = vsel %vm2371, %v1635, 0
    %v2376 = vsel %vm2371, %v1684, 0
    %v2378 = vsel %vm2371, %v1733, 0
    %v2380 = vsel %vm2371, %v1782, 0
    %v2382 = vsel %vm2371, %v1831, 0
    %v2384 = vsel %vm2371, %v1880, 0
    %v2386 = vsel %vm2371, %v1929, 0
    %v2388 = vsel %vm2371, %v1978, 0
    %v2390 = vsel %vm2371, %v2027, 0
    %v2392 = vsel %vm2371, %v2076, 0
    %v2394 = vsel %vm2371, %v2125, 0
    %v2396 = vsel %vm2371, %v2174, 0
    %v2398 = vsel %vm2371, %v2189, 0
    %vm2400 = vcmask 1043456
    %v2402 = vsel %vm2400, %v796, 0
    %v2405 = vsel %vm2400, %v797, 0
    %2407 = vmatprep.subr.mxu0 %v795
    %2408 = vmatpush1.msra.mxu0 %v794
    %2409 = vmatprep.subr.mxu0 %v2405
    %2410 = vmatpush1.msra.mxu0 %v2402
    %2411 = vmatprep.subr.mxu0 0.0
    %2412 = vmatpush1.msra.mxu0 0.0
    %2413 = vmatprep.subr.mxu0 0.0
    %2414 = vmatpush1.msra.mxu0 0.0
    %2415 = vmatprep.subr.mxu0 0.0
    %2416 = vmatpush1.msra.mxu0 0.0
    %2417 = vmatprep.subr.mxu0 0.0
    %2418 = vmatpush1.msra.mxu0 0.0
    %2419 = vmatprep.subr.mxu0 0.0
    %2420 = vmatpush1.msra.mxu0 0.0
    %2421 = vmatprep.subr.mxu0 0.0
    %2422 = vmatpush1.msra.mxu0 0.0
    %2423 = vmatprep.subr.mxu0 0.0
    %2424 = vmatpush1.msra.mxu0 0.0
    %2425 = vmatprep.subr.mxu0 0.0
    %2426 = vmatpush1.msra.mxu0 0.0
    %2427 = vmatprep.subr.mxu0 0.0
    %2428 = vmatpush1.msra.mxu0 0.0
    %2429 = vmatprep.subr.mxu0 0.0
    %2430 = vmatpush1.msra.mxu0 0.0
    %2431 = vmatprep.subr.mxu0 0.0
    %2432 = vmatpush1.msra.mxu0 0.0
    %2433 = vmatprep.subr.mxu0 0.0
    %2434 = vmatpush1.msra.mxu0 0.0
    %2435 = vmatprep.subr.mxu0 0.0
    %2436 = vmatpush1.msra.mxu0 0.0
    %2437 = vmatprep.subr.mxu0 0.0
    %2438 = vmatpush1.msra.mxu0 0.0
    %2439 = vmatprep.subr.mxu0 0.0
    %2440 = vmatpush1.msra.mxu0 0.0
    %2441 = vmatprep.subr.mxu0 0.0
    %2442 = vmatpush1.msra.mxu0 0.0
    %2443 = vmatprep.subr.mxu0 0.0
    %2444 = vmatpush1.msra.mxu0 0.0
    %2445 = vmatprep.subr.mxu0 0.0
    %2446 = vmatpush1.msra.mxu0 0.0
    %2447 = vmatprep.subr.mxu0 0.0
    %2448 = vmatpush1.msra.mxu0 0.0
    %2449 = vmatprep.subr.mxu0 0.0
    %2450 = vmatpush1.msra.mxu0 0.0
    %2451 = vmatprep.subr.mxu0 0.0
    %2452 = vmatpush1.msra.mxu0 0.0
    %2453 = vmatprep.subr.mxu0 0.0
    %2454 = vmatpush1.msra.mxu0 0.0
    %2455 = vmatprep.subr.mxu0 0.0
    %2456 = vmatpush1.msra.mxu0 0.0
    %2457 = vmatprep.subr.mxu0 0.0
    %2458 = vmatpush1.msra.mxu0 0.0
    %2459 = vmatprep.subr.mxu0 0.0
    %2460 = vmatpush1.msra.mxu0 0.0
    %2461 = vmatprep.subr.mxu0 0.0
    %2462 = vmatpush1.msra.mxu0 0.0
    %2463 = vmatprep.subr.mxu0 0.0
    %2464 = vmatpush1.msra.mxu0 0.0
    %2465 = vmatprep.subr.mxu0 0.0
    %2466 = vmatpush1.msra.mxu0 0.0
    %2467 = vmatprep.subr.mxu0 0.0
    %2468 = vmatpush1.msra.mxu0 0.0
    %2469 = vmatprep.subr.mxu0 0.0
    %2470 = vmatpush1.msra.mxu0 0.0
    %2471 = vmatprep.mubr.f32.mxu0 0.0
    %2472 = vmatmul.mubr.f32.gmra.mrb[0].mxu0 %v2372
    %v2473 = vpop.f32.mrb[0].mxu0
    %v2474 = vadd.f32 %v2254, %v2473
    %v2475 = vpop.f32.mrb[0].mxu0
    %v2476 = vadd.f32 %v2255, %v2475
    %2477 = vmatprep.mubr.f32.mxu0 0.0
    %2478 = vmatmul.mubr.f32.gmra.mrb[0].mxu0 %v2374
    %v2479 = vpop.f32.mrb[0].mxu0
    %v2480 = vadd.f32 %v2254, %v2479
    %v2481 = vpop.f32.mrb[0].mxu0
    %v2482 = vadd.f32 %v2255, %v2481
    %2483 = vmatprep.mubr.f32.mxu0 0.0
    %2484 = vmatmul.mubr.f32.gmra.mrb[0].mxu0 %v2376
    %v2485 = vpop.f32.mrb[0].mxu0
    %v2486 = vadd.f32 %v2254, %v2485
    %v2487 = vpop.f32.mrb[0].mxu0
    %v2488 = vadd.f32 %v2255, %v2487
    %2489 = vmatprep.mubr.f32.mxu0 0.0
    %2490 = vmatmul.mubr.f32.gmra.mrb[0].mxu0 %v2378
    %v2491 = vpop.f32.mrb[0].mxu0
    %v2492 = vadd.f32 %v2254, %v2491
    %v2493 = vpop.f32.mrb[0].mxu0
    %v2494 = vadd.f32 %v2255, %v2493
    %2495 = vmatprep.mubr.f32.mxu0 0.0
    %2496 = vmatmul.mubr.f32.gmra.mrb[0].mxu0 %v2380
    %v2497 = vpop.f32.mrb[0].mxu0
    %v2498 = vadd.f32 %v2254, %v2497
    %v2499 = vpop.f32.mrb[0].mxu0
    %v2500 = vadd.f32 %v2255, %v2499
    %2501 = vmatprep.mubr.f32.mxu0 0.0
    %2502 = vmatmul.mubr.f32.gmra.mrb[0].mxu0 %v2382
    %v2503 = vpop.f32.mrb[0].mxu0
    %v2504 = vadd.f32 %v2254, %v2503
    %v2505 = vpop.f32.mrb[0].mxu0
    %v2506 = vadd.f32 %v2255, %v2505
    %2507 = vmatprep.mubr.f32.mxu0 0.0
    %2508 = vmatmul.mubr.f32.gmra.mrb[0].mxu0 %v2384
    %v2509 = vpop.f32.mrb[0].mxu0
    %v2510 = vadd.f32 %v2288, %v2509
    %v2511 = vpop.f32.mrb[0].mxu0
    %v2512 = vadd.f32 %v2289, %v2511
    %2513 = vmatprep.mubr.f32.mxu0 0.0
    %2514 = vmatmul.mubr.f32.gmra.mrb[0].mxu0 %v2386
    %v2515 = vpop.f32.mrb[0].mxu0
    %v2516 = vadd.f32 %v2346, %v2515
    %v2517 = vpop.f32.mrb[0].mxu0
    %v2518 = vadd.f32 %v2347, %v2517
    %2519 = vmatprep.mubr.f32.mxu0 0.0
    %2520 = vmatmul.mubr.f32.gmra.mrb[0].mxu0 %v2388
    %v2521 = vpop.f32.mrb[0].mxu0
    %v2522 = vadd.f32 %v2346, %v2521
    %v2523 = vpop.f32.mrb[0].mxu0
    %v2524 = vadd.f32 %v2347, %v2523
    %2525 = vmatprep.mubr.f32.mxu0 0.0
    %2526 = vmatmul.mubr.f32.gmra.mrb[0].mxu0 %v2390
    %v2527 = vpop.f32.mrb[0].mxu0
    %v2528 = vadd.f32 %v2346, %v2527
    %v2529 = vpop.f32.mrb[0].mxu0
    %v2530 = vadd.f32 %v2347, %v2529
    %2531 = vmatprep.mubr.f32.mxu0 0.0
    %2532 = vmatmul.mubr.f32.gmra.mrb[0].mxu0 %v2392
    %v2533 = vpop.f32.mrb[0].mxu0
    %v2534 = vadd.f32 %v2346, %v2533
    %v2535 = vpop.f32.mrb[0].mxu0
    %v2536 = vadd.f32 %v2347, %v2535
    %2537 = vmatprep.mubr.f32.mxu0 0.0
    %2538 = vmatmul.mubr.f32.gmra.mrb[0].mxu0 %v2394
    %v2539 = vpop.f32.mrb[0].mxu0
    %v2540 = vadd.f32 %v2346, %v2539
    %v2541 = vpop.f32.mrb[0].mxu0
    %v2542 = vadd.f32 %v2347, %v2541
    %2543 = vmatprep.mubr.f32.mxu0 0.0
    %2544 = vmatmul.mubr.f32.gmra.mrb[0].mxu0 %v2396
    %v2545 = vpop.f32.mrb[0].mxu0
    %v2546 = vadd.f32 %v2346, %v2545
    %v2547 = vpop.f32.mrb[0].mxu0
    %v2548 = vadd.f32 %v2347, %v2547
    %2549 = vmatprep.mubr.f32.mxu0 0.0
    %2550 = vmatmul.mubr.f32.gmra.mrb[0].mxu0 %v2398
    %v2551 = vpop.f32.mrb[0].mxu0
    %v2552 = vadd.f32 %v2355, %v2551
    %v2553 = vpop.f32.mrb[0].mxu0
    %v2554 = vadd.f32 %v2362, %v2553
    %2555 = vdwg.mxu0
    %v2584 = vcombine.low %v2474, %v2476
    %v2585 = vcombine.high %v2474, %v2476
    %v2587 = vunpack.c.l.s4 1966171168
    %v2588 = vunpack.c.0.s8 %v2587
    %v2589 = vlaneseq
    %v2590 = vshrl.u32 %v2589, 7
    %v2591 = vsub.s32 %v2588, %v2590
    %v2592 = vrot.slane %v2584, %v2591
    %v2594 = vunpack.c.l.s4 1966171168
    %v2595 = vunpack.c.0.s8 %v2594
    %v2596 = vlaneseq
    %v2597 = vshrl.u32 %v2596, 7
    %v2598 = vsub.s32 %v2595, %v2597
    %v2599 = vrot.slane %v2585, %v2598
    %v2600 = vcombine.high %v2592, %v2592
    %v2601 = vcombine.high %v2599, %v2599
    %v2603 = vunpack.c.l.s4 1966171168
    %v2604 = vunpack.c.0.s8 %v2603
    %v2605 = vlaneseq
    %v2606 = vshrl.u32 %v2605, 7
    %v2607 = vsub.s32 %v2604, %v2606
    %v2608 = vrot.slane %v2592, %v2607
    %v2610 = vunpack.c.l.s4 1966171168
    %v2611 = vunpack.c.0.s8 %v2610
    %v2612 = vlaneseq
    %v2613 = vshrl.u32 %v2612, 7
    %v2614 = vsub.s32 %v2611, %v2613
    %v2615 = vrot.slane %v2599, %v2614
    %v2617 = vunpack.c.l.s4 1966171168
    %v2618 = vunpack.c.0.s8 %v2617
    %v2619 = vlaneseq
    %v2620 = vshrl.u32 %v2619, 7
    %v2621 = vsub.s32 %v2618, %v2620
    %v2622 = vrot.slane %v2600, %v2621
    %v2624 = vunpack.c.l.s4 1966171168
    %v2625 = vunpack.c.0.s8 %v2624
    %v2626 = vlaneseq
    %v2627 = vshrl.u32 %v2626, 7
    %v2628 = vsub.s32 %v2625, %v2627
    %v2629 = vrot.slane %v2601, %v2628
    %v2630 = vcombine.high %v2608, %v2608
    %v2631 = vcombine.high %v2615, %v2615
    %v2632 = vcombine.high %v2622, %v2622
    %v2633 = vcombine.high %v2629, %v2629
    %v2634 = vcombine.low %v2480, %v2482
    %v2635 = vcombine.high %v2480, %v2482
    %v2637 = vunpack.c.l.s4 1966171168
    %v2638 = vunpack.c.0.s8 %v2637
    %v2639 = vlaneseq
    %v2640 = vshrl.u32 %v2639, 7
    %v2641 = vsub.s32 %v2638, %v2640
    %v2642 = vrot.slane %v2634, %v2641
    %v2644 = vunpack.c.l.s4 1966171168
    %v2645 = vunpack.c.0.s8 %v2644
    %v2646 = vlaneseq
    %v2647 = vshrl.u32 %v2646, 7
    %v2648 = vsub.s32 %v2645, %v2647
    %v2649 = vrot.slane %v2635, %v2648
    %v2650 = vcombine.high %v2642, %v2642
    %v2651 = vcombine.high %v2649, %v2649
    %v2653 = vunpack.c.l.s4 1966171168
    %v2654 = vunpack.c.0.s8 %v2653
    %v2655 = vlaneseq
    %v2656 = vshrl.u32 %v2655, 7
    %v2657 = vsub.s32 %v2654, %v2656
    %v2658 = vrot.slane %v2642, %v2657
    %v2660 = vunpack.c.l.s4 1966171168
    %v2661 = vunpack.c.0.s8 %v2660
    %v2662 = vlaneseq
    %v2663 = vshrl.u32 %v2662, 7
    %v2664 = vsub.s32 %v2661, %v2663
    %v2665 = vrot.slane %v2649, %v2664
    %v2667 = vunpack.c.l.s4 1966171168
    %v2668 = vunpack.c.0.s8 %v2667
    %v2669 = vlaneseq
    %v2670 = vshrl.u32 %v2669, 7
    %v2671 = vsub.s32 %v2668, %v2670
    %v2672 = vrot.slane %v2650, %v2671
    %v2674 = vunpack.c.l.s4 1966171168
    %v2675 = vunpack.c.0.s8 %v2674
    %v2676 = vlaneseq
    %v2677 = vshrl.u32 %v2676, 7
    %v2678 = vsub.s32 %v2675, %v2677
    %v2679 = vrot.slane %v2651, %v2678
    %v2680 = vcombine.high %v2658, %v2658
    %v2681 = vcombine.high %v2665, %v2665
    %v2682 = vcombine.high %v2672, %v2672
    %v2683 = vcombine.high %v2679, %v2679
    %v2684 = vcombine.low %v2486, %v2488
    %v2685 = vcombine.high %v2486, %v2488
    %v2687 = vunpack.c.l.s4 1966171168
    %v2688 = vunpack.c.0.s8 %v2687
    %v2689 = vlaneseq
    %v2690 = vshrl.u32 %v2689, 7
    %v2691 = vsub.s32 %v2688, %v2690
    %v2692 = vrot.slane %v2684, %v2691
    %v2694 = vunpack.c.l.s4 1966171168
    %v2695 = vunpack.c.0.s8 %v2694
    %v2696 = vlaneseq
    %v2697 = vshrl.u32 %v2696, 7
    %v2698 = vsub.s32 %v2695, %v2697
    %v2699 = vrot.slane %v2685, %v2698
    %v2700 = vcombine.high %v2692, %v2692
    %v2701 = vcombine.high %v2699, %v2699
    %v2703 = vunpack.c.l.s4 1966171168
    %v2704 = vunpack.c.0.s8 %v2703
    %v2705 = vlaneseq
    %v2706 = vshrl.u32 %v2705, 7
    %v2707 = vsub.s32 %v2704, %v2706
    %v2708 = vrot.slane %v2692, %v2707
    %v2710 = vunpack.c.l.s4 1966171168
    %v2711 = vunpack.c.0.s8 %v2710
    %v2712 = vlaneseq
    %v2713 = vshrl.u32 %v2712, 7
    %v2714 = vsub.s32 %v2711, %v2713
    %v2715 = vrot.slane %v2699, %v2714
    %v2717 = vunpack.c.l.s4 1966171168
    %v2718 = vunpack.c.0.s8 %v2717
    %v2719 = vlaneseq
    %v2720 = vshrl.u32 %v2719, 7
    %v2721 = vsub.s32 %v2718, %v2720
    %v2722 = vrot.slane %v2700, %v2721
    %v2724 = vunpack.c.l.s4 1966171168
    %v2725 = vunpack.c.0.s8 %v2724
    %v2726 = vlaneseq
    %v2727 = vshrl.u32 %v2726, 7
    %v2728 = vsub.s32 %v2725, %v2727
    %v2729 = vrot.slane %v2701, %v2728
    %v2730 = vcombine.high %v2708, %v2708
    %v2731 = vcombine.high %v2715, %v2715
    %v2732 = vcombine.high %v2722, %v2722
    %v2733 = vcombine.high %v2729, %v2729
    %v2734 = vcombine.low %v2492, %v2494
    %v2735 = vcombine.high %v2492, %v2494
    %v2737 = vunpack.c.l.s4 1966171168
    %v2738 = vunpack.c.0.s8 %v2737
    %v2739 = vlaneseq
    %v2740 = vshrl.u32 %v2739, 7
    %v2741 = vsub.s32 %v2738, %v2740
    %v2742 = vrot.slane %v2734, %v2741
    %v2744 = vunpack.c.l.s4 1966171168
    %v2745 = vunpack.c.0.s8 %v2744
    %v2746 = vlaneseq
    %v2747 = vshrl.u32 %v2746, 7
    %v2748 = vsub.s32 %v2745, %v2747
    %v2749 = vrot.slane %v2735, %v2748
    %v2750 = vcombine.high %v2742, %v2742
    %v2751 = vcombine.high %v2749, %v2749
    %v2753 = vunpack.c.l.s4 1966171168
    %v2754 = vunpack.c.0.s8 %v2753
    %v2755 = vlaneseq
    %v2756 = vshrl.u32 %v2755, 7
    %v2757 = vsub.s32 %v2754, %v2756
    %v2758 = vrot.slane %v2742, %v2757
    %v2760 = vunpack.c.l.s4 1966171168
    %v2761 = vunpack.c.0.s8 %v2760
    %v2762 = vlaneseq
    %v2763 = vshrl.u32 %v2762, 7
    %v2764 = vsub.s32 %v2761, %v2763
    %v2765 = vrot.slane %v2749, %v2764
    %v2767 = vunpack.c.l.s4 1966171168
    %v2768 = vunpack.c.0.s8 %v2767
    %v2769 = vlaneseq
    %v2770 = vshrl.u32 %v2769, 7
    %v2771 = vsub.s32 %v2768, %v2770
    %v2772 = vrot.slane %v2750, %v2771
    %v2774 = vunpack.c.l.s4 1966171168
    %v2775 = vunpack.c.0.s8 %v2774
    %v2776 = vlaneseq
    %v2777 = vshrl.u32 %v2776, 7
    %v2778 = vsub.s32 %v2775, %v2777
    %v2779 = vrot.slane %v2751, %v2778
    %v2780 = vcombine.high %v2758, %v2758
    %v2781 = vcombine.high %v2765, %v2765
    %v2782 = vcombine.high %v2772, %v2772
    %v2783 = vcombine.high %v2779, %v2779
    %v2784 = vcombine.low %v2498, %v2500
    %v2785 = vcombine.high %v2498, %v2500
    %v2787 = vunpack.c.l.s4 1966171168
    %v2788 = vunpack.c.0.s8 %v2787
    %v2789 = vlaneseq
    %v2790 = vshrl.u32 %v2789, 7
    %v2791 = vsub.s32 %v2788, %v2790
    %v2792 = vrot.slane %v2784, %v2791
    %v2794 = vunpack.c.l.s4 1966171168
    %v2795 = vunpack.c.0.s8 %v2794
    %v2796 = vlaneseq
    %v2797 = vshrl.u32 %v2796, 7
    %v2798 = vsub.s32 %v2795, %v2797
    %v2799 = vrot.slane %v2785, %v2798
    %v2800 = vcombine.high %v2792, %v2792
    %v2801 = vcombine.high %v2799, %v2799
    %v2803 = vunpack.c.l.s4 1966171168
    %v2804 = vunpack.c.0.s8 %v2803
    %v2805 = vlaneseq
    %v2806 = vshrl.u32 %v2805, 7
    %v2807 = vsub.s32 %v2804, %v2806
    %v2808 = vrot.slane %v2792, %v2807
    %v2810 = vunpack.c.l.s4 1966171168
    %v2811 = vunpack.c.0.s8 %v2810
    %v2812 = vlaneseq
    %v2813 = vshrl.u32 %v2812, 7
    %v2814 = vsub.s32 %v2811, %v2813
    %v2815 = vrot.slane %v2799, %v2814
    %v2817 = vunpack.c.l.s4 1966171168
    %v2818 = vunpack.c.0.s8 %v2817
    %v2819 = vlaneseq
    %v2820 = vshrl.u32 %v2819, 7
    %v2821 = vsub.s32 %v2818, %v2820
    %v2822 = vrot.slane %v2800, %v2821
    %v2824 = vunpack.c.l.s4 1966171168
    %v2825 = vunpack.c.0.s8 %v2824
    %v2826 = vlaneseq
    %v2827 = vshrl.u32 %v2826, 7
    %v2828 = vsub.s32 %v2825, %v2827
    %v2829 = vrot.slane %v2801, %v2828
    %v2830 = vcombine.high %v2808, %v2808
    %v2831 = vcombine.high %v2815, %v2815
    %v2832 = vcombine.high %v2822, %v2822
    %v2833 = vcombine.high %v2829, %v2829
    %v2834 = vcombine.low %v2504, %v2506
    %v2835 = vcombine.high %v2504, %v2506
    %v2837 = vunpack.c.l.s4 1966171168
    %v2838 = vunpack.c.0.s8 %v2837
    %v2839 = vlaneseq
    %v2840 = vshrl.u32 %v2839, 7
    %v2841 = vsub.s32 %v2838, %v2840
    %v2842 = vrot.slane %v2834, %v2841
    %v2844 = vunpack.c.l.s4 1966171168
    %v2845 = vunpack.c.0.s8 %v2844
    %v2846 = vlaneseq
    %v2847 = vshrl.u32 %v2846, 7
    %v2848 = vsub.s32 %v2845, %v2847
    %v2849 = vrot.slane %v2835, %v2848
    %v2850 = vcombine.high %v2842, %v2842
    %v2851 = vcombine.high %v2849, %v2849
    %v2853 = vunpack.c.l.s4 1966171168
    %v2854 = vunpack.c.0.s8 %v2853
    %v2855 = vlaneseq
    %v2856 = vshrl.u32 %v2855, 7
    %v2857 = vsub.s32 %v2854, %v2856
    %v2858 = vrot.slane %v2842, %v2857
    %v2860 = vunpack.c.l.s4 1966171168
    %v2861 = vunpack.c.0.s8 %v2860
    %v2862 = vlaneseq
    %v2863 = vshrl.u32 %v2862, 7
    %v2864 = vsub.s32 %v2861, %v2863
    %v2865 = vrot.slane %v2849, %v2864
    %v2867 = vunpack.c.l.s4 1966171168
    %v2868 = vunpack.c.0.s8 %v2867
    %v2869 = vlaneseq
    %v2870 = vshrl.u32 %v2869, 7
    %v2871 = vsub.s32 %v2868, %v2870
    %v2872 = vrot.slane %v2850, %v2871
    %v2874 = vunpack.c.l.s4 1966171168
    %v2875 = vunpack.c.0.s8 %v2874
    %v2876 = vlaneseq
    %v2877 = vshrl.u32 %v2876, 7
    %v2878 = vsub.s32 %v2875, %v2877
    %v2879 = vrot.slane %v2851, %v2878
    %v2880 = vcombine.high %v2858, %v2858
    %v2881 = vcombine.high %v2865, %v2865
    %v2882 = vcombine.high %v2872, %v2872
    %v2883 = vcombine.high %v2879, %v2879
    %v2884 = vcombine.low %v2510, %v2512
    %v2885 = vcombine.high %v2510, %v2512
    %v2887 = vunpack.c.l.s4 1966171168
    %v2888 = vunpack.c.0.s8 %v2887
    %v2889 = vlaneseq
    %v2890 = vshrl.u32 %v2889, 7
    %v2891 = vsub.s32 %v2888, %v2890
    %v2892 = vrot.slane %v2884, %v2891
    %v2894 = vunpack.c.l.s4 1966171168
    %v2895 = vunpack.c.0.s8 %v2894
    %v2896 = vlaneseq
    %v2897 = vshrl.u32 %v2896, 7
    %v2898 = vsub.s32 %v2895, %v2897
    %v2899 = vrot.slane %v2885, %v2898
    %v2900 = vcombine.high %v2892, %v2892
    %v2901 = vcombine.high %v2899, %v2899
    %v2903 = vunpack.c.l.s4 1966171168
    %v2904 = vunpack.c.0.s8 %v2903
    %v2905 = vlaneseq
    %v2906 = vshrl.u32 %v2905, 7
    %v2907 = vsub.s32 %v2904, %v2906
    %v2908 = vrot.slane %v2892, %v2907
    %v2910 = vunpack.c.l.s4 1966171168
    %v2911 = vunpack.c.0.s8 %v2910
    %v2912 = vlaneseq
    %v2913 = vshrl.u32 %v2912, 7
    %v2914 = vsub.s32 %v2911, %v2913
    %v2915 = vrot.slane %v2899, %v2914
    %v2917 = vunpack.c.l.s4 1966171168
    %v2918 = vunpack.c.0.s8 %v2917
    %v2919 = vlaneseq
    %v2920 = vshrl.u32 %v2919, 7
    %v2921 = vsub.s32 %v2918, %v2920
    %v2922 = vrot.slane %v2900, %v2921
    %v2924 = vunpack.c.l.s4 1966171168
    %v2925 = vunpack.c.0.s8 %v2924
    %v2926 = vlaneseq
    %v2927 = vshrl.u32 %v2926, 7
    %v2928 = vsub.s32 %v2925, %v2927
    %v2929 = vrot.slane %v2901, %v2928
    %v2930 = vcombine.high %v2908, %v2908
    %v2931 = vcombine.high %v2915, %v2915
    %v2932 = vcombine.high %v2922, %v2922
    %v2933 = vcombine.high %v2929, %v2929
    %v2934 = vcombine.low %v2516, %v2518
    %v2935 = vcombine.high %v2516, %v2518
    %v2937 = vunpack.c.l.s4 1966171168
    %v2938 = vunpack.c.0.s8 %v2937
    %v2939 = vlaneseq
    %v2940 = vshrl.u32 %v2939, 7
    %v2941 = vsub.s32 %v2938, %v2940
    %v2942 = vrot.slane %v2934, %v2941
    %v2944 = vunpack.c.l.s4 1966171168
    %v2945 = vunpack.c.0.s8 %v2944
    %v2946 = vlaneseq
    %v2947 = vshrl.u32 %v2946, 7
    %v2948 = vsub.s32 %v2945, %v2947
    %v2949 = vrot.slane %v2935, %v2948
    %v2950 = vcombine.high %v2942, %v2942
    %v2951 = vcombine.high %v2949, %v2949
    %v2953 = vunpack.c.l.s4 1966171168
    %v2954 = vunpack.c.0.s8 %v2953
    %v2955 = vlaneseq
    %v2956 = vshrl.u32 %v2955, 7
    %v2957 = vsub.s32 %v2954, %v2956
    %v2958 = vrot.slane %v2942, %v2957
    %v2960 = vunpack.c.l.s4 1966171168
    %v2961 = vunpack.c.0.s8 %v2960
    %v2962 = vlaneseq
    %v2963 = vshrl.u32 %v2962, 7
    %v2964 = vsub.s32 %v2961, %v2963
    %v2965 = vrot.slane %v2949, %v2964
    %v2967 = vunpack.c.l.s4 1966171168
    %v2968 = vunpack.c.0.s8 %v2967
    %v2969 = vlaneseq
    %v2970 = vshrl.u32 %v2969, 7
    %v2971 = vsub.s32 %v2968, %v2970
    %v2972 = vrot.slane %v2950, %v2971
    %v2974 = vunpack.c.l.s4 1966171168
    %v2975 = vunpack.c.0.s8 %v2974
    %v2976 = vlaneseq
    %v2977 = vshrl.u32 %v2976, 7
    %v2978 = vsub.s32 %v2975, %v2977
    %v2979 = vrot.slane %v2951, %v2978
    %v2980 = vcombine.high %v2958, %v2958
    %v2981 = vcombine.high %v2965, %v2965
    %v2982 = vcombine.high %v2972, %v2972
    %v2983 = vcombine.high %v2979, %v2979
    %v2984 = vcombine.low %v2522, %v2524
    %v2985 = vcombine.high %v2522, %v2524
    %v2987 = vunpack.c.l.s4 1966171168
    %v2988 = vunpack.c.0.s8 %v2987
    %v2989 = vlaneseq
    %v2990 = vshrl.u32 %v2989, 7
    %v2991 = vsub.s32 %v2988, %v2990
    %v2992 = vrot.slane %v2984, %v2991
    %v2994 = vunpack.c.l.s4 1966171168
    %v2995 = vunpack.c.0.s8 %v2994
    %v2996 = vlaneseq
    %v2997 = vshrl.u32 %v2996, 7
    %v2998 = vsub.s32 %v2995, %v2997
    %v2999 = vrot.slane %v2985, %v2998
    %v3000 = vcombine.high %v2992, %v2992
    %v3001 = vcombine.high %v2999, %v2999
    %v3003 = vunpack.c.l.s4 1966171168
    %v3004 = vunpack.c.0.s8 %v3003
    %v3005 = vlaneseq
    %v3006 = vshrl.u32 %v3005, 7
    %v3007 = vsub.s32 %v3004, %v3006
    %v3008 = vrot.slane %v2992, %v3007
    %v3010 = vunpack.c.l.s4 1966171168
    %v3011 = vunpack.c.0.s8 %v3010
    %v3012 = vlaneseq
    %v3013 = vshrl.u32 %v3012, 7
    %v3014 = vsub.s32 %v3011, %v3013
    %v3015 = vrot.slane %v2999, %v3014
    %v3017 = vunpack.c.l.s4 1966171168
    %v3018 = vunpack.c.0.s8 %v3017
    %v3019 = vlaneseq
    %v3020 = vshrl.u32 %v3019, 7
    %v3021 = vsub.s32 %v3018, %v3020
    %v3022 = vrot.slane %v3000, %v3021
    %v3024 = vunpack.c.l.s4 1966171168
    %v3025 = vunpack.c.0.s8 %v3024
    %v3026 = vlaneseq
    %v3027 = vshrl.u32 %v3026, 7
    %v3028 = vsub.s32 %v3025, %v3027
    %v3029 = vrot.slane %v3001, %v3028
    %v3030 = vcombine.high %v3008, %v3008
    %v3031 = vcombine.high %v3015, %v3015
    %v3032 = vcombine.high %v3022, %v3022
    %v3033 = vcombine.high %v3029, %v3029
    %v3034 = vcombine.low %v2528, %v2530
    %v3035 = vcombine.high %v2528, %v2530
    %v3037 = vunpack.c.l.s4 1966171168
    %v3038 = vunpack.c.0.s8 %v3037
    %v3039 = vlaneseq
    %v3040 = vshrl.u32 %v3039, 7
    %v3041 = vsub.s32 %v3038, %v3040
    %v3042 = vrot.slane %v3034, %v3041
    %v3044 = vunpack.c.l.s4 1966171168
    %v3045 = vunpack.c.0.s8 %v3044
    %v3046 = vlaneseq
    %v3047 = vshrl.u32 %v3046, 7
    %v3048 = vsub.s32 %v3045, %v3047
    %v3049 = vrot.slane %v3035, %v3048
    %v3050 = vcombine.high %v3042, %v3042
    %v3051 = vcombine.high %v3049, %v3049
    %v3053 = vunpack.c.l.s4 1966171168
    %v3054 = vunpack.c.0.s8 %v3053
    %v3055 = vlaneseq
    %v3056 = vshrl.u32 %v3055, 7
    %v3057 = vsub.s32 %v3054, %v3056
    %v3058 = vrot.slane %v3042, %v3057
    %v3060 = vunpack.c.l.s4 1966171168
    %v3061 = vunpack.c.0.s8 %v3060
    %v3062 = vlaneseq
    %v3063 = vshrl.u32 %v3062, 7
    %v3064 = vsub.s32 %v3061, %v3063
    %v3065 = vrot.slane %v3049, %v3064
    %v3067 = vunpack.c.l.s4 1966171168
    %v3068 = vunpack.c.0.s8 %v3067
    %v3069 = vlaneseq
    %v3070 = vshrl.u32 %v3069, 7
    %v3071 = vsub.s32 %v3068, %v3070
    %v3072 = vrot.slane %v3050, %v3071
    %v3074 = vunpack.c.l.s4 1966171168
    %v3075 = vunpack.c.0.s8 %v3074
    %v3076 = vlaneseq
    %v3077 = vshrl.u32 %v3076, 7
    %v3078 = vsub.s32 %v3075, %v3077
    %v3079 = vrot.slane %v3051, %v3078
    %v3080 = vcombine.high %v3058, %v3058
    %v3081 = vcombine.high %v3065, %v3065
    %v3082 = vcombine.high %v3072, %v3072
    %v3083 = vcombine.high %v3079, %v3079
    %v3084 = vcombine.low %v2534, %v2536
    %v3085 = vcombine.high %v2534, %v2536
    %v3087 = vunpack.c.l.s4 1966171168
    %v3088 = vunpack.c.0.s8 %v3087
    %v3089 = vlaneseq
    %v3090 = vshrl.u32 %v3089, 7
    %v3091 = vsub.s32 %v3088, %v3090
    %v3092 = vrot.slane %v3084, %v3091
    %v3094 = vunpack.c.l.s4 1966171168
    %v3095 = vunpack.c.0.s8 %v3094
    %v3096 = vlaneseq
    %v3097 = vshrl.u32 %v3096, 7
    %v3098 = vsub.s32 %v3095, %v3097
    %v3099 = vrot.slane %v3085, %v3098
    %v3100 = vcombine.high %v3092, %v3092
    %v3101 = vcombine.high %v3099, %v3099
    %v3103 = vunpack.c.l.s4 1966171168
    %v3104 = vunpack.c.0.s8 %v3103
    %v3105 = vlaneseq
    %v3106 = vshrl.u32 %v3105, 7
    %v3107 = vsub.s32 %v3104, %v3106
    %v3108 = vrot.slane %v3092, %v3107
    %v3110 = vunpack.c.l.s4 1966171168
    %v3111 = vunpack.c.0.s8 %v3110
    %v3112 = vlaneseq
    %v3113 = vshrl.u32 %v3112, 7
    %v3114 = vsub.s32 %v3111, %v3113
    %v3115 = vrot.slane %v3099, %v3114
    %v3117 = vunpack.c.l.s4 1966171168
    %v3118 = vunpack.c.0.s8 %v3117
    %v3119 = vlaneseq
    %v3120 = vshrl.u32 %v3119, 7
    %v3121 = vsub.s32 %v3118, %v3120
    %v3122 = vrot.slane %v3100, %v3121
    %v3124 = vunpack.c.l.s4 1966171168
    %v3125 = vunpack.c.0.s8 %v3124
    %v3126 = vlaneseq
    %v3127 = vshrl.u32 %v3126, 7
    %v3128 = vsub.s32 %v3125, %v3127
    %v3129 = vrot.slane %v3101, %v3128
    %v3130 = vcombine.high %v3108, %v3108
    %v3131 = vcombine.high %v3115, %v3115
    %v3132 = vcombine.high %v3122, %v3122
    %v3133 = vcombine.high %v3129, %v3129
    %v3134 = vcombine.low %v2540, %v2542
    %v3135 = vcombine.high %v2540, %v2542
    %v3137 = vunpack.c.l.s4 1966171168
    %v3138 = vunpack.c.0.s8 %v3137
    %v3139 = vlaneseq
    %v3140 = vshrl.u32 %v3139, 7
    %v3141 = vsub.s32 %v3138, %v3140
    %v3142 = vrot.slane %v3134, %v3141
    %v3144 = vunpack.c.l.s4 1966171168
    %v3145 = vunpack.c.0.s8 %v3144
    %v3146 = vlaneseq
    %v3147 = vshrl.u32 %v3146, 7
    %v3148 = vsub.s32 %v3145, %v3147
    %v3149 = vrot.slane %v3135, %v3148
    %v3150 = vcombine.high %v3142, %v3142
    %v3151 = vcombine.high %v3149, %v3149
    %v3153 = vunpack.c.l.s4 1966171168
    %v3154 = vunpack.c.0.s8 %v3153
    %v3155 = vlaneseq
    %v3156 = vshrl.u32 %v3155, 7
    %v3157 = vsub.s32 %v3154, %v3156
    %v3158 = vrot.slane %v3142, %v3157
    %v3160 = vunpack.c.l.s4 1966171168
    %v3161 = vunpack.c.0.s8 %v3160
    %v3162 = vlaneseq
    %v3163 = vshrl.u32 %v3162, 7
    %v3164 = vsub.s32 %v3161, %v3163
    %v3165 = vrot.slane %v3149, %v3164
    %v3167 = vunpack.c.l.s4 1966171168
    %v3168 = vunpack.c.0.s8 %v3167
    %v3169 = vlaneseq
    %v3170 = vshrl.u32 %v3169, 7
    %v3171 = vsub.s32 %v3168, %v3170
    %v3172 = vrot.slane %v3150, %v3171
    %v3174 = vunpack.c.l.s4 1966171168
    %v3175 = vunpack.c.0.s8 %v3174
    %v3176 = vlaneseq
    %v3177 = vshrl.u32 %v3176, 7
    %v3178 = vsub.s32 %v3175, %v3177
    %v3179 = vrot.slane %v3151, %v3178
    %v3180 = vcombine.high %v3158, %v3158
    %v3181 = vcombine.high %v3165, %v3165
    %v3182 = vcombine.high %v3172, %v3172
    %v3183 = vcombine.high %v3179, %v3179
    %v3184 = vcombine.low %v2546, %v2548
    %v3185 = vcombine.high %v2546, %v2548
    %v3187 = vunpack.c.l.s4 1966171168
    %v3188 = vunpack.c.0.s8 %v3187
    %v3189 = vlaneseq
    %v3190 = vshrl.u32 %v3189, 7
    %v3191 = vsub.s32 %v3188, %v3190
    %v3192 = vrot.slane %v3184, %v3191
    %v3194 = vunpack.c.l.s4 1966171168
    %v3195 = vunpack.c.0.s8 %v3194
    %v3196 = vlaneseq
    %v3197 = vshrl.u32 %v3196, 7
    %v3198 = vsub.s32 %v3195, %v3197
    %v3199 = vrot.slane %v3185, %v3198
    %v3200 = vcombine.high %v3192, %v3192
    %v3201 = vcombine.high %v3199, %v3199
    %v3203 = vunpack.c.l.s4 1966171168
    %v3204 = vunpack.c.0.s8 %v3203
    %v3205 = vlaneseq
    %v3206 = vshrl.u32 %v3205, 7
    %v3207 = vsub.s32 %v3204, %v3206
    %v3208 = vrot.slane %v3192, %v3207
    %v3210 = vunpack.c.l.s4 1966171168
    %v3211 = vunpack.c.0.s8 %v3210
    %v3212 = vlaneseq
    %v3213 = vshrl.u32 %v3212, 7
    %v3214 = vsub.s32 %v3211, %v3213
    %v3215 = vrot.slane %v3199, %v3214
    %v3217 = vunpack.c.l.s4 1966171168
    %v3218 = vunpack.c.0.s8 %v3217
    %v3219 = vlaneseq
    %v3220 = vshrl.u32 %v3219, 7
    %v3221 = vsub.s32 %v3218, %v3220
    %v3222 = vrot.slane %v3200, %v3221
    %v3224 = vunpack.c.l.s4 1966171168
    %v3225 = vunpack.c.0.s8 %v3224
    %v3226 = vlaneseq
    %v3227 = vshrl.u32 %v3226, 7
    %v3228 = vsub.s32 %v3225, %v3227
    %v3229 = vrot.slane %v3201, %v3228
    %v3230 = vcombine.high %v3208, %v3208
    %v3231 = vcombine.high %v3215, %v3215
    %v3232 = vcombine.high %v3222, %v3222
    %v3233 = vcombine.high %v3229, %v3229
    %v3234 = vcombine.low %v2552, %v2554
    %v3236 = vunpack.c.l.s4 1966171168
    %v3237 = vunpack.c.0.s8 %v3236
    %v3238 = vlaneseq
    %v3239 = vshrl.u32 %v3238, 7
    %v3240 = vsub.s32 %v3237, %v3239
    %v3241 = vrot.slane %v3234, %v3240
    %v3242 = vcombine.high %v3241, %v3241
    %v3244 = vunpack.c.l.s4 1966171168
    %v3245 = vunpack.c.0.s8 %v3244
    %v3246 = vlaneseq
    %v3247 = vshrl.u32 %v3246, 7
    %v3248 = vsub.s32 %v3245, %v3247
    %v3249 = vrot.slane %v3241, %v3248
    %v3251 = vunpack.c.l.s4 1966171168
    %v3252 = vunpack.c.0.s8 %v3251
    %v3253 = vlaneseq
    %v3254 = vshrl.u32 %v3253, 7
    %v3255 = vsub.s32 %v3252, %v3254
    %v3256 = vrot.slane %v3242, %v3255
    %v3363 = vmax.f32 %v2608, 0.0
    %v3364 = vmax.f32 %v2622, 0.0
    %v3365 = vmax.f32 %v2630, 0.0
    %v3366 = vmax.f32 %v2632, 0.0
    %v3367 = vmax.f32 %v2615, 0.0
    %v3368 = vmax.f32 %v2629, 0.0
    %v3369 = vmax.f32 %v2631, 0.0
    %v3370 = vmax.f32 %v2633, 0.0
    %v3371 = vmax.f32 %v2658, 0.0
    %v3372 = vmax.f32 %v2672, 0.0
    %v3373 = vmax.f32 %v2680, 0.0
    %v3374 = vmax.f32 %v2682, 0.0
    %v3375 = vmax.f32 %v2665, 0.0
    %v3376 = vmax.f32 %v2679, 0.0
    %v3377 = vmax.f32 %v2681, 0.0
    %v3378 = vmax.f32 %v2683, 0.0
    %v3379 = vmax.f32 %v2708, 0.0
    %v3380 = vmax.f32 %v2722, 0.0
    %v3381 = vmax.f32 %v2730, 0.0
    %v3382 = vmax.f32 %v2732, 0.0
    %v3383 = vmax.f32 %v2715, 0.0
    %v3384 = vmax.f32 %v2729, 0.0
    %v3385 = vmax.f32 %v2731, 0.0
    %v3386 = vmax.f32 %v2733, 0.0
    %v3387 = vmax.f32 %v2758, 0.0
    %v3388 = vmax.f32 %v2772, 0.0
    %v3389 = vmax.f32 %v2780, 0.0
    %v3390 = vmax.f32 %v2782, 0.0
    %v3391 = vmax.f32 %v2765, 0.0
    %v3392 = vmax.f32 %v2779, 0.0
    %v3393 = vmax.f32 %v2781, 0.0
    %v3394 = vmax.f32 %v2783, 0.0
    %v3395 = vmax.f32 %v2808, 0.0
    %v3396 = vmax.f32 %v2822, 0.0
    %v3397 = vmax.f32 %v2830, 0.0
    %v3398 = vmax.f32 %v2832, 0.0
    %v3399 = vmax.f32 %v2815, 0.0
    %v3400 = vmax.f32 %v2829, 0.0
    %v3401 = vmax.f32 %v2831, 0.0
    %v3402 = vmax.f32 %v2833, 0.0
    %v3403 = vmax.f32 %v2858, 0.0
    %v3404 = vmax.f32 %v2872, 0.0
    %v3405 = vmax.f32 %v2880, 0.0
    %v3406 = vmax.f32 %v2882, 0.0
    %v3407 = vmax.f32 %v2865, 0.0
    %v3408 = vmax.f32 %v2879, 0.0
    %v3409 = vmax.f32 %v2881, 0.0
    %v3410 = vmax.f32 %v2883, 0.0
    %v3411 = vmax.f32 %v2908, 0.0
    %v3412 = vmax.f32 %v2922, 0.0
    %v3413 = vmax.f32 %v2930, 0.0
    %v3414 = vmax.f32 %v2932, 0.0
    %v3415 = vmax.f32 %v2915, 0.0
    %v3416 = vmax.f32 %v2929, 0.0
    %v3417 = vmax.f32 %v2931, 0.0
    %v3418 = vmax.f32 %v2933, 0.0
    %v3419 = vmax.f32 %v2958, 0.0
    %v3420 = vmax.f32 %v2972, 0.0
    %v3421 = vmax.f32 %v2980, 0.0
    %v3422 = vmax.f32 %v2982, 0.0
    %v3423 = vmax.f32 %v2965, 0.0
    %v3424 = vmax.f32 %v2979, 0.0
    %v3425 = vmax.f32 %v2981, 0.0
    %v3426 = vmax.f32 %v2983, 0.0
    %v3427 = vmax.f32 %v3008, 0.0
    %v3428 = vmax.f32 %v3022, 0.0
    %v3429 = vmax.f32 %v3030, 0.0
    %v3430 = vmax.f32 %v3032, 0.0
    %v3431 = vmax.f32 %v3015, 0.0
    %v3432 = vmax.f32 %v3029, 0.0
    %v3433 = vmax.f32 %v3031, 0.0
    %v3434 = vmax.f32 %v3033, 0.0
    %v3435 = vmax.f32 %v3058, 0.0
    %v3436 = vmax.f32 %v3072, 0.0
    %v3437 = vmax.f32 %v3080, 0.0
    %v3438 = vmax.f32 %v3082, 0.0
    %v3439 = vmax.f32 %v3065, 0.0
    %v3440 = vmax.f32 %v3079, 0.0
    %v3441 = vmax.f32 %v3081, 0.0
    %v3442 = vmax.f32 %v3083, 0.0
    %v3443 = vmax.f32 %v3108, 0.0
    %v3444 = vmax.f32 %v3122, 0.0
    %v3445 = vmax.f32 %v3130, 0.0
    %v3446 = vmax.f32 %v3132, 0.0
    %v3447 = vmax.f32 %v3115, 0.0
    %v3448 = vmax.f32 %v3129, 0.0
    %v3449 = vmax.f32 %v3131, 0.0
    %v3450 = vmax.f32 %v3133, 0.0
    %v3451 = vmax.f32 %v3158, 0.0
    %v3452 = vmax.f32 %v3172, 0.0
    %v3453 = vmax.f32 %v3180, 0.0
    %v3454 = vmax.f32 %v3182, 0.0
    %v3455 = vmax.f32 %v3165, 0.0
    %v3456 = vmax.f32 %v3179, 0.0
    %v3457 = vmax.f32 %v3181, 0.0
    %v3458 = vmax.f32 %v3183, 0.0
    %v3459 = vmax.f32 %v3208, 0.0
    %v3460 = vmax.f32 %v3222, 0.0
    %v3461 = vmax.f32 %v3230, 0.0
    %v3462 = vmax.f32 %v3232, 0.0
    %v3463 = vmax.f32 %v3215, 0.0
    %v3464 = vmax.f32 %v3229, 0.0
    %v3465 = vmax.f32 %v3231, 0.0
    %v3466 = vmax.f32 %v3233, 0.0
    %v3467 = vmax.f32 %v3249, 0.0
    %v3468 = vmax.f32 %v3256, 0.0
    %v3469 = vld [vmem:[#allocation11] sm:$0xff]
    %v3470 = vld [vmem:[#allocation11 + $0x8] sm:$0xff]
    %v3471 = vld [vmem:[#allocation11 + $0x10] sm:$0xff]
    %v3472 = vld [vmem:[#allocation11 + $0x18] sm:$0xff]
    %v3473 = vld [vmem:[#allocation11 + $0x20] sm:$0xff]
    %v3474 = vld [vmem:[#allocation11 + $0x28] sm:$0xff]
    %v3475 = vld [vmem:[#allocation11 + $0x30] sm:$0xff]
    %v3476 = vld [vmem:[#allocation11 + $0x38] sm:$0xff]
    %v3477 = vld [vmem:[#allocation11 + $0x40] sm:$0xff]
    %v3478 = vld [vmem:[#allocation11 + $0x48] sm:$0xff]
    %v3479 = vld [vmem:[#allocation11 + $0x50] sm:$0xff]
    %v3480 = vld [vmem:[#allocation11 + $0x58] sm:$0xff]
    %v3481 = vld [vmem:[#allocation11 + $0x60] sm:$0xff]
    %v3482 = vld [vmem:[#allocation11 + $0x68] sm:$0xff]
    %v3483 = vld [vmem:[#allocation11 + $0x70] sm:$0xff]
    %v3484 = vld [vmem:[#allocation11 + $0x78] sm:$0xff]
    %v3485 = vld [vmem:[#allocation11 + $0x80] sm:$0xff]
    %v3486 = vld [vmem:[#allocation11 + $0x88] sm:$0xff]
    %v3487 = vld [vmem:[#allocation11 + $0x90] sm:$0xff]
    %v3488 = vld [vmem:[#allocation11 + $0x98] sm:$0xff]
    %v3489 = vld [vmem:[#allocation12] sm:$0x1]
    %v3491 = vlaneseq
    %v3492 = vshrl.u32 %v3491, 7
    %v3493 = vsub.s32 0, %v3492
    %v3494 = vrot.slane %v3489, %v3493
    %v3495 = vcombine.high %v3494, %v3494
    %v3497 = vunpack.c.l.s4 1966171168
    %v3498 = vunpack.c.0.s8 %v3497
    %v3499 = vlaneseq
    %v3500 = vshrl.u32 %v3499, 7
    %v3501 = vsub.s32 %v3498, %v3500
    %v3502 = vrot.slane %v3494, %v3501
    %v3504 = vunpack.c.l.s4 1966171168
    %v3505 = vunpack.c.0.s8 %v3504
    %v3506 = vlaneseq
    %v3507 = vshrl.u32 %v3506, 7
    %v3508 = vsub.s32 %v3505, %v3507
    %v3509 = vrot.slane %v3495, %v3508
    %v3510 = vcombine.high %v3502, %v3502
    %v3511 = vcombine.high %v3509, %v3509
    %v3513 = vunpack.c.l.s4 1966171168
    %v3514 = vunpack.c.0.s8 %v3513
    %v3515 = vlaneseq
    %v3516 = vshrl.u32 %v3515, 7
    %v3517 = vsub.s32 %v3514, %v3516
    %v3518 = vrot.slane %v3502, %v3517
    %v3520 = vunpack.c.l.s4 1966171168
    %v3521 = vunpack.c.0.s8 %v3520
    %v3522 = vlaneseq
    %v3523 = vshrl.u32 %v3522, 7
    %v3524 = vsub.s32 %v3521, %v3523
    %v3525 = vrot.slane %v3509, %v3524
    %v3527 = vunpack.c.l.s4 1966171168
    %v3528 = vunpack.c.0.s8 %v3527
    %v3529 = vlaneseq
    %v3530 = vshrl.u32 %v3529, 7
    %v3531 = vsub.s32 %v3528, %v3530
    %v3532 = vrot.slane %v3510, %v3531
    %v3534 = vunpack.c.l.s4 1966171168
    %v3535 = vunpack.c.0.s8 %v3534
    %v3536 = vlaneseq
    %v3537 = vshrl.u32 %v3536, 7
    %v3538 = vsub.s32 %v3535, %v3537
    %v3539 = vrot.slane %v3511, %v3538
    %v3540 = vcombine.high %v3518, %v3518
    %v3541 = vcombine.high %v3525, %v3525
    %v3542 = vcombine.high %v3532, %v3532
    %v3543 = vcombine.high %v3539, %v3539
    %v3650 = vcombine.low %v3363, %v3364
    %v3651 = vcombine.low %v3365, %v3366
    %v3652 = vcombine.low %v3367, %v3368
    %v3653 = vcombine.low %v3369, %v3370
    %v3655 = vunpack.c.l.s4 1966171168
    %v3656 = vunpack.c.0.s8 %v3655
    %v3657 = vlaneseq
    %v3658 = vshrl.u32 %v3657, 7
    %v3659 = vsub.s32 %v3656, %v3658
    %v3660 = vrot.slane %v3650, %v3659
    %v3662 = vunpack.c.l.s4 1966171168
    %v3663 = vunpack.c.0.s8 %v3662
    %v3664 = vlaneseq
    %v3665 = vshrl.u32 %v3664, 7
    %v3666 = vsub.s32 %v3663, %v3665
    %v3667 = vrot.slane %v3651, %v3666
    %v3669 = vunpack.c.l.s4 1966171168
    %v3670 = vunpack.c.0.s8 %v3669
    %v3671 = vlaneseq
    %v3672 = vshrl.u32 %v3671, 7
    %v3673 = vsub.s32 %v3670, %v3672
    %v3674 = vrot.slane %v3652, %v3673
    %v3676 = vunpack.c.l.s4 1966171168
    %v3677 = vunpack.c.0.s8 %v3676
    %v3678 = vlaneseq
    %v3679 = vshrl.u32 %v3678, 7
    %v3680 = vsub.s32 %v3677, %v3679
    %v3681 = vrot.slane %v3653, %v3680
    %v3682 = vcombine.low %v3660, %v3667
    %v3683 = vcombine.high %v3660, %v3667
    %v3684 = vcombine.low %v3674, %v3681
    %v3685 = vcombine.high %v3674, %v3681
    %v3687 = vunpack.c.l.s4 1966171168
    %v3688 = vunpack.c.0.s8 %v3687
    %v3689 = vlaneseq
    %v3690 = vshrl.u32 %v3689, 7
    %v3691 = vsub.s32 %v3688, %v3690
    %v3692 = vrot.slane %v3682, %v3691
    %v3694 = vunpack.c.l.s4 1966171168
    %v3695 = vunpack.c.0.s8 %v3694
    %v3696 = vlaneseq
    %v3697 = vshrl.u32 %v3696, 7
    %v3698 = vsub.s32 %v3695, %v3697
    %v3699 = vrot.slane %v3683, %v3698
    %v3701 = vunpack.c.l.s4 1966171168
    %v3702 = vunpack.c.0.s8 %v3701
    %v3703 = vlaneseq
    %v3704 = vshrl.u32 %v3703, 7
    %v3705 = vsub.s32 %v3702, %v3704
    %v3706 = vrot.slane %v3684, %v3705
    %v3708 = vunpack.c.l.s4 1966171168
    %v3709 = vunpack.c.0.s8 %v3708
    %v3710 = vlaneseq
    %v3711 = vshrl.u32 %v3710, 7
    %v3712 = vsub.s32 %v3709, %v3711
    %v3713 = vrot.slane %v3685, %v3712
    %v3714 = vcombine.low %v3692, %v3706
    %v3715 = vcombine.low %v3699, %v3713
    %v3716 = vcombine.low %v3371, %v3372
    %v3717 = vcombine.low %v3373, %v3374
    %v3718 = vcombine.low %v3375, %v3376
    %v3719 = vcombine.low %v3377, %v3378
    %v3721 = vunpack.c.l.s4 1966171168
    %v3722 = vunpack.c.0.s8 %v3721
    %v3723 = vlaneseq
    %v3724 = vshrl.u32 %v3723, 7
    %v3725 = vsub.s32 %v3722, %v3724
    %v3726 = vrot.slane %v3716, %v3725
    %v3728 = vunpack.c.l.s4 1966171168
    %v3729 = vunpack.c.0.s8 %v3728
    %v3730 = vlaneseq
    %v3731 = vshrl.u32 %v3730, 7
    %v3732 = vsub.s32 %v3729, %v3731
    %v3733 = vrot.slane %v3717, %v3732
    %v3735 = vunpack.c.l.s4 1966171168
    %v3736 = vunpack.c.0.s8 %v3735
    %v3737 = vlaneseq
    %v3738 = vshrl.u32 %v3737, 7
    %v3739 = vsub.s32 %v3736, %v3738
    %v3740 = vrot.slane %v3718, %v3739
    %v3742 = vunpack.c.l.s4 1966171168
    %v3743 = vunpack.c.0.s8 %v3742
    %v3744 = vlaneseq
    %v3745 = vshrl.u32 %v3744, 7
    %v3746 = vsub.s32 %v3743, %v3745
    %v3747 = vrot.slane %v3719, %v3746
    %v3748 = vcombine.low %v3726, %v3733
    %v3749 = vcombine.high %v3726, %v3733
    %v3750 = vcombine.low %v3740, %v3747
    %v3751 = vcombine.high %v3740, %v3747
    %v3753 = vunpack.c.l.s4 1966171168
    %v3754 = vunpack.c.0.s8 %v3753
    %v3755 = vlaneseq
    %v3756 = vshrl.u32 %v3755, 7
    %v3757 = vsub.s32 %v3754, %v3756
    %v3758 = vrot.slane %v3748, %v3757
    %v3760 = vunpack.c.l.s4 1966171168
    %v3761 = vunpack.c.0.s8 %v3760
    %v3762 = vlaneseq
    %v3763 = vshrl.u32 %v3762, 7
    %v3764 = vsub.s32 %v3761, %v3763
    %v3765 = vrot.slane %v3749, %v3764
    %v3767 = vunpack.c.l.s4 1966171168
    %v3768 = vunpack.c.0.s8 %v3767
    %v3769 = vlaneseq
    %v3770 = vshrl.u32 %v3769, 7
    %v3771 = vsub.s32 %v3768, %v3770
    %v3772 = vrot.slane %v3750, %v3771
    %v3774 = vunpack.c.l.s4 1966171168
    %v3775 = vunpack.c.0.s8 %v3774
    %v3776 = vlaneseq
    %v3777 = vshrl.u32 %v3776, 7
    %v3778 = vsub.s32 %v3775, %v3777
    %v3779 = vrot.slane %v3751, %v3778
    %v3780 = vcombine.low %v3758, %v3772
    %v3781 = vcombine.low %v3765, %v3779
    %v3782 = vcombine.low %v3379, %v3380
    %v3783 = vcombine.low %v3381, %v3382
    %v3784 = vcombine.low %v3383, %v3384
    %v3785 = vcombine.low %v3385, %v3386
    %v3787 = vunpack.c.l.s4 1966171168
    %v3788 = vunpack.c.0.s8 %v3787
    %v3789 = vlaneseq
    %v3790 = vshrl.u32 %v3789, 7
    %v3791 = vsub.s32 %v3788, %v3790
    %v3792 = vrot.slane %v3782, %v3791
    %v3794 = vunpack.c.l.s4 1966171168
    %v3795 = vunpack.c.0.s8 %v3794
    %v3796 = vlaneseq
    %v3797 = vshrl.u32 %v3796, 7
    %v3798 = vsub.s32 %v3795, %v3797
    %v3799 = vrot.slane %v3783, %v3798
    %v3801 = vunpack.c.l.s4 1966171168
    %v3802 = vunpack.c.0.s8 %v3801
    %v3803 = vlaneseq
    %v3804 = vshrl.u32 %v3803, 7
    %v3805 = vsub.s32 %v3802, %v3804
    %v3806 = vrot.slane %v3784, %v3805
    %v3808 = vunpack.c.l.s4 1966171168
    %v3809 = vunpack.c.0.s8 %v3808
    %v3810 = vlaneseq
    %v3811 = vshrl.u32 %v3810, 7
    %v3812 = vsub.s32 %v3809, %v3811
    %v3813 = vrot.slane %v3785, %v3812
    %v3814 = vcombine.low %v3792, %v3799
    %v3815 = vcombine.high %v3792, %v3799
    %v3816 = vcombine.low %v3806, %v3813
    %v3817 = vcombine.high %v3806, %v3813
    %v3819 = vunpack.c.l.s4 1966171168
    %v3820 = vunpack.c.0.s8 %v3819
    %v3821 = vlaneseq
    %v3822 = vshrl.u32 %v3821, 7
    %v3823 = vsub.s32 %v3820, %v3822
    %v3824 = vrot.slane %v3814, %v3823
    %v3826 = vunpack.c.l.s4 1966171168
    %v3827 = vunpack.c.0.s8 %v3826
    %v3828 = vlaneseq
    %v3829 = vshrl.u32 %v3828, 7
    %v3830 = vsub.s32 %v3827, %v3829
    %v3831 = vrot.slane %v3815, %v3830
    %v3833 = vunpack.c.l.s4 1966171168
    %v3834 = vunpack.c.0.s8 %v3833
    %v3835 = vlaneseq
    %v3836 = vshrl.u32 %v3835, 7
    %v3837 = vsub.s32 %v3834, %v3836
    %v3838 = vrot.slane %v3816, %v3837
    %v3840 = vunpack.c.l.s4 1966171168
    %v3841 = vunpack.c.0.s8 %v3840
    %v3842 = vlaneseq
    %v3843 = vshrl.u32 %v3842, 7
    %v3844 = vsub.s32 %v3841, %v3843
    %v3845 = vrot.slane %v3817, %v3844
    %v3846 = vcombine.low %v3824, %v3838
    %v3847 = vcombine.low %v3831, %v3845
    %v3848 = vcombine.low %v3387, %v3388
    %v3849 = vcombine.low %v3389, %v3390
    %v3850 = vcombine.low %v3391, %v3392
    %v3851 = vcombine.low %v3393, %v3394
    %v3853 = vunpack.c.l.s4 1966171168
    %v3854 = vunpack.c.0.s8 %v3853
    %v3855 = vlaneseq
    %v3856 = vshrl.u32 %v3855, 7
    %v3857 = vsub.s32 %v3854, %v3856
    %v3858 = vrot.slane %v3848, %v3857
    %v3860 = vunpack.c.l.s4 1966171168
    %v3861 = vunpack.c.0.s8 %v3860
    %v3862 = vlaneseq
    %v3863 = vshrl.u32 %v3862, 7
    %v3864 = vsub.s32 %v3861, %v3863
    %v3865 = vrot.slane %v3849, %v3864
    %v3867 = vunpack.c.l.s4 1966171168
    %v3868 = vunpack.c.0.s8 %v3867
    %v3869 = vlaneseq
    %v3870 = vshrl.u32 %v3869, 7
    %v3871 = vsub.s32 %v3868, %v3870
    %v3872 = vrot.slane %v3850, %v3871
    %v3874 = vunpack.c.l.s4 1966171168
    %v3875 = vunpack.c.0.s8 %v3874
    %v3876 = vlaneseq
    %v3877 = vshrl.u32 %v3876, 7
    %v3878 = vsub.s32 %v3875, %v3877
    %v3879 = vrot.slane %v3851, %v3878
    %v3880 = vcombine.low %v3858, %v3865
    %v3881 = vcombine.high %v3858, %v3865
    %v3882 = vcombine.low %v3872, %v3879
    %v3883 = vcombine.high %v3872, %v3879
    %v3885 = vunpack.c.l.s4 1966171168
    %v3886 = vunpack.c.0.s8 %v3885
    %v3887 = vlaneseq
    %v3888 = vshrl.u32 %v3887, 7
    %v3889 = vsub.s32 %v3886, %v3888
    %v3890 = vrot.slane %v3880, %v3889
    %v3892 = vunpack.c.l.s4 1966171168
    %v3893 = vunpack.c.0.s8 %v3892
    %v3894 = vlaneseq
    %v3895 = vshrl.u32 %v3894, 7
    %v3896 = vsub.s32 %v3893, %v3895
    %v3897 = vrot.slane %v3881, %v3896
    %v3899 = vunpack.c.l.s4 1966171168
    %v3900 = vunpack.c.0.s8 %v3899
    %v3901 = vlaneseq
    %v3902 = vshrl.u32 %v3901, 7
    %v3903 = vsub.s32 %v3900, %v3902
    %v3904 = vrot.slane %v3882, %v3903
    %v3906 = vunpack.c.l.s4 1966171168
    %v3907 = vunpack.c.0.s8 %v3906
    %v3908 = vlaneseq
    %v3909 = vshrl.u32 %v3908, 7
    %v3910 = vsub.s32 %v3907, %v3909
    %v3911 = vrot.slane %v3883, %v3910
    %v3912 = vcombine.low %v3890, %v3904
    %v3913 = vcombine.low %v3897, %v3911
    %v3914 = vcombine.low %v3395, %v3396
    %v3915 = vcombine.low %v3397, %v3398
    %v3916 = vcombine.low %v3399, %v3400
    %v3917 = vcombine.low %v3401, %v3402
    %v3919 = vunpack.c.l.s4 1966171168
    %v3920 = vunpack.c.0.s8 %v3919
    %v3921 = vlaneseq
    %v3922 = vshrl.u32 %v3921, 7
    %v3923 = vsub.s32 %v3920, %v3922
    %v3924 = vrot.slane %v3914, %v3923
    %v3926 = vunpack.c.l.s4 1966171168
    %v3927 = vunpack.c.0.s8 %v3926
    %v3928 = vlaneseq
    %v3929 = vshrl.u32 %v3928, 7
    %v3930 = vsub.s32 %v3927, %v3929
    %v3931 = vrot.slane %v3915, %v3930
    %v3933 = vunpack.c.l.s4 1966171168
    %v3934 = vunpack.c.0.s8 %v3933
    %v3935 = vlaneseq
    %v3936 = vshrl.u32 %v3935, 7
    %v3937 = vsub.s32 %v3934, %v3936
    %v3938 = vrot.slane %v3916, %v3937
    %v3940 = vunpack.c.l.s4 1966171168
    %v3941 = vunpack.c.0.s8 %v3940
    %v3942 = vlaneseq
    %v3943 = vshrl.u32 %v3942, 7
    %v3944 = vsub.s32 %v3941, %v3943
    %v3945 = vrot.slane %v3917, %v3944
    %v3946 = vcombine.low %v3924, %v3931
    %v3947 = vcombine.high %v3924, %v3931
    %v3948 = vcombine.low %v3938, %v3945
    %v3949 = vcombine.high %v3938, %v3945
    %v3951 = vunpack.c.l.s4 1966171168
    %v3952 = vunpack.c.0.s8 %v3951
    %v3953 = vlaneseq
    %v3954 = vshrl.u32 %v3953, 7
    %v3955 = vsub.s32 %v3952, %v3954
    %v3956 = vrot.slane %v3946, %v3955
    %v3958 = vunpack.c.l.s4 1966171168
    %v3959 = vunpack.c.0.s8 %v3958
    %v3960 = vlaneseq
    %v3961 = vshrl.u32 %v3960, 7
    %v3962 = vsub.s32 %v3959, %v3961
    %v3963 = vrot.slane %v3947, %v3962
    %v3965 = vunpack.c.l.s4 1966171168
    %v3966 = vunpack.c.0.s8 %v3965
    %v3967 = vlaneseq
    %v3968 = vshrl.u32 %v3967, 7
    %v3969 = vsub.s32 %v3966, %v3968
    %v3970 = vrot.slane %v3948, %v3969
    %v3972 = vunpack.c.l.s4 1966171168
    %v3973 = vunpack.c.0.s8 %v3972
    %v3974 = vlaneseq
    %v3975 = vshrl.u32 %v3974, 7
    %v3976 = vsub.s32 %v3973, %v3975
    %v3977 = vrot.slane %v3949, %v3976
    %v3978 = vcombine.low %v3956, %v3970
    %v3979 = vcombine.low %v3963, %v3977
    %v3980 = vcombine.low %v3403, %v3404
    %v3981 = vcombine.low %v3405, %v3406
    %v3982 = vcombine.low %v3407, %v3408
    %v3983 = vcombine.low %v3409, %v3410
    %v3985 = vunpack.c.l.s4 1966171168
    %v3986 = vunpack.c.0.s8 %v3985
    %v3987 = vlaneseq
    %v3988 = vshrl.u32 %v3987, 7
    %v3989 = vsub.s32 %v3986, %v3988
    %v3990 = vrot.slane %v3980, %v3989
    %v3992 = vunpack.c.l.s4 1966171168
    %v3993 = vunpack.c.0.s8 %v3992
    %v3994 = vlaneseq
    %v3995 = vshrl.u32 %v3994, 7
    %v3996 = vsub.s32 %v3993, %v3995
    %v3997 = vrot.slane %v3981, %v3996
    %v3999 = vunpack.c.l.s4 1966171168
    %v4000 = vunpack.c.0.s8 %v3999
    %v4001 = vlaneseq
    %v4002 = vshrl.u32 %v4001, 7
    %v4003 = vsub.s32 %v4000, %v4002
    %v4004 = vrot.slane %v3982, %v4003
    %v4006 = vunpack.c.l.s4 1966171168
    %v4007 = vunpack.c.0.s8 %v4006
    %v4008 = vlaneseq
    %v4009 = vshrl.u32 %v4008, 7
    %v4010 = vsub.s32 %v4007, %v4009
    %v4011 = vrot.slane %v3983, %v4010
    %v4012 = vcombine.low %v3990, %v3997
    %v4013 = vcombine.high %v3990, %v3997
    %v4014 = vcombine.low %v4004, %v4011
    %v4015 = vcombine.high %v4004, %v4011
    %v4017 = vunpack.c.l.s4 1966171168
    %v4018 = vunpack.c.0.s8 %v4017
    %v4019 = vlaneseq
    %v4020 = vshrl.u32 %v4019, 7
    %v4021 = vsub.s32 %v4018, %v4020
    %v4022 = vrot.slane %v4012, %v4021
    %v4024 = vunpack.c.l.s4 1966171168
    %v4025 = vunpack.c.0.s8 %v4024
    %v4026 = vlaneseq
    %v4027 = vshrl.u32 %v4026, 7
    %v4028 = vsub.s32 %v4025, %v4027
    %v4029 = vrot.slane %v4013, %v4028
    %v4031 = vunpack.c.l.s4 1966171168
    %v4032 = vunpack.c.0.s8 %v4031
    %v4033 = vlaneseq
    %v4034 = vshrl.u32 %v4033, 7
    %v4035 = vsub.s32 %v4032, %v4034
    %v4036 = vrot.slane %v4014, %v4035
    %v4038 = vunpack.c.l.s4 1966171168
    %v4039 = vunpack.c.0.s8 %v4038
    %v4040 = vlaneseq
    %v4041 = vshrl.u32 %v4040, 7
    %v4042 = vsub.s32 %v4039, %v4041
    %v4043 = vrot.slane %v4015, %v4042
    %v4044 = vcombine.low %v4022, %v4036
    %v4045 = vcombine.low %v4029, %v4043
    %v4046 = vcombine.low %v3411, %v3412
    %v4047 = vcombine.low %v3413, %v3414
    %v4048 = vcombine.low %v3415, %v3416
    %v4049 = vcombine.low %v3417, %v3418
    %v4051 = vunpack.c.l.s4 1966171168
    %v4052 = vunpack.c.0.s8 %v4051
    %v4053 = vlaneseq
    %v4054 = vshrl.u32 %v4053, 7
    %v4055 = vsub.s32 %v4052, %v4054
    %v4056 = vrot.slane %v4046, %v4055
    %v4058 = vunpack.c.l.s4 1966171168
    %v4059 = vunpack.c.0.s8 %v4058
    %v4060 = vlaneseq
    %v4061 = vshrl.u32 %v4060, 7
    %v4062 = vsub.s32 %v4059, %v4061
    %v4063 = vrot.slane %v4047, %v4062
    %v4065 = vunpack.c.l.s4 1966171168
    %v4066 = vunpack.c.0.s8 %v4065
    %v4067 = vlaneseq
    %v4068 = vshrl.u32 %v4067, 7
    %v4069 = vsub.s32 %v4066, %v4068
    %v4070 = vrot.slane %v4048, %v4069
    %v4072 = vunpack.c.l.s4 1966171168
    %v4073 = vunpack.c.0.s8 %v4072
    %v4074 = vlaneseq
    %v4075 = vshrl.u32 %v4074, 7
    %v4076 = vsub.s32 %v4073, %v4075
    %v4077 = vrot.slane %v4049, %v4076
    %v4078 = vcombine.low %v4056, %v4063
    %v4079 = vcombine.high %v4056, %v4063
    %v4080 = vcombine.low %v4070, %v4077
    %v4081 = vcombine.high %v4070, %v4077
    %v4083 = vunpack.c.l.s4 1966171168
    %v4084 = vunpack.c.0.s8 %v4083
    %v4085 = vlaneseq
    %v4086 = vshrl.u32 %v4085, 7
    %v4087 = vsub.s32 %v4084, %v4086
    %v4088 = vrot.slane %v4078, %v4087
    %v4090 = vunpack.c.l.s4 1966171168
    %v4091 = vunpack.c.0.s8 %v4090
    %v4092 = vlaneseq
    %v4093 = vshrl.u32 %v4092, 7
    %v4094 = vsub.s32 %v4091, %v4093
    %v4095 = vrot.slane %v4079, %v4094
    %v4097 = vunpack.c.l.s4 1966171168
    %v4098 = vunpack.c.0.s8 %v4097
    %v4099 = vlaneseq
    %v4100 = vshrl.u32 %v4099, 7
    %v4101 = vsub.s32 %v4098, %v4100
    %v4102 = vrot.slane %v4080, %v4101
    %v4104 = vunpack.c.l.s4 1966171168
    %v4105 = vunpack.c.0.s8 %v4104
    %v4106 = vlaneseq
    %v4107 = vshrl.u32 %v4106, 7
    %v4108 = vsub.s32 %v4105, %v4107
    %v4109 = vrot.slane %v4081, %v4108
    %v4110 = vcombine.low %v4088, %v4102
    %v4111 = vcombine.low %v4095, %v4109
    %v4112 = vcombine.low %v3419, %v3420
    %v4113 = vcombine.low %v3421, %v3422
    %v4114 = vcombine.low %v3423, %v3424
    %v4115 = vcombine.low %v3425, %v3426
    %v4117 = vunpack.c.l.s4 1966171168
    %v4118 = vunpack.c.0.s8 %v4117
    %v4119 = vlaneseq
    %v4120 = vshrl.u32 %v4119, 7
    %v4121 = vsub.s32 %v4118, %v4120
    %v4122 = vrot.slane %v4112, %v4121
    %v4124 = vunpack.c.l.s4 1966171168
    %v4125 = vunpack.c.0.s8 %v4124
    %v4126 = vlaneseq
    %v4127 = vshrl.u32 %v4126, 7
    %v4128 = vsub.s32 %v4125, %v4127
    %v4129 = vrot.slane %v4113, %v4128
    %v4131 = vunpack.c.l.s4 1966171168
    %v4132 = vunpack.c.0.s8 %v4131
    %v4133 = vlaneseq
    %v4134 = vshrl.u32 %v4133, 7
    %v4135 = vsub.s32 %v4132, %v4134
    %v4136 = vrot.slane %v4114, %v4135
    %v4138 = vunpack.c.l.s4 1966171168
    %v4139 = vunpack.c.0.s8 %v4138
    %v4140 = vlaneseq
    %v4141 = vshrl.u32 %v4140, 7
    %v4142 = vsub.s32 %v4139, %v4141
    %v4143 = vrot.slane %v4115, %v4142
    %v4144 = vcombine.low %v4122, %v4129
    %v4145 = vcombine.high %v4122, %v4129
    %v4146 = vcombine.low %v4136, %v4143
    %v4147 = vcombine.high %v4136, %v4143
    %v4149 = vunpack.c.l.s4 1966171168
    %v4150 = vunpack.c.0.s8 %v4149
    %v4151 = vlaneseq
    %v4152 = vshrl.u32 %v4151, 7
    %v4153 = vsub.s32 %v4150, %v4152
    %v4154 = vrot.slane %v4144, %v4153
    %v4156 = vunpack.c.l.s4 1966171168
    %v4157 = vunpack.c.0.s8 %v4156
    %v4158 = vlaneseq
    %v4159 = vshrl.u32 %v4158, 7
    %v4160 = vsub.s32 %v4157, %v4159
    %v4161 = vrot.slane %v4145, %v4160
    %v4163 = vunpack.c.l.s4 1966171168
    %v4164 = vunpack.c.0.s8 %v4163
    %v4165 = vlaneseq
    %v4166 = vshrl.u32 %v4165, 7
    %v4167 = vsub.s32 %v4164, %v4166
    %v4168 = vrot.slane %v4146, %v4167
    %v4170 = vunpack.c.l.s4 1966171168
    %v4171 = vunpack.c.0.s8 %v4170
    %v4172 = vlaneseq
    %v4173 = vshrl.u32 %v4172, 7
    %v4174 = vsub.s32 %v4171, %v4173
    %v4175 = vrot.slane %v4147, %v4174
    %v4176 = vcombine.low %v4154, %v4168
    %v4177 = vcombine.low %v4161, %v4175
    %v4178 = vcombine.low %v3427, %v3428
    %v4179 = vcombine.low %v3429, %v3430
    %v4180 = vcombine.low %v3431, %v3432
    %v4181 = vcombine.low %v3433, %v3434
    %v4183 = vunpack.c.l.s4 1966171168
    %v4184 = vunpack.c.0.s8 %v4183
    %v4185 = vlaneseq
    %v4186 = vshrl.u32 %v4185, 7
    %v4187 = vsub.s32 %v4184, %v4186
    %v4188 = vrot.slane %v4178, %v4187
    %v4190 = vunpack.c.l.s4 1966171168
    %v4191 = vunpack.c.0.s8 %v4190
    %v4192 = vlaneseq
    %v4193 = vshrl.u32 %v4192, 7
    %v4194 = vsub.s32 %v4191, %v4193
    %v4195 = vrot.slane %v4179, %v4194
    %v4197 = vunpack.c.l.s4 1966171168
    %v4198 = vunpack.c.0.s8 %v4197
    %v4199 = vlaneseq
    %v4200 = vshrl.u32 %v4199, 7
    %v4201 = vsub.s32 %v4198, %v4200
    %v4202 = vrot.slane %v4180, %v4201
    %v4204 = vunpack.c.l.s4 1966171168
    %v4205 = vunpack.c.0.s8 %v4204
    %v4206 = vlaneseq
    %v4207 = vshrl.u32 %v4206, 7
    %v4208 = vsub.s32 %v4205, %v4207
    %v4209 = vrot.slane %v4181, %v4208
    %v4210 = vcombine.low %v4188, %v4195
    %v4211 = vcombine.high %v4188, %v4195
    %v4212 = vcombine.low %v4202, %v4209
    %v4213 = vcombine.high %v4202, %v4209
    %v4215 = vunpack.c.l.s4 1966171168
    %v4216 = vunpack.c.0.s8 %v4215
    %v4217 = vlaneseq
    %v4218 = vshrl.u32 %v4217, 7
    %v4219 = vsub.s32 %v4216, %v4218
    %v4220 = vrot.slane %v4210, %v4219
    %v4222 = vunpack.c.l.s4 1966171168
    %v4223 = vunpack.c.0.s8 %v4222
    %v4224 = vlaneseq
    %v4225 = vshrl.u32 %v4224, 7
    %v4226 = vsub.s32 %v4223, %v4225
    %v4227 = vrot.slane %v4211, %v4226
    %v4229 = vunpack.c.l.s4 1966171168
    %v4230 = vunpack.c.0.s8 %v4229
    %v4231 = vlaneseq
    %v4232 = vshrl.u32 %v4231, 7
    %v4233 = vsub.s32 %v4230, %v4232
    %v4234 = vrot.slane %v4212, %v4233
    %v4236 = vunpack.c.l.s4 1966171168
    %v4237 = vunpack.c.0.s8 %v4236
    %v4238 = vlaneseq
    %v4239 = vshrl.u32 %v4238, 7
    %v4240 = vsub.s32 %v4237, %v4239
    %v4241 = vrot.slane %v4213, %v4240
    %v4242 = vcombine.low %v4220, %v4234
    %v4243 = vcombine.low %v4227, %v4241
    %v4244 = vcombine.low %v3435, %v3436
    %v4245 = vcombine.low %v3437, %v3438
    %v4246 = vcombine.low %v3439, %v3440
    %v4247 = vcombine.low %v3441, %v3442
    %v4249 = vunpack.c.l.s4 1966171168
    %v4250 = vunpack.c.0.s8 %v4249
    %v4251 = vlaneseq
    %v4252 = vshrl.u32 %v4251, 7
    %v4253 = vsub.s32 %v4250, %v4252
    %v4254 = vrot.slane %v4244, %v4253
    %v4256 = vunpack.c.l.s4 1966171168
    %v4257 = vunpack.c.0.s8 %v4256
    %v4258 = vlaneseq
    %v4259 = vshrl.u32 %v4258, 7
    %v4260 = vsub.s32 %v4257, %v4259
    %v4261 = vrot.slane %v4245, %v4260
    %v4263 = vunpack.c.l.s4 1966171168
    %v4264 = vunpack.c.0.s8 %v4263
    %v4265 = vlaneseq
    %v4266 = vshrl.u32 %v4265, 7
    %v4267 = vsub.s32 %v4264, %v4266
    %v4268 = vrot.slane %v4246, %v4267
    %v4270 = vunpack.c.l.s4 1966171168
    %v4271 = vunpack.c.0.s8 %v4270
    %v4272 = vlaneseq
    %v4273 = vshrl.u32 %v4272, 7
    %v4274 = vsub.s32 %v4271, %v4273
    %v4275 = vrot.slane %v4247, %v4274
    %v4276 = vcombine.low %v4254, %v4261
    %v4277 = vcombine.high %v4254, %v4261
    %v4278 = vcombine.low %v4268, %v4275
    %v4279 = vcombine.high %v4268, %v4275
    %v4281 = vunpack.c.l.s4 1966171168
    %v4282 = vunpack.c.0.s8 %v4281
    %v4283 = vlaneseq
    %v4284 = vshrl.u32 %v4283, 7
    %v4285 = vsub.s32 %v4282, %v4284
    %v4286 = vrot.slane %v4276, %v4285
    %v4288 = vunpack.c.l.s4 1966171168
    %v4289 = vunpack.c.0.s8 %v4288
    %v4290 = vlaneseq
    %v4291 = vshrl.u32 %v4290, 7
    %v4292 = vsub.s32 %v4289, %v4291
    %v4293 = vrot.slane %v4277, %v4292
    %v4295 = vunpack.c.l.s4 1966171168
    %v4296 = vunpack.c.0.s8 %v4295
    %v4297 = vlaneseq
    %v4298 = vshrl.u32 %v4297, 7
    %v4299 = vsub.s32 %v4296, %v4298
    %v4300 = vrot.slane %v4278, %v4299
    %v4302 = vunpack.c.l.s4 1966171168
    %v4303 = vunpack.c.0.s8 %v4302
    %v4304 = vlaneseq
    %v4305 = vshrl.u32 %v4304, 7
    %v4306 = vsub.s32 %v4303, %v4305
    %v4307 = vrot.slane %v4279, %v4306
    %v4308 = vcombine.low %v4286, %v4300
    %v4309 = vcombine.low %v4293, %v4307
    %v4310 = vcombine.low %v3443, %v3444
    %v4311 = vcombine.low %v3445, %v3446
    %v4312 = vcombine.low %v3447, %v3448
    %v4313 = vcombine.low %v3449, %v3450
    %v4315 = vunpack.c.l.s4 1966171168
    %v4316 = vunpack.c.0.s8 %v4315
    %v4317 = vlaneseq
    %v4318 = vshrl.u32 %v4317, 7
    %v4319 = vsub.s32 %v4316, %v4318
    %v4320 = vrot.slane %v4310, %v4319
    %v4322 = vunpack.c.l.s4 1966171168
    %v4323 = vunpack.c.0.s8 %v4322
    %v4324 = vlaneseq
    %v4325 = vshrl.u32 %v4324, 7
    %v4326 = vsub.s32 %v4323, %v4325
    %v4327 = vrot.slane %v4311, %v4326
    %v4329 = vunpack.c.l.s4 1966171168
    %v4330 = vunpack.c.0.s8 %v4329
    %v4331 = vlaneseq
    %v4332 = vshrl.u32 %v4331, 7
    %v4333 = vsub.s32 %v4330, %v4332
    %v4334 = vrot.slane %v4312, %v4333
    %v4336 = vunpack.c.l.s4 1966171168
    %v4337 = vunpack.c.0.s8 %v4336
    %v4338 = vlaneseq
    %v4339 = vshrl.u32 %v4338, 7
    %v4340 = vsub.s32 %v4337, %v4339
    %v4341 = vrot.slane %v4313, %v4340
    %v4342 = vcombine.low %v4320, %v4327
    %v4343 = vcombine.high %v4320, %v4327
    %v4344 = vcombine.low %v4334, %v4341
    %v4345 = vcombine.high %v4334, %v4341
    %v4347 = vunpack.c.l.s4 1966171168
    %v4348 = vunpack.c.0.s8 %v4347
    %v4349 = vlaneseq
    %v4350 = vshrl.u32 %v4349, 7
    %v4351 = vsub.s32 %v4348, %v4350
    %v4352 = vrot.slane %v4342, %v4351
    %v4354 = vunpack.c.l.s4 1966171168
    %v4355 = vunpack.c.0.s8 %v4354
    %v4356 = vlaneseq
    %v4357 = vshrl.u32 %v4356, 7
    %v4358 = vsub.s32 %v4355, %v4357
    %v4359 = vrot.slane %v4343, %v4358
    %v4361 = vunpack.c.l.s4 1966171168
    %v4362 = vunpack.c.0.s8 %v4361
    %v4363 = vlaneseq
    %v4364 = vshrl.u32 %v4363, 7
    %v4365 = vsub.s32 %v4362, %v4364
    %v4366 = vrot.slane %v4344, %v4365
    %v4368 = vunpack.c.l.s4 1966171168
    %v4369 = vunpack.c.0.s8 %v4368
    %v4370 = vlaneseq
    %v4371 = vshrl.u32 %v4370, 7
    %v4372 = vsub.s32 %v4369, %v4371
    %v4373 = vrot.slane %v4345, %v4372
    %v4374 = vcombine.low %v4352, %v4366
    %v4375 = vcombine.low %v4359, %v4373
    %v4376 = vcombine.low %v3451, %v3452
    %v4377 = vcombine.low %v3453, %v3454
    %v4378 = vcombine.low %v3455, %v3456
    %v4379 = vcombine.low %v3457, %v3458
    %v4381 = vunpack.c.l.s4 1966171168
    %v4382 = vunpack.c.0.s8 %v4381
    %v4383 = vlaneseq
    %v4384 = vshrl.u32 %v4383, 7
    %v4385 = vsub.s32 %v4382, %v4384
    %v4386 = vrot.slane %v4376, %v4385
    %v4388 = vunpack.c.l.s4 1966171168
    %v4389 = vunpack.c.0.s8 %v4388
    %v4390 = vlaneseq
    %v4391 = vshrl.u32 %v4390, 7
    %v4392 = vsub.s32 %v4389, %v4391
    %v4393 = vrot.slane %v4377, %v4392
    %v4395 = vunpack.c.l.s4 1966171168
    %v4396 = vunpack.c.0.s8 %v4395
    %v4397 = vlaneseq
    %v4398 = vshrl.u32 %v4397, 7
    %v4399 = vsub.s32 %v4396, %v4398
    %v4400 = vrot.slane %v4378, %v4399
    %v4402 = vunpack.c.l.s4 1966171168
    %v4403 = vunpack.c.0.s8 %v4402
    %v4404 = vlaneseq
    %v4405 = vshrl.u32 %v4404, 7
    %v4406 = vsub.s32 %v4403, %v4405
    %v4407 = vrot.slane %v4379, %v4406
    %v4408 = vcombine.low %v4386, %v4393
    %v4409 = vcombine.high %v4386, %v4393
    %v4410 = vcombine.low %v4400, %v4407
    %v4411 = vcombine.high %v4400, %v4407
    %v4413 = vunpack.c.l.s4 1966171168
    %v4414 = vunpack.c.0.s8 %v4413
    %v4415 = vlaneseq
    %v4416 = vshrl.u32 %v4415, 7
    %v4417 = vsub.s32 %v4414, %v4416
    %v4418 = vrot.slane %v4408, %v4417
    %v4420 = vunpack.c.l.s4 1966171168
    %v4421 = vunpack.c.0.s8 %v4420
    %v4422 = vlaneseq
    %v4423 = vshrl.u32 %v4422, 7
    %v4424 = vsub.s32 %v4421, %v4423
    %v4425 = vrot.slane %v4409, %v4424
    %v4427 = vunpack.c.l.s4 1966171168
    %v4428 = vunpack.c.0.s8 %v4427
    %v4429 = vlaneseq
    %v4430 = vshrl.u32 %v4429, 7
    %v4431 = vsub.s32 %v4428, %v4430
    %v4432 = vrot.slane %v4410, %v4431
    %v4434 = vunpack.c.l.s4 1966171168
    %v4435 = vunpack.c.0.s8 %v4434
    %v4436 = vlaneseq
    %v4437 = vshrl.u32 %v4436, 7
    %v4438 = vsub.s32 %v4435, %v4437
    %v4439 = vrot.slane %v4411, %v4438
    %v4440 = vcombine.low %v4418, %v4432
    %v4441 = vcombine.low %v4425, %v4439
    %v4442 = vcombine.low %v3459, %v3460
    %v4443 = vcombine.low %v3461, %v3462
    %v4444 = vcombine.low %v3463, %v3464
    %v4445 = vcombine.low %v3465, %v3466
    %v4447 = vunpack.c.l.s4 1966171168
    %v4448 = vunpack.c.0.s8 %v4447
    %v4449 = vlaneseq
    %v4450 = vshrl.u32 %v4449, 7
    %v4451 = vsub.s32 %v4448, %v4450
    %v4452 = vrot.slane %v4442, %v4451
    %v4454 = vunpack.c.l.s4 1966171168
    %v4455 = vunpack.c.0.s8 %v4454
    %v4456 = vlaneseq
    %v4457 = vshrl.u32 %v4456, 7
    %v4458 = vsub.s32 %v4455, %v4457
    %v4459 = vrot.slane %v4443, %v4458
    %v4461 = vunpack.c.l.s4 1966171168
    %v4462 = vunpack.c.0.s8 %v4461
    %v4463 = vlaneseq
    %v4464 = vshrl.u32 %v4463, 7
    %v4465 = vsub.s32 %v4462, %v4464
    %v4466 = vrot.slane %v4444, %v4465
    %v4468 = vunpack.c.l.s4 1966171168
    %v4469 = vunpack.c.0.s8 %v4468
    %v4470 = vlaneseq
    %v4471 = vshrl.u32 %v4470, 7
    %v4472 = vsub.s32 %v4469, %v4471
    %v4473 = vrot.slane %v4445, %v4472
    %v4474 = vcombine.low %v4452, %v4459
    %v4475 = vcombine.high %v4452, %v4459
    %v4476 = vcombine.low %v4466, %v4473
    %v4477 = vcombine.high %v4466, %v4473
    %v4479 = vunpack.c.l.s4 1966171168
    %v4480 = vunpack.c.0.s8 %v4479
    %v4481 = vlaneseq
    %v4482 = vshrl.u32 %v4481, 7
    %v4483 = vsub.s32 %v4480, %v4482
    %v4484 = vrot.slane %v4474, %v4483
    %v4486 = vunpack.c.l.s4 1966171168
    %v4487 = vunpack.c.0.s8 %v4486
    %v4488 = vlaneseq
    %v4489 = vshrl.u32 %v4488, 7
    %v4490 = vsub.s32 %v4487, %v4489
    %v4491 = vrot.slane %v4475, %v4490
    %v4493 = vunpack.c.l.s4 1966171168
    %v4494 = vunpack.c.0.s8 %v4493
    %v4495 = vlaneseq
    %v4496 = vshrl.u32 %v4495, 7
    %v4497 = vsub.s32 %v4494, %v4496
    %v4498 = vrot.slane %v4476, %v4497
    %v4500 = vunpack.c.l.s4 1966171168
    %v4501 = vunpack.c.0.s8 %v4500
    %v4502 = vlaneseq
    %v4503 = vshrl.u32 %v4502, 7
    %v4504 = vsub.s32 %v4501, %v4503
    %v4505 = vrot.slane %v4477, %v4504
    %v4506 = vcombine.low %v4484, %v4498
    %v4507 = vcombine.low %v4491, %v4505
    %v4508 = vcombine.low %v3467, %v3468
    %v4510 = vunpack.c.l.s4 1966171168
    %v4511 = vunpack.c.0.s8 %v4510
    %v4512 = vlaneseq
    %v4513 = vshrl.u32 %v4512, 7
    %v4514 = vsub.s32 %v4511, %v4513
    %v4515 = vrot.slane %v4508, %v4514
    %v4516 = vcombine.high %v4515, %v4515
    %v4518 = vunpack.c.l.s4 1966171168
    %v4519 = vunpack.c.0.s8 %v4518
    %v4520 = vlaneseq
    %v4521 = vshrl.u32 %v4520, 7
    %v4522 = vsub.s32 %v4519, %v4521
    %v4523 = vrot.slane %v4515, %v4522
    %v4525 = vunpack.c.l.s4 1966171168
    %v4526 = vunpack.c.0.s8 %v4525
    %v4527 = vlaneseq
    %v4528 = vshrl.u32 %v4527, 7
    %v4529 = vsub.s32 %v4526, %v4528
    %v4530 = vrot.slane %v4516, %v4529
    %v4545 = vcombine.low %v3518, %v3532
    %v4546 = vcombine.low %v3540, %v3542
    %v4547 = vcombine.low %v3525, %v3539
    %v4548 = vcombine.low %v3541, %v3543
    %v4550 = vunpack.c.l.s4 1966171168
    %v4551 = vunpack.c.0.s8 %v4550
    %v4552 = vlaneseq
    %v4553 = vshrl.u32 %v4552, 7
    %v4554 = vsub.s32 %v4551, %v4553
    %v4555 = vrot.slane %v4545, %v4554
    %v4557 = vunpack.c.l.s4 1966171168
    %v4558 = vunpack.c.0.s8 %v4557
    %v4559 = vlaneseq
    %v4560 = vshrl.u32 %v4559, 7
    %v4561 = vsub.s32 %v4558, %v4560
    %v4562 = vrot.slane %v4546, %v4561
    %v4564 = vunpack.c.l.s4 1966171168
    %v4565 = vunpack.c.0.s8 %v4564
    %v4566 = vlaneseq
    %v4567 = vshrl.u32 %v4566, 7
    %v4568 = vsub.s32 %v4565, %v4567
    %v4569 = vrot.slane %v4547, %v4568
    %v4571 = vunpack.c.l.s4 1966171168
    %v4572 = vunpack.c.0.s8 %v4571
    %v4573 = vlaneseq
    %v4574 = vshrl.u32 %v4573, 7
    %v4575 = vsub.s32 %v4572, %v4574
    %v4576 = vrot.slane %v4548, %v4575
    %v4577 = vcombine.low %v4555, %v4562
    %v4578 = vcombine.low %v4569, %v4576
    %v4580 = vunpack.c.l.s4 1966171168
    %v4581 = vunpack.c.0.s8 %v4580
    %v4582 = vlaneseq
    %v4583 = vshrl.u32 %v4582, 7
    %v4584 = vsub.s32 %v4581, %v4583
    %v4585 = vrot.slane %v4577, %v4584
    %v4587 = vunpack.c.l.s4 1966171168
    %v4588 = vunpack.c.0.s8 %v4587
    %v4589 = vlaneseq
    %v4590 = vshrl.u32 %v4589, 7
    %v4591 = vsub.s32 %v4588, %v4590
    %v4592 = vrot.slane %v4578, %v4591
    %v4593 = vcombine.low %v4585, %v4592
    %v4594 = vcombine.low %v3525, %v3518
    %v4595 = vcombine.low %v3532, %v3540
    %v4597 = vunpack.c.l.s4 1966171168
    %v4598 = vunpack.c.0.s8 %v4597
    %v4599 = vlaneseq
    %v4600 = vshrl.u32 %v4599, 7
    %v4601 = vsub.s32 %v4598, %v4600
    %v4602 = vrot.slane %v4594, %v4601
    %v4604 = vunpack.c.l.s4 1966171168
    %v4605 = vunpack.c.0.s8 %v4604
    %v4606 = vlaneseq
    %v4607 = vshrl.u32 %v4606, 7
    %v4608 = vsub.s32 %v4605, %v4607
    %v4609 = vrot.slane %v4595, %v4608
    %v4610 = vcombine.low %v4602, %v4609
    %v4612 = vunpack.c.l.s4 1966171168
    %v4613 = vunpack.c.0.s8 %v4612
    %v4614 = vlaneseq
    %v4615 = vshrl.u32 %v4614, 7
    %v4616 = vsub.s32 %v4613, %v4615
    %v4617 = vrot.slane %v4610, %v4616
    %v4618 = vcombine.low %v4585, %v4617
    %v4619 = vcombine.low %v3542, %v3525
    %v4620 = vcombine.low %v3539, %v3541
    %v4621 = vcombine.low %v3543, %v3518
    %v4623 = vunpack.c.l.s4 1966171168
    %v4624 = vunpack.c.0.s8 %v4623
    %v4625 = vlaneseq
    %v4626 = vshrl.u32 %v4625, 7
    %v4627 = vsub.s32 %v4624, %v4626
    %v4628 = vrot.slane %v4619, %v4627
    %v4630 = vunpack.c.l.s4 1966171168
    %v4631 = vunpack.c.0.s8 %v4630
    %v4632 = vlaneseq
    %v4633 = vshrl.u32 %v4632, 7
    %v4634 = vsub.s32 %v4631, %v4633
    %v4635 = vrot.slane %v4620, %v4634
    %v4637 = vunpack.c.l.s4 1966171168
    %v4638 = vunpack.c.0.s8 %v4637
    %v4639 = vlaneseq
    %v4640 = vshrl.u32 %v4639, 7
    %v4641 = vsub.s32 %v4638, %v4640
    %v4642 = vrot.slane %v4621, %v4641
    %v4643 = vcombine.low %v4628, %v4635
    %v4644 = vcombine.low %v4642, %v4609
    %v4646 = vunpack.c.l.s4 1966171168
    %v4647 = vunpack.c.0.s8 %v4646
    %v4648 = vlaneseq
    %v4649 = vshrl.u32 %v4648, 7
    %v4650 = vsub.s32 %v4647, %v4649
    %v4651 = vrot.slane %v4643, %v4650
    %v4653 = vunpack.c.l.s4 1966171168
    %v4654 = vunpack.c.0.s8 %v4653
    %v4655 = vlaneseq
    %v4656 = vshrl.u32 %v4655, 7
    %v4657 = vsub.s32 %v4654, %v4656
    %v4658 = vrot.slane %v4644, %v4657
    %v4659 = vcombine.low %v4651, %v4658
    %v4661 = vunpack.c.l.s4 1966171168
    %v4662 = vunpack.c.0.s8 %v4661
    %v4663 = vlaneseq
    %v4664 = vshrl.u32 %v4663, 7
    %v4665 = vsub.s32 %v4662, %v4664
    %v4666 = vrot.slane %v4628, %v4665
    %vm4671 = vcmask 261120
    %v4672 = vsel %vm4671, %v3715, 0
    %v4674 = vsel %vm4671, %v3781, 0
    %v4676 = vsel %vm4671, %v3847, 0
    %v4678 = vsel %vm4671, %v3913, 0
    %v4680 = vsel %vm4671, %v3979, 0
    %v4682 = vsel %vm4671, %v4045, 0
    %v4684 = vsel %vm4671, %v4111, 0
    %v4686 = vsel %vm4671, %v4177, 0
    %v4688 = vsel %vm4671, %v4243, 0
    %v4690 = vsel %vm4671, %v4309, 0
    %v4692 = vsel %vm4671, %v4375, 0
    %v4694 = vsel %vm4671, %v4441, 0
    %v4696 = vsel %vm4671, %v4507, 0
    %v4698 = vsel %vm4671, %v4530, 0
    %4700 = vmatprep.subr.mxu0 0.0
    %4701 = vmatpush1.msra.mxu0 %v3469
    %4702 = vmatprep.subr.mxu0 0.0
    %4703 = vmatpush1.msra.mxu0 %v3470
    %4704 = vmatprep.subr.mxu0 0.0
    %4705 = vmatpush1.msra.mxu0 %v3471
    %4706 = vmatprep.subr.mxu0 0.0
    %4707 = vmatpush1.msra.mxu0 %v3472
    %4708 = vmatprep.subr.mxu0 0.0
    %4709 = vmatpush1.msra.mxu0 %v3473
    %4710 = vmatprep.subr.mxu0 0.0
    %4711 = vmatpush1.msra.mxu0 %v3474
    %4712 = vmatprep.subr.mxu0 0.0
    %4713 = vmatpush1.msra.mxu0 %v3475
    %4714 = vmatprep.subr.mxu0 0.0
    %4715 = vmatpush1.msra.mxu0 %v3476
    %4716 = vmatprep.subr.mxu0 0.0
    %4717 = vmatpush1.msra.mxu0 %v3477
    %4718 = vmatprep.subr.mxu0 0.0
    %4719 = vmatpush1.msra.mxu0 %v3478
    %4720 = vmatprep.subr.mxu0 0.0
    %4721 = vmatpush1.msra.mxu0 %v3479
    %4722 = vmatprep.subr.mxu0 0.0
    %4723 = vmatpush1.msra.mxu0 %v3480
    %4724 = vmatprep.subr.mxu0 0.0
    %4725 = vmatpush1.msra.mxu0 %v3481
    %4726 = vmatprep.subr.mxu0 0.0
    %4727 = vmatpush1.msra.mxu0 %v3482
    %4728 = vmatprep.subr.mxu0 0.0
    %4729 = vmatpush1.msra.mxu0 %v3483
    %4730 = vmatprep.subr.mxu0 0.0
    %4731 = vmatpush1.msra.mxu0 %v3484
    %4732 = vmatprep.subr.mxu0 0.0
    %4733 = vmatpush1.msra.mxu0 %v3485
    %4734 = vmatprep.subr.mxu0 0.0
    %4735 = vmatpush1.msra.mxu0 %v3486
    %4736 = vmatprep.subr.mxu0 0.0
    %4737 = vmatpush1.msra.mxu0 %v3487
    %4738 = vmatprep.subr.mxu0 0.0
    %4739 = vmatpush1.msra.mxu0 %v3488
    %4740 = vmatprep.subr.mxu0 0.0
    %4741 = vmatpush1.msra.mxu0 0.0
    %4742 = vmatprep.subr.mxu0 0.0
    %4743 = vmatpush1.msra.mxu0 0.0
    %4744 = vmatprep.subr.mxu0 0.0
    %4745 = vmatpush1.msra.mxu0 0.0
    %4746 = vmatprep.subr.mxu0 0.0
    %4747 = vmatpush1.msra.mxu0 0.0
    %4748 = vmatprep.subr.mxu0 0.0
    %4749 = vmatpush1.msra.mxu0 0.0
    %4750 = vmatprep.subr.mxu0 0.0
    %4751 = vmatpush1.msra.mxu0 0.0
    %4752 = vmatprep.subr.mxu0 0.0
    %4753 = vmatpush1.msra.mxu0 0.0
    %4754 = vmatprep.subr.mxu0 0.0
    %4755 = vmatpush1.msra.mxu0 0.0
    %4756 = vmatprep.subr.mxu0 0.0
    %4757 = vmatpush1.msra.mxu0 0.0
    %4758 = vmatprep.subr.mxu0 0.0
    %4759 = vmatpush1.msra.mxu0 0.0
    %4760 = vmatprep.subr.mxu0 0.0
    %4761 = vmatpush1.msra.mxu0 0.0
    %4762 = vmatprep.subr.mxu0 0.0
    %4763 = vmatpush1.msra.mxu0 0.0
    %4764 = vmatprep.mubr.f32.mxu0 %v4672
    %4765 = vmatmul.mubr.f32.gmra.mrb[0].mxu0 %v3714
    %v4766 = vpop.f32.mrb[0].mxu0
    %v4767 = vadd.f32 %v4593, %v4766
    %v4768 = vpop.f32.mrb[0].mxu0
    %4769 = vmatprep.mubr.f32.mxu0 %v4674
    %4770 = vmatmul.mubr.f32.gmra.mrb[0].mxu0 %v3780
    %v4771 = vpop.f32.mrb[0].mxu0
    %v4772 = vadd.f32 %v4593, %v4771
    %v4773 = vpop.f32.mrb[0].mxu0
    %4774 = vmatprep.mubr.f32.mxu0 %v4676
    %4775 = vmatmul.mubr.f32.gmra.mrb[0].mxu0 %v3846
    %v4776 = vpop.f32.mrb[0].mxu0
    %v4777 = vadd.f32 %v4593, %v4776
    %v4778 = vpop.f32.mrb[0].mxu0
    %4779 = vmatprep.mubr.f32.mxu0 %v4678
    %4780 = vmatmul.mubr.f32.gmra.mrb[0].mxu0 %v3912
    %v4781 = vpop.f32.mrb[0].mxu0
    %v4782 = vadd.f32 %v4593, %v4781
    %v4783 = vpop.f32.mrb[0].mxu0
    %4784 = vmatprep.mubr.f32.mxu0 %v4680
    %4785 = vmatmul.mubr.f32.gmra.mrb[0].mxu0 %v3978
    %v4786 = vpop.f32.mrb[0].mxu0
    %v4787 = vadd.f32 %v4593, %v4786
    %v4788 = vpop.f32.mrb[0].mxu0
    %4789 = vmatprep.mubr.f32.mxu0 %v4682
    %4790 = vmatmul.mubr.f32.gmra.mrb[0].mxu0 %v4044
    %v4791 = vpop.f32.mrb[0].mxu0
    %v4792 = vadd.f32 %v4593, %v4791
    %v4793 = vpop.f32.mrb[0].mxu0
    %4794 = vmatprep.mubr.f32.mxu0 %v4684
    %4795 = vmatmul.mubr.f32.gmra.mrb[0].mxu0 %v4110
    %v4796 = vpop.f32.mrb[0].mxu0
    %v4797 = vadd.f32 %v4618, %v4796
    %v4798 = vpop.f32.mrb[0].mxu0
    %4799 = vmatprep.mubr.f32.mxu0 %v4686
    %4800 = vmatmul.mubr.f32.gmra.mrb[0].mxu0 %v4176
    %v4801 = vpop.f32.mrb[0].mxu0
    %v4802 = vadd.f32 %v4659, %v4801
    %v4803 = vpop.f32.mrb[0].mxu0
    %4804 = vmatprep.mubr.f32.mxu0 %v4688
    %4805 = vmatmul.mubr.f32.gmra.mrb[0].mxu0 %v4242
    %v4806 = vpop.f32.mrb[0].mxu0
    %v4807 = vadd.f32 %v4659, %v4806
    %v4808 = vpop.f32.mrb[0].mxu0
    %4809 = vmatprep.mubr.f32.mxu0 %v4690
    %4810 = vmatmul.mubr.f32.gmra.mrb[0].mxu0 %v4308
    %v4811 = vpop.f32.mrb[0].mxu0
    %v4812 = vadd.f32 %v4659, %v4811
    %v4813 = vpop.f32.mrb[0].mxu0
    %4814 = vmatprep.mubr.f32.mxu0 %v4692
    %4815 = vmatmul.mubr.f32.gmra.mrb[0].mxu0 %v4374
    %v4816 = vpop.f32.mrb[0].mxu0
    %v4817 = vadd.f32 %v4659, %v4816
    %v4818 = vpop.f32.mrb[0].mxu0
    %4819 = vmatprep.mubr.f32.mxu0 %v4694
    %4820 = vmatmul.mubr.f32.gmra.mrb[0].mxu0 %v4440
    %v4821 = vpop.f32.mrb[0].mxu0
    %v4822 = vadd.f32 %v4659, %v4821
    %v4823 = vpop.f32.mrb[0].mxu0
    %4824 = vmatprep.mubr.f32.mxu0 %v4696
    %4825 = vmatmul.mubr.f32.gmra.mrb[0].mxu0 %v4506
    %v4826 = vpop.f32.mrb[0].mxu0
    %v4827 = vadd.f32 %v4659, %v4826
    %v4828 = vpop.f32.mrb[0].mxu0
    %4829 = vmatprep.mubr.f32.mxu0 %v4698
    %4830 = vmatmul.mubr.f32.gmra.mrb[0].mxu0 %v4523
    %v4831 = vpop.f32.mrb[0].mxu0
    %v4832 = vadd.f32 %v4666, %v4831
    %v4833 = vpop.f32.mrb[0].mxu0
    %4834 = vdwg.mxu0
    %v4849 = vcombine.high %v4767, %v4767
    %v4851 = vunpack.c.l.s4 1966171168
    %v4852 = vunpack.c.0.s8 %v4851
    %v4853 = vlaneseq
    %v4854 = vshrl.u32 %v4853, 7
    %v4855 = vsub.s32 %v4852, %v4854
    %v4856 = vrot.slane %v4767, %v4855
    %v4858 = vunpack.c.l.s4 1966171168
    %v4859 = vunpack.c.0.s8 %v4858
    %v4860 = vlaneseq
    %v4861 = vshrl.u32 %v4860, 7
    %v4862 = vsub.s32 %v4859, %v4861
    %v4863 = vrot.slane %v4849, %v4862
    %v4864 = vcombine.high %v4856, %v4856
    %v4865 = vcombine.high %v4863, %v4863
    %v4867 = vunpack.c.l.s4 1966171168
    %v4868 = vunpack.c.0.s8 %v4867
    %v4869 = vlaneseq
    %v4870 = vshrl.u32 %v4869, 7
    %v4871 = vsub.s32 %v4868, %v4870
    %v4872 = vrot.slane %v4856, %v4871
    %v4874 = vunpack.c.l.s4 1966171168
    %v4875 = vunpack.c.0.s8 %v4874
    %v4876 = vlaneseq
    %v4877 = vshrl.u32 %v4876, 7
    %v4878 = vsub.s32 %v4875, %v4877
    %v4879 = vrot.slane %v4863, %v4878
    %v4881 = vunpack.c.l.s4 1966171168
    %v4882 = vunpack.c.0.s8 %v4881
    %v4883 = vlaneseq
    %v4884 = vshrl.u32 %v4883, 7
    %v4885 = vsub.s32 %v4882, %v4884
    %v4886 = vrot.slane %v4864, %v4885
    %v4888 = vunpack.c.l.s4 1966171168
    %v4889 = vunpack.c.0.s8 %v4888
    %v4890 = vlaneseq
    %v4891 = vshrl.u32 %v4890, 7
    %v4892 = vsub.s32 %v4889, %v4891
    %v4893 = vrot.slane %v4865, %v4892
    %v4894 = vcombine.high %v4872, %v4872
    %v4895 = vcombine.high %v4879, %v4879
    %v4896 = vcombine.high %v4886, %v4886
    %v4897 = vcombine.high %v4893, %v4893
    %v4898 = vcombine.high %v4772, %v4772
    %v4900 = vunpack.c.l.s4 1966171168
    %v4901 = vunpack.c.0.s8 %v4900
    %v4902 = vlaneseq
    %v4903 = vshrl.u32 %v4902, 7
    %v4904 = vsub.s32 %v4901, %v4903
    %v4905 = vrot.slane %v4772, %v4904
    %v4907 = vunpack.c.l.s4 1966171168
    %v4908 = vunpack.c.0.s8 %v4907
    %v4909 = vlaneseq
    %v4910 = vshrl.u32 %v4909, 7
    %v4911 = vsub.s32 %v4908, %v4910
    %v4912 = vrot.slane %v4898, %v4911
    %v4913 = vcombine.high %v4905, %v4905
    %v4914 = vcombine.high %v4912, %v4912
    %v4916 = vunpack.c.l.s4 1966171168
    %v4917 = vunpack.c.0.s8 %v4916
    %v4918 = vlaneseq
    %v4919 = vshrl.u32 %v4918, 7
    %v4920 = vsub.s32 %v4917, %v4919
    %v4921 = vrot.slane %v4905, %v4920
    %v4923 = vunpack.c.l.s4 1966171168
    %v4924 = vunpack.c.0.s8 %v4923
    %v4925 = vlaneseq
    %v4926 = vshrl.u32 %v4925, 7
    %v4927 = vsub.s32 %v4924, %v4926
    %v4928 = vrot.slane %v4912, %v4927
    %v4930 = vunpack.c.l.s4 1966171168
    %v4931 = vunpack.c.0.s8 %v4930
    %v4932 = vlaneseq
    %v4933 = vshrl.u32 %v4932, 7
    %v4934 = vsub.s32 %v4931, %v4933
    %v4935 = vrot.slane %v4913, %v4934
    %v4937 = vunpack.c.l.s4 1966171168
    %v4938 = vunpack.c.0.s8 %v4937
    %v4939 = vlaneseq
    %v4940 = vshrl.u32 %v4939, 7
    %v4941 = vsub.s32 %v4938, %v4940
    %v4942 = vrot.slane %v4914, %v4941
    %v4943 = vcombine.high %v4921, %v4921
    %v4944 = vcombine.high %v4928, %v4928
    %v4945 = vcombine.high %v4935, %v4935
    %v4946 = vcombine.high %v4942, %v4942
    %v4947 = vcombine.high %v4777, %v4777
    %v4949 = vunpack.c.l.s4 1966171168
    %v4950 = vunpack.c.0.s8 %v4949
    %v4951 = vlaneseq
    %v4952 = vshrl.u32 %v4951, 7
    %v4953 = vsub.s32 %v4950, %v4952
    %v4954 = vrot.slane %v4777, %v4953
    %v4956 = vunpack.c.l.s4 1966171168
    %v4957 = vunpack.c.0.s8 %v4956
    %v4958 = vlaneseq
    %v4959 = vshrl.u32 %v4958, 7
    %v4960 = vsub.s32 %v4957, %v4959
    %v4961 = vrot.slane %v4947, %v4960
    %v4962 = vcombine.high %v4954, %v4954
    %v4963 = vcombine.high %v4961, %v4961
    %v4965 = vunpack.c.l.s4 1966171168
    %v4966 = vunpack.c.0.s8 %v4965
    %v4967 = vlaneseq
    %v4968 = vshrl.u32 %v4967, 7
    %v4969 = vsub.s32 %v4966, %v4968
    %v4970 = vrot.slane %v4954, %v4969
    %v4972 = vunpack.c.l.s4 1966171168
    %v4973 = vunpack.c.0.s8 %v4972
    %v4974 = vlaneseq
    %v4975 = vshrl.u32 %v4974, 7
    %v4976 = vsub.s32 %v4973, %v4975
    %v4977 = vrot.slane %v4961, %v4976
    %v4979 = vunpack.c.l.s4 1966171168
    %v4980 = vunpack.c.0.s8 %v4979
    %v4981 = vlaneseq
    %v4982 = vshrl.u32 %v4981, 7
    %v4983 = vsub.s32 %v4980, %v4982
    %v4984 = vrot.slane %v4962, %v4983
    %v4986 = vunpack.c.l.s4 1966171168
    %v4987 = vunpack.c.0.s8 %v4986
    %v4988 = vlaneseq
    %v4989 = vshrl.u32 %v4988, 7
    %v4990 = vsub.s32 %v4987, %v4989
    %v4991 = vrot.slane %v4963, %v4990
    %v4992 = vcombine.high %v4970, %v4970
    %v4993 = vcombine.high %v4977, %v4977
    %v4994 = vcombine.high %v4984, %v4984
    %v4995 = vcombine.high %v4991, %v4991
    %v4996 = vcombine.high %v4782, %v4782
    %v4998 = vunpack.c.l.s4 1966171168
    %v4999 = vunpack.c.0.s8 %v4998
    %v5000 = vlaneseq
    %v5001 = vshrl.u32 %v5000, 7
    %v5002 = vsub.s32 %v4999, %v5001
    %v5003 = vrot.slane %v4782, %v5002
    %v5005 = vunpack.c.l.s4 1966171168
    %v5006 = vunpack.c.0.s8 %v5005
    %v5007 = vlaneseq
    %v5008 = vshrl.u32 %v5007, 7
    %v5009 = vsub.s32 %v5006, %v5008
    %v5010 = vrot.slane %v4996, %v5009
    %v5011 = vcombine.high %v5003, %v5003
    %v5012 = vcombine.high %v5010, %v5010
    %v5014 = vunpack.c.l.s4 1966171168
    %v5015 = vunpack.c.0.s8 %v5014
    %v5016 = vlaneseq
    %v5017 = vshrl.u32 %v5016, 7
    %v5018 = vsub.s32 %v5015, %v5017
    %v5019 = vrot.slane %v5003, %v5018
    %v5021 = vunpack.c.l.s4 1966171168
    %v5022 = vunpack.c.0.s8 %v5021
    %v5023 = vlaneseq
    %v5024 = vshrl.u32 %v5023, 7
    %v5025 = vsub.s32 %v5022, %v5024
    %v5026 = vrot.slane %v5010, %v5025
    %v5028 = vunpack.c.l.s4 1966171168
    %v5029 = vunpack.c.0.s8 %v5028
    %v5030 = vlaneseq
    %v5031 = vshrl.u32 %v5030, 7
    %v5032 = vsub.s32 %v5029, %v5031
    %v5033 = vrot.slane %v5011, %v5032
    %v5035 = vunpack.c.l.s4 1966171168
    %v5036 = vunpack.c.0.s8 %v5035
    %v5037 = vlaneseq
    %v5038 = vshrl.u32 %v5037, 7
    %v5039 = vsub.s32 %v5036, %v5038
    %v5040 = vrot.slane %v5012, %v5039
    %v5041 = vcombine.high %v5019, %v5019
    %v5042 = vcombine.high %v5026, %v5026
    %v5043 = vcombine.high %v5033, %v5033
    %v5044 = vcombine.high %v5040, %v5040
    %v5045 = vcombine.high %v4787, %v4787
    %v5047 = vunpack.c.l.s4 1966171168
    %v5048 = vunpack.c.0.s8 %v5047
    %v5049 = vlaneseq
    %v5050 = vshrl.u32 %v5049, 7
    %v5051 = vsub.s32 %v5048, %v5050
    %v5052 = vrot.slane %v4787, %v5051
    %v5054 = vunpack.c.l.s4 1966171168
    %v5055 = vunpack.c.0.s8 %v5054
    %v5056 = vlaneseq
    %v5057 = vshrl.u32 %v5056, 7
    %v5058 = vsub.s32 %v5055, %v5057
    %v5059 = vrot.slane %v5045, %v5058
    %v5060 = vcombine.high %v5052, %v5052
    %v5061 = vcombine.high %v5059, %v5059
    %v5063 = vunpack.c.l.s4 1966171168
    %v5064 = vunpack.c.0.s8 %v5063
    %v5065 = vlaneseq
    %v5066 = vshrl.u32 %v5065, 7
    %v5067 = vsub.s32 %v5064, %v5066
    %v5068 = vrot.slane %v5052, %v5067
    %v5070 = vunpack.c.l.s4 1966171168
    %v5071 = vunpack.c.0.s8 %v5070
    %v5072 = vlaneseq
    %v5073 = vshrl.u32 %v5072, 7
    %v5074 = vsub.s32 %v5071, %v5073
    %v5075 = vrot.slane %v5059, %v5074
    %v5077 = vunpack.c.l.s4 1966171168
    %v5078 = vunpack.c.0.s8 %v5077
    %v5079 = vlaneseq
    %v5080 = vshrl.u32 %v5079, 7
    %v5081 = vsub.s32 %v5078, %v5080
    %v5082 = vrot.slane %v5060, %v5081
    %v5084 = vunpack.c.l.s4 1966171168
    %v5085 = vunpack.c.0.s8 %v5084
    %v5086 = vlaneseq
    %v5087 = vshrl.u32 %v5086, 7
    %v5088 = vsub.s32 %v5085, %v5087
    %v5089 = vrot.slane %v5061, %v5088
    %v5090 = vcombine.high %v5068, %v5068
    %v5091 = vcombine.high %v5075, %v5075
    %v5092 = vcombine.high %v5082, %v5082
    %v5093 = vcombine.high %v5089, %v5089
    %v5094 = vcombine.high %v4792, %v4792
    %v5096 = vunpack.c.l.s4 1966171168
    %v5097 = vunpack.c.0.s8 %v5096
    %v5098 = vlaneseq
    %v5099 = vshrl.u32 %v5098, 7
    %v5100 = vsub.s32 %v5097, %v5099
    %v5101 = vrot.slane %v4792, %v5100
    %v5103 = vunpack.c.l.s4 1966171168
    %v5104 = vunpack.c.0.s8 %v5103
    %v5105 = vlaneseq
    %v5106 = vshrl.u32 %v5105, 7
    %v5107 = vsub.s32 %v5104, %v5106
    %v5108 = vrot.slane %v5094, %v5107
    %v5109 = vcombine.high %v5101, %v5101
    %v5110 = vcombine.high %v5108, %v5108
    %v5112 = vunpack.c.l.s4 1966171168
    %v5113 = vunpack.c.0.s8 %v5112
    %v5114 = vlaneseq
    %v5115 = vshrl.u32 %v5114, 7
    %v5116 = vsub.s32 %v5113, %v5115
    %v5117 = vrot.slane %v5101, %v5116
    %v5119 = vunpack.c.l.s4 1966171168
    %v5120 = vunpack.c.0.s8 %v5119
    %v5121 = vlaneseq
    %v5122 = vshrl.u32 %v5121, 7
    %v5123 = vsub.s32 %v5120, %v5122
    %v5124 = vrot.slane %v5108, %v5123
    %v5126 = vunpack.c.l.s4 1966171168
    %v5127 = vunpack.c.0.s8 %v5126
    %v5128 = vlaneseq
    %v5129 = vshrl.u32 %v5128, 7
    %v5130 = vsub.s32 %v5127, %v5129
    %v5131 = vrot.slane %v5109, %v5130
    %v5133 = vunpack.c.l.s4 1966171168
    %v5134 = vunpack.c.0.s8 %v5133
    %v5135 = vlaneseq
    %v5136 = vshrl.u32 %v5135, 7
    %v5137 = vsub.s32 %v5134, %v5136
    %v5138 = vrot.slane %v5110, %v5137
    %v5139 = vcombine.high %v5117, %v5117
    %v5140 = vcombine.high %v5124, %v5124
    %v5141 = vcombine.high %v5131, %v5131
    %v5142 = vcombine.high %v5138, %v5138
    %v5143 = vcombine.high %v4797, %v4797
    %v5145 = vunpack.c.l.s4 1966171168
    %v5146 = vunpack.c.0.s8 %v5145
    %v5147 = vlaneseq
    %v5148 = vshrl.u32 %v5147, 7
    %v5149 = vsub.s32 %v5146, %v5148
    %v5150 = vrot.slane %v4797, %v5149
    %v5152 = vunpack.c.l.s4 1966171168
    %v5153 = vunpack.c.0.s8 %v5152
    %v5154 = vlaneseq
    %v5155 = vshrl.u32 %v5154, 7
    %v5156 = vsub.s32 %v5153, %v5155
    %v5157 = vrot.slane %v5143, %v5156
    %v5158 = vcombine.high %v5150, %v5150
    %v5159 = vcombine.high %v5157, %v5157
    %v5161 = vunpack.c.l.s4 1966171168
    %v5162 = vunpack.c.0.s8 %v5161
    %v5163 = vlaneseq
    %v5164 = vshrl.u32 %v5163, 7
    %v5165 = vsub.s32 %v5162, %v5164
    %v5166 = vrot.slane %v5150, %v5165
    %v5168 = vunpack.c.l.s4 1966171168
    %v5169 = vunpack.c.0.s8 %v5168
    %v5170 = vlaneseq
    %v5171 = vshrl.u32 %v5170, 7
    %v5172 = vsub.s32 %v5169, %v5171
    %v5173 = vrot.slane %v5157, %v5172
    %v5175 = vunpack.c.l.s4 1966171168
    %v5176 = vunpack.c.0.s8 %v5175
    %v5177 = vlaneseq
    %v5178 = vshrl.u32 %v5177, 7
    %v5179 = vsub.s32 %v5176, %v5178
    %v5180 = vrot.slane %v5158, %v5179
    %v5182 = vunpack.c.l.s4 1966171168
    %v5183 = vunpack.c.0.s8 %v5182
    %v5184 = vlaneseq
    %v5185 = vshrl.u32 %v5184, 7
    %v5186 = vsub.s32 %v5183, %v5185
    %v5187 = vrot.slane %v5159, %v5186
    %v5188 = vcombine.high %v5166, %v5166
    %v5189 = vcombine.high %v5173, %v5173
    %v5190 = vcombine.high %v5180, %v5180
    %v5191 = vcombine.high %v5187, %v5187
    %v5192 = vcombine.high %v4802, %v4802
    %v5194 = vunpack.c.l.s4 1966171168
    %v5195 = vunpack.c.0.s8 %v5194
    %v5196 = vlaneseq
    %v5197 = vshrl.u32 %v5196, 7
    %v5198 = vsub.s32 %v5195, %v5197
    %v5199 = vrot.slane %v4802, %v5198
    %v5201 = vunpack.c.l.s4 1966171168
    %v5202 = vunpack.c.0.s8 %v5201
    %v5203 = vlaneseq
    %v5204 = vshrl.u32 %v5203, 7
    %v5205 = vsub.s32 %v5202, %v5204
    %v5206 = vrot.slane %v5192, %v5205
    %v5207 = vcombine.high %v5199, %v5199
    %v5208 = vcombine.high %v5206, %v5206
    %v5210 = vunpack.c.l.s4 1966171168
    %v5211 = vunpack.c.0.s8 %v5210
    %v5212 = vlaneseq
    %v5213 = vshrl.u32 %v5212, 7
    %v5214 = vsub.s32 %v5211, %v5213
    %v5215 = vrot.slane %v5199, %v5214
    %v5217 = vunpack.c.l.s4 1966171168
    %v5218 = vunpack.c.0.s8 %v5217
    %v5219 = vlaneseq
    %v5220 = vshrl.u32 %v5219, 7
    %v5221 = vsub.s32 %v5218, %v5220
    %v5222 = vrot.slane %v5206, %v5221
    %v5224 = vunpack.c.l.s4 1966171168
    %v5225 = vunpack.c.0.s8 %v5224
    %v5226 = vlaneseq
    %v5227 = vshrl.u32 %v5226, 7
    %v5228 = vsub.s32 %v5225, %v5227
    %v5229 = vrot.slane %v5207, %v5228
    %v5231 = vunpack.c.l.s4 1966171168
    %v5232 = vunpack.c.0.s8 %v5231
    %v5233 = vlaneseq
    %v5234 = vshrl.u32 %v5233, 7
    %v5235 = vsub.s32 %v5232, %v5234
    %v5236 = vrot.slane %v5208, %v5235
    %v5237 = vcombine.high %v5215, %v5215
    %v5238 = vcombine.high %v5222, %v5222
    %v5239 = vcombine.high %v5229, %v5229
    %v5240 = vcombine.high %v5236, %v5236
    %v5241 = vcombine.high %v4807, %v4807
    %v5243 = vunpack.c.l.s4 1966171168
    %v5244 = vunpack.c.0.s8 %v5243
    %v5245 = vlaneseq
    %v5246 = vshrl.u32 %v5245, 7
    %v5247 = vsub.s32 %v5244, %v5246
    %v5248 = vrot.slane %v4807, %v5247
    %v5250 = vunpack.c.l.s4 1966171168
    %v5251 = vunpack.c.0.s8 %v5250
    %v5252 = vlaneseq
    %v5253 = vshrl.u32 %v5252, 7
    %v5254 = vsub.s32 %v5251, %v5253
    %v5255 = vrot.slane %v5241, %v5254
    %v5256 = vcombine.high %v5248, %v5248
    %v5257 = vcombine.high %v5255, %v5255
    %v5259 = vunpack.c.l.s4 1966171168
    %v5260 = vunpack.c.0.s8 %v5259
    %v5261 = vlaneseq
    %v5262 = vshrl.u32 %v5261, 7
    %v5263 = vsub.s32 %v5260, %v5262
    %v5264 = vrot.slane %v5248, %v5263
    %v5266 = vunpack.c.l.s4 1966171168
    %v5267 = vunpack.c.0.s8 %v5266
    %v5268 = vlaneseq
    %v5269 = vshrl.u32 %v5268, 7
    %v5270 = vsub.s32 %v5267, %v5269
    %v5271 = vrot.slane %v5255, %v5270
    %v5273 = vunpack.c.l.s4 1966171168
    %v5274 = vunpack.c.0.s8 %v5273
    %v5275 = vlaneseq
    %v5276 = vshrl.u32 %v5275, 7
    %v5277 = vsub.s32 %v5274, %v5276
    %v5278 = vrot.slane %v5256, %v5277
    %v5280 = vunpack.c.l.s4 1966171168
    %v5281 = vunpack.c.0.s8 %v5280
    %v5282 = vlaneseq
    %v5283 = vshrl.u32 %v5282, 7
    %v5284 = vsub.s32 %v5281, %v5283
    %v5285 = vrot.slane %v5257, %v5284
    %v5286 = vcombine.high %v5264, %v5264
    %v5287 = vcombine.high %v5271, %v5271
    %v5288 = vcombine.high %v5278, %v5278
    %v5289 = vcombine.high %v5285, %v5285
    %v5290 = vcombine.high %v4812, %v4812
    %v5292 = vunpack.c.l.s4 1966171168
    %v5293 = vunpack.c.0.s8 %v5292
    %v5294 = vlaneseq
    %v5295 = vshrl.u32 %v5294, 7
    %v5296 = vsub.s32 %v5293, %v5295
    %v5297 = vrot.slane %v4812, %v5296
    %v5299 = vunpack.c.l.s4 1966171168
    %v5300 = vunpack.c.0.s8 %v5299
    %v5301 = vlaneseq
    %v5302 = vshrl.u32 %v5301, 7
    %v5303 = vsub.s32 %v5300, %v5302
    %v5304 = vrot.slane %v5290, %v5303
    %v5305 = vcombine.high %v5297, %v5297
    %v5306 = vcombine.high %v5304, %v5304
    %v5308 = vunpack.c.l.s4 1966171168
    %v5309 = vunpack.c.0.s8 %v5308
    %v5310 = vlaneseq
    %v5311 = vshrl.u32 %v5310, 7
    %v5312 = vsub.s32 %v5309, %v5311
    %v5313 = vrot.slane %v5297, %v5312
    %v5315 = vunpack.c.l.s4 1966171168
    %v5316 = vunpack.c.0.s8 %v5315
    %v5317 = vlaneseq
    %v5318 = vshrl.u32 %v5317, 7
    %v5319 = vsub.s32 %v5316, %v5318
    %v5320 = vrot.slane %v5304, %v5319
    %v5322 = vunpack.c.l.s4 1966171168
    %v5323 = vunpack.c.0.s8 %v5322
    %v5324 = vlaneseq
    %v5325 = vshrl.u32 %v5324, 7
    %v5326 = vsub.s32 %v5323, %v5325
    %v5327 = vrot.slane %v5305, %v5326
    %v5329 = vunpack.c.l.s4 1966171168
    %v5330 = vunpack.c.0.s8 %v5329
    %v5331 = vlaneseq
    %v5332 = vshrl.u32 %v5331, 7
    %v5333 = vsub.s32 %v5330, %v5332
    %v5334 = vrot.slane %v5306, %v5333
    %v5335 = vcombine.high %v5313, %v5313
    %v5336 = vcombine.high %v5320, %v5320
    %v5337 = vcombine.high %v5327, %v5327
    %v5338 = vcombine.high %v5334, %v5334
    %v5339 = vcombine.high %v4817, %v4817
    %v5341 = vunpack.c.l.s4 1966171168
    %v5342 = vunpack.c.0.s8 %v5341
    %v5343 = vlaneseq
    %v5344 = vshrl.u32 %v5343, 7
    %v5345 = vsub.s32 %v5342, %v5344
    %v5346 = vrot.slane %v4817, %v5345
    %v5348 = vunpack.c.l.s4 1966171168
    %v5349 = vunpack.c.0.s8 %v5348
    %v5350 = vlaneseq
    %v5351 = vshrl.u32 %v5350, 7
    %v5352 = vsub.s32 %v5349, %v5351
    %v5353 = vrot.slane %v5339, %v5352
    %v5354 = vcombine.high %v5346, %v5346
    %v5355 = vcombine.high %v5353, %v5353
    %v5357 = vunpack.c.l.s4 1966171168
    %v5358 = vunpack.c.0.s8 %v5357
    %v5359 = vlaneseq
    %v5360 = vshrl.u32 %v5359, 7
    %v5361 = vsub.s32 %v5358, %v5360
    %v5362 = vrot.slane %v5346, %v5361
    %v5364 = vunpack.c.l.s4 1966171168
    %v5365 = vunpack.c.0.s8 %v5364
    %v5366 = vlaneseq
    %v5367 = vshrl.u32 %v5366, 7
    %v5368 = vsub.s32 %v5365, %v5367
    %v5369 = vrot.slane %v5353, %v5368
    %v5371 = vunpack.c.l.s4 1966171168
    %v5372 = vunpack.c.0.s8 %v5371
    %v5373 = vlaneseq
    %v5374 = vshrl.u32 %v5373, 7
    %v5375 = vsub.s32 %v5372, %v5374
    %v5376 = vrot.slane %v5354, %v5375
    %v5378 = vunpack.c.l.s4 1966171168
    %v5379 = vunpack.c.0.s8 %v5378
    %v5380 = vlaneseq
    %v5381 = vshrl.u32 %v5380, 7
    %v5382 = vsub.s32 %v5379, %v5381
    %v5383 = vrot.slane %v5355, %v5382
    %v5384 = vcombine.high %v5362, %v5362
    %v5385 = vcombine.high %v5369, %v5369
    %v5386 = vcombine.high %v5376, %v5376
    %v5387 = vcombine.high %v5383, %v5383
    %v5388 = vcombine.high %v4822, %v4822
    %v5390 = vunpack.c.l.s4 1966171168
    %v5391 = vunpack.c.0.s8 %v5390
    %v5392 = vlaneseq
    %v5393 = vshrl.u32 %v5392, 7
    %v5394 = vsub.s32 %v5391, %v5393
    %v5395 = vrot.slane %v4822, %v5394
    %v5397 = vunpack.c.l.s4 1966171168
    %v5398 = vunpack.c.0.s8 %v5397
    %v5399 = vlaneseq
    %v5400 = vshrl.u32 %v5399, 7
    %v5401 = vsub.s32 %v5398, %v5400
    %v5402 = vrot.slane %v5388, %v5401
    %v5403 = vcombine.high %v5395, %v5395
    %v5404 = vcombine.high %v5402, %v5402
    %v5406 = vunpack.c.l.s4 1966171168
    %v5407 = vunpack.c.0.s8 %v5406
    %v5408 = vlaneseq
    %v5409 = vshrl.u32 %v5408, 7
    %v5410 = vsub.s32 %v5407, %v5409
    %v5411 = vrot.slane %v5395, %v5410
    %v5413 = vunpack.c.l.s4 1966171168
    %v5414 = vunpack.c.0.s8 %v5413
    %v5415 = vlaneseq
    %v5416 = vshrl.u32 %v5415, 7
    %v5417 = vsub.s32 %v5414, %v5416
    %v5418 = vrot.slane %v5402, %v5417
    %v5420 = vunpack.c.l.s4 1966171168
    %v5421 = vunpack.c.0.s8 %v5420
    %v5422 = vlaneseq
    %v5423 = vshrl.u32 %v5422, 7
    %v5424 = vsub.s32 %v5421, %v5423
    %v5425 = vrot.slane %v5403, %v5424
    %v5427 = vunpack.c.l.s4 1966171168
    %v5428 = vunpack.c.0.s8 %v5427
    %v5429 = vlaneseq
    %v5430 = vshrl.u32 %v5429, 7
    %v5431 = vsub.s32 %v5428, %v5430
    %v5432 = vrot.slane %v5404, %v5431
    %v5433 = vcombine.high %v5411, %v5411
    %v5434 = vcombine.high %v5418, %v5418
    %v5435 = vcombine.high %v5425, %v5425
    %v5436 = vcombine.high %v5432, %v5432
    %v5437 = vcombine.high %v4827, %v4827
    %v5439 = vunpack.c.l.s4 1966171168
    %v5440 = vunpack.c.0.s8 %v5439
    %v5441 = vlaneseq
    %v5442 = vshrl.u32 %v5441, 7
    %v5443 = vsub.s32 %v5440, %v5442
    %v5444 = vrot.slane %v4827, %v5443
    %v5446 = vunpack.c.l.s4 1966171168
    %v5447 = vunpack.c.0.s8 %v5446
    %v5448 = vlaneseq
    %v5449 = vshrl.u32 %v5448, 7
    %v5450 = vsub.s32 %v5447, %v5449
    %v5451 = vrot.slane %v5437, %v5450
    %v5452 = vcombine.high %v5444, %v5444
    %v5453 = vcombine.high %v5451, %v5451
    %v5455 = vunpack.c.l.s4 1966171168
    %v5456 = vunpack.c.0.s8 %v5455
    %v5457 = vlaneseq
    %v5458 = vshrl.u32 %v5457, 7
    %v5459 = vsub.s32 %v5456, %v5458
    %v5460 = vrot.slane %v5444, %v5459
    %v5462 = vunpack.c.l.s4 1966171168
    %v5463 = vunpack.c.0.s8 %v5462
    %v5464 = vlaneseq
    %v5465 = vshrl.u32 %v5464, 7
    %v5466 = vsub.s32 %v5463, %v5465
    %v5467 = vrot.slane %v5451, %v5466
    %v5469 = vunpack.c.l.s4 1966171168
    %v5470 = vunpack.c.0.s8 %v5469
    %v5471 = vlaneseq
    %v5472 = vshrl.u32 %v5471, 7
    %v5473 = vsub.s32 %v5470, %v5472
    %v5474 = vrot.slane %v5452, %v5473
    %v5476 = vunpack.c.l.s4 1966171168
    %v5477 = vunpack.c.0.s8 %v5476
    %v5478 = vlaneseq
    %v5479 = vshrl.u32 %v5478, 7
    %v5480 = vsub.s32 %v5477, %v5479
    %v5481 = vrot.slane %v5453, %v5480
    %v5482 = vcombine.high %v5460, %v5460
    %v5483 = vcombine.high %v5467, %v5467
    %v5484 = vcombine.high %v5474, %v5474
    %v5485 = vcombine.high %v5481, %v5481
    %v5487 = vunpack.c.l.s4 1966171168
    %v5488 = vunpack.c.0.s8 %v5487
    %v5489 = vlaneseq
    %v5490 = vshrl.u32 %v5489, 7
    %v5491 = vsub.s32 %v5488, %v5490
    %v5492 = vrot.slane %v4832, %v5491
    %v5493 = vcombine.high %v5492, %v5492
    %v5495 = vunpack.c.l.s4 1966171168
    %v5496 = vunpack.c.0.s8 %v5495
    %v5497 = vlaneseq
    %v5498 = vshrl.u32 %v5497, 7
    %v5499 = vsub.s32 %v5496, %v5498
    %v5500 = vrot.slane %v5492, %v5499
    %v5502 = vunpack.c.l.s4 1966171168
    %v5503 = vunpack.c.0.s8 %v5502
    %v5504 = vlaneseq
    %v5505 = vshrl.u32 %v5504, 7
    %v5506 = vsub.s32 %v5503, %v5505
    %v5507 = vrot.slane %v5493, %v5506
    %v5614 = vmax.f32 %v4872, 0.0
    %v5615 = vmax.f32 %v4886, 0.0
    %v5616 = vmax.f32 %v4894, 0.0
    %v5617 = vmax.f32 %v4896, 0.0
    %v5618 = vmax.f32 %v4879, 0.0
    %v5619 = vmax.f32 %v4893, 0.0
    %v5620 = vmax.f32 %v4895, 0.0
    %v5621 = vmax.f32 %v4897, 0.0
    %v5622 = vmax.f32 %v4921, 0.0
    %v5623 = vmax.f32 %v4935, 0.0
    %v5624 = vmax.f32 %v4943, 0.0
    %v5625 = vmax.f32 %v4945, 0.0
    %v5626 = vmax.f32 %v4928, 0.0
    %v5627 = vmax.f32 %v4942, 0.0
    %v5628 = vmax.f32 %v4944, 0.0
    %v5629 = vmax.f32 %v4946, 0.0
    %v5630 = vmax.f32 %v4970, 0.0
    %v5631 = vmax.f32 %v4984, 0.0
    %v5632 = vmax.f32 %v4992, 0.0
    %v5633 = vmax.f32 %v4994, 0.0
    %v5634 = vmax.f32 %v4977, 0.0
    %v5635 = vmax.f32 %v4991, 0.0
    %v5636 = vmax.f32 %v4993, 0.0
    %v5637 = vmax.f32 %v4995, 0.0
    %v5638 = vmax.f32 %v5019, 0.0
    %v5639 = vmax.f32 %v5033, 0.0
    %v5640 = vmax.f32 %v5041, 0.0
    %v5641 = vmax.f32 %v5043, 0.0
    %v5642 = vmax.f32 %v5026, 0.0
    %v5643 = vmax.f32 %v5040, 0.0
    %v5644 = vmax.f32 %v5042, 0.0
    %v5645 = vmax.f32 %v5044, 0.0
    %v5646 = vmax.f32 %v5068, 0.0
    %v5647 = vmax.f32 %v5082, 0.0
    %v5648 = vmax.f32 %v5090, 0.0
    %v5649 = vmax.f32 %v5092, 0.0
    %v5650 = vmax.f32 %v5075, 0.0
    %v5651 = vmax.f32 %v5089, 0.0
    %v5652 = vmax.f32 %v5091, 0.0
    %v5653 = vmax.f32 %v5093, 0.0
    %v5654 = vmax.f32 %v5117, 0.0
    %v5655 = vmax.f32 %v5131, 0.0
    %v5656 = vmax.f32 %v5139, 0.0
    %v5657 = vmax.f32 %v5141, 0.0
    %v5658 = vmax.f32 %v5124, 0.0
    %v5659 = vmax.f32 %v5138, 0.0
    %v5660 = vmax.f32 %v5140, 0.0
    %v5661 = vmax.f32 %v5142, 0.0
    %v5662 = vmax.f32 %v5166, 0.0
    %v5663 = vmax.f32 %v5180, 0.0
    %v5664 = vmax.f32 %v5188, 0.0
    %v5665 = vmax.f32 %v5190, 0.0
    %v5666 = vmax.f32 %v5173, 0.0
    %v5667 = vmax.f32 %v5187, 0.0
    %v5668 = vmax.f32 %v5189, 0.0
    %v5669 = vmax.f32 %v5191, 0.0
    %v5670 = vmax.f32 %v5215, 0.0
    %v5671 = vmax.f32 %v5229, 0.0
    %v5672 = vmax.f32 %v5237, 0.0
    %v5673 = vmax.f32 %v5239, 0.0
    %v5674 = vmax.f32 %v5222, 0.0
    %v5675 = vmax.f32 %v5236, 0.0
    %v5676 = vmax.f32 %v5238, 0.0
    %v5677 = vmax.f32 %v5240, 0.0
    %v5678 = vmax.f32 %v5264, 0.0
    %v5679 = vmax.f32 %v5278, 0.0
    %v5680 = vmax.f32 %v5286, 0.0
    %v5681 = vmax.f32 %v5288, 0.0
    %v5682 = vmax.f32 %v5271, 0.0
    %v5683 = vmax.f32 %v5285, 0.0
    %v5684 = vmax.f32 %v5287, 0.0
    %v5685 = vmax.f32 %v5289, 0.0
    %v5686 = vmax.f32 %v5313, 0.0
    %v5687 = vmax.f32 %v5327, 0.0
    %v5688 = vmax.f32 %v5335, 0.0
    %v5689 = vmax.f32 %v5337, 0.0
    %v5690 = vmax.f32 %v5320, 0.0
    %v5691 = vmax.f32 %v5334, 0.0
    %v5692 = vmax.f32 %v5336, 0.0
    %v5693 = vmax.f32 %v5338, 0.0
    %v5694 = vmax.f32 %v5362, 0.0
    %v5695 = vmax.f32 %v5376, 0.0
    %v5696 = vmax.f32 %v5384, 0.0
    %v5697 = vmax.f32 %v5386, 0.0
    %v5698 = vmax.f32 %v5369, 0.0
    %v5699 = vmax.f32 %v5383, 0.0
    %v5700 = vmax.f32 %v5385, 0.0
    %v5701 = vmax.f32 %v5387, 0.0
    %v5702 = vmax.f32 %v5411, 0.0
    %v5703 = vmax.f32 %v5425, 0.0
    %v5704 = vmax.f32 %v5433, 0.0
    %v5705 = vmax.f32 %v5435, 0.0
    %v5706 = vmax.f32 %v5418, 0.0
    %v5707 = vmax.f32 %v5432, 0.0
    %v5708 = vmax.f32 %v5434, 0.0
    %v5709 = vmax.f32 %v5436, 0.0
    %v5710 = vmax.f32 %v5460, 0.0
    %v5711 = vmax.f32 %v5474, 0.0
    %v5712 = vmax.f32 %v5482, 0.0
    %v5713 = vmax.f32 %v5484, 0.0
    %v5714 = vmax.f32 %v5467, 0.0
    %v5715 = vmax.f32 %v5481, 0.0
    %v5716 = vmax.f32 %v5483, 0.0
    %v5717 = vmax.f32 %v5485, 0.0
    %v5718 = vmax.f32 %v5500, 0.0
    %v5719 = vmax.f32 %v5507, 0.0
    %v5720 = vld [vmem:[#allocation2] sm:$0x3]
    %v5827 = vcombine.low %v5614, %v5615
    %v5828 = vcombine.low %v5616, %v5617
    %v5829 = vcombine.low %v5618, %v5619
    %v5830 = vcombine.low %v5620, %v5621
    %v5832 = vunpack.c.l.s4 1966171168
    %v5833 = vunpack.c.0.s8 %v5832
    %v5834 = vlaneseq
    %v5835 = vshrl.u32 %v5834, 7
    %v5836 = vsub.s32 %v5833, %v5835
    %v5837 = vrot.slane %v5827, %v5836
    %v5839 = vunpack.c.l.s4 1966171168
    %v5840 = vunpack.c.0.s8 %v5839
    %v5841 = vlaneseq
    %v5842 = vshrl.u32 %v5841, 7
    %v5843 = vsub.s32 %v5840, %v5842
    %v5844 = vrot.slane %v5828, %v5843
    %v5846 = vunpack.c.l.s4 1966171168
    %v5847 = vunpack.c.0.s8 %v5846
    %v5848 = vlaneseq
    %v5849 = vshrl.u32 %v5848, 7
    %v5850 = vsub.s32 %v5847, %v5849
    %v5851 = vrot.slane %v5829, %v5850
    %v5853 = vunpack.c.l.s4 1966171168
    %v5854 = vunpack.c.0.s8 %v5853
    %v5855 = vlaneseq
    %v5856 = vshrl.u32 %v5855, 7
    %v5857 = vsub.s32 %v5854, %v5856
    %v5858 = vrot.slane %v5830, %v5857
    %v5859 = vcombine.low %v5837, %v5844
    %v5860 = vcombine.low %v5851, %v5858
    %v5862 = vunpack.c.l.s4 1966171168
    %v5863 = vunpack.c.0.s8 %v5862
    %v5864 = vlaneseq
    %v5865 = vshrl.u32 %v5864, 7
    %v5866 = vsub.s32 %v5863, %v5865
    %v5867 = vrot.slane %v5859, %v5866
    %v5869 = vunpack.c.l.s4 1966171168
    %v5870 = vunpack.c.0.s8 %v5869
    %v5871 = vlaneseq
    %v5872 = vshrl.u32 %v5871, 7
    %v5873 = vsub.s32 %v5870, %v5872
    %v5874 = vrot.slane %v5860, %v5873
    %v5875 = vcombine.low %v5867, %v5874
    %v5876 = vcombine.low %v5622, %v5623
    %v5877 = vcombine.low %v5624, %v5625
    %v5878 = vcombine.low %v5626, %v5627
    %v5879 = vcombine.low %v5628, %v5629
    %v5881 = vunpack.c.l.s4 1966171168
    %v5882 = vunpack.c.0.s8 %v5881
    %v5883 = vlaneseq
    %v5884 = vshrl.u32 %v5883, 7
    %v5885 = vsub.s32 %v5882, %v5884
    %v5886 = vrot.slane %v5876, %v5885
    %v5888 = vunpack.c.l.s4 1966171168
    %v5889 = vunpack.c.0.s8 %v5888
    %v5890 = vlaneseq
    %v5891 = vshrl.u32 %v5890, 7
    %v5892 = vsub.s32 %v5889, %v5891
    %v5893 = vrot.slane %v5877, %v5892
    %v5895 = vunpack.c.l.s4 1966171168
    %v5896 = vunpack.c.0.s8 %v5895
    %v5897 = vlaneseq
    %v5898 = vshrl.u32 %v5897, 7
    %v5899 = vsub.s32 %v5896, %v5898
    %v5900 = vrot.slane %v5878, %v5899
    %v5902 = vunpack.c.l.s4 1966171168
    %v5903 = vunpack.c.0.s8 %v5902
    %v5904 = vlaneseq
    %v5905 = vshrl.u32 %v5904, 7
    %v5906 = vsub.s32 %v5903, %v5905
    %v5907 = vrot.slane %v5879, %v5906
    %v5908 = vcombine.low %v5886, %v5893
    %v5909 = vcombine.low %v5900, %v5907
    %v5911 = vunpack.c.l.s4 1966171168
    %v5912 = vunpack.c.0.s8 %v5911
    %v5913 = vlaneseq
    %v5914 = vshrl.u32 %v5913, 7
    %v5915 = vsub.s32 %v5912, %v5914
    %v5916 = vrot.slane %v5908, %v5915
    %v5918 = vunpack.c.l.s4 1966171168
    %v5919 = vunpack.c.0.s8 %v5918
    %v5920 = vlaneseq
    %v5921 = vshrl.u32 %v5920, 7
    %v5922 = vsub.s32 %v5919, %v5921
    %v5923 = vrot.slane %v5909, %v5922
    %v5924 = vcombine.low %v5916, %v5923
    %v5925 = vcombine.low %v5630, %v5631
    %v5926 = vcombine.low %v5632, %v5633
    %v5927 = vcombine.low %v5634, %v5635
    %v5928 = vcombine.low %v5636, %v5637
    %v5930 = vunpack.c.l.s4 1966171168
    %v5931 = vunpack.c.0.s8 %v5930
    %v5932 = vlaneseq
    %v5933 = vshrl.u32 %v5932, 7
    %v5934 = vsub.s32 %v5931, %v5933
    %v5935 = vrot.slane %v5925, %v5934
    %v5937 = vunpack.c.l.s4 1966171168
    %v5938 = vunpack.c.0.s8 %v5937
    %v5939 = vlaneseq
    %v5940 = vshrl.u32 %v5939, 7
    %v5941 = vsub.s32 %v5938, %v5940
    %v5942 = vrot.slane %v5926, %v5941
    %v5944 = vunpack.c.l.s4 1966171168
    %v5945 = vunpack.c.0.s8 %v5944
    %v5946 = vlaneseq
    %v5947 = vshrl.u32 %v5946, 7
    %v5948 = vsub.s32 %v5945, %v5947
    %v5949 = vrot.slane %v5927, %v5948
    %v5951 = vunpack.c.l.s4 1966171168
    %v5952 = vunpack.c.0.s8 %v5951
    %v5953 = vlaneseq
    %v5954 = vshrl.u32 %v5953, 7
    %v5955 = vsub.s32 %v5952, %v5954
    %v5956 = vrot.slane %v5928, %v5955
    %v5957 = vcombine.low %v5935, %v5942
    %v5958 = vcombine.low %v5949, %v5956
    %v5960 = vunpack.c.l.s4 1966171168
    %v5961 = vunpack.c.0.s8 %v5960
    %v5962 = vlaneseq
    %v5963 = vshrl.u32 %v5962, 7
    %v5964 = vsub.s32 %v5961, %v5963
    %v5965 = vrot.slane %v5957, %v5964
    %v5967 = vunpack.c.l.s4 1966171168
    %v5968 = vunpack.c.0.s8 %v5967
    %v5969 = vlaneseq
    %v5970 = vshrl.u32 %v5969, 7
    %v5971 = vsub.s32 %v5968, %v5970
    %v5972 = vrot.slane %v5958, %v5971
    %v5973 = vcombine.low %v5965, %v5972
    %v5974 = vcombine.low %v5638, %v5639
    %v5975 = vcombine.low %v5640, %v5641
    %v5976 = vcombine.low %v5642, %v5643
    %v5977 = vcombine.low %v5644, %v5645
    %v5979 = vunpack.c.l.s4 1966171168
    %v5980 = vunpack.c.0.s8 %v5979
    %v5981 = vlaneseq
    %v5982 = vshrl.u32 %v5981, 7
    %v5983 = vsub.s32 %v5980, %v5982
    %v5984 = vrot.slane %v5974, %v5983
    %v5986 = vunpack.c.l.s4 1966171168
    %v5987 = vunpack.c.0.s8 %v5986
    %v5988 = vlaneseq
    %v5989 = vshrl.u32 %v5988, 7
    %v5990 = vsub.s32 %v5987, %v5989
    %v5991 = vrot.slane %v5975, %v5990
    %v5993 = vunpack.c.l.s4 1966171168
    %v5994 = vunpack.c.0.s8 %v5993
    %v5995 = vlaneseq
    %v5996 = vshrl.u32 %v5995, 7
    %v5997 = vsub.s32 %v5994, %v5996
    %v5998 = vrot.slane %v5976, %v5997
    %v6000 = vunpack.c.l.s4 1966171168
    %v6001 = vunpack.c.0.s8 %v6000
    %v6002 = vlaneseq
    %v6003 = vshrl.u32 %v6002, 7
    %v6004 = vsub.s32 %v6001, %v6003
    %v6005 = vrot.slane %v5977, %v6004
    %v6006 = vcombine.low %v5984, %v5991
    %v6007 = vcombine.low %v5998, %v6005
    %v6009 = vunpack.c.l.s4 1966171168
    %v6010 = vunpack.c.0.s8 %v6009
    %v6011 = vlaneseq
    %v6012 = vshrl.u32 %v6011, 7
    %v6013 = vsub.s32 %v6010, %v6012
    %v6014 = vrot.slane %v6006, %v6013
    %v6016 = vunpack.c.l.s4 1966171168
    %v6017 = vunpack.c.0.s8 %v6016
    %v6018 = vlaneseq
    %v6019 = vshrl.u32 %v6018, 7
    %v6020 = vsub.s32 %v6017, %v6019
    %v6021 = vrot.slane %v6007, %v6020
    %v6022 = vcombine.low %v6014, %v6021
    %v6023 = vcombine.low %v5646, %v5647
    %v6024 = vcombine.low %v5648, %v5649
    %v6025 = vcombine.low %v5650, %v5651
    %v6026 = vcombine.low %v5652, %v5653
    %v6028 = vunpack.c.l.s4 1966171168
    %v6029 = vunpack.c.0.s8 %v6028
    %v6030 = vlaneseq
    %v6031 = vshrl.u32 %v6030, 7
    %v6032 = vsub.s32 %v6029, %v6031
    %v6033 = vrot.slane %v6023, %v6032
    %v6035 = vunpack.c.l.s4 1966171168
    %v6036 = vunpack.c.0.s8 %v6035
    %v6037 = vlaneseq
    %v6038 = vshrl.u32 %v6037, 7
    %v6039 = vsub.s32 %v6036, %v6038
    %v6040 = vrot.slane %v6024, %v6039
    %v6042 = vunpack.c.l.s4 1966171168
    %v6043 = vunpack.c.0.s8 %v6042
    %v6044 = vlaneseq
    %v6045 = vshrl.u32 %v6044, 7
    %v6046 = vsub.s32 %v6043, %v6045
    %v6047 = vrot.slane %v6025, %v6046
    %v6049 = vunpack.c.l.s4 1966171168
    %v6050 = vunpack.c.0.s8 %v6049
    %v6051 = vlaneseq
    %v6052 = vshrl.u32 %v6051, 7
    %v6053 = vsub.s32 %v6050, %v6052
    %v6054 = vrot.slane %v6026, %v6053
    %v6055 = vcombine.low %v6033, %v6040
    %v6056 = vcombine.low %v6047, %v6054
    %v6058 = vunpack.c.l.s4 1966171168
    %v6059 = vunpack.c.0.s8 %v6058
    %v6060 = vlaneseq
    %v6061 = vshrl.u32 %v6060, 7
    %v6062 = vsub.s32 %v6059, %v6061
    %v6063 = vrot.slane %v6055, %v6062
    %v6065 = vunpack.c.l.s4 1966171168
    %v6066 = vunpack.c.0.s8 %v6065
    %v6067 = vlaneseq
    %v6068 = vshrl.u32 %v6067, 7
    %v6069 = vsub.s32 %v6066, %v6068
    %v6070 = vrot.slane %v6056, %v6069
    %v6071 = vcombine.low %v6063, %v6070
    %v6072 = vcombine.low %v5654, %v5655
    %v6073 = vcombine.low %v5656, %v5657
    %v6074 = vcombine.low %v5658, %v5659
    %v6075 = vcombine.low %v5660, %v5661
    %v6077 = vunpack.c.l.s4 1966171168
    %v6078 = vunpack.c.0.s8 %v6077
    %v6079 = vlaneseq
    %v6080 = vshrl.u32 %v6079, 7
    %v6081 = vsub.s32 %v6078, %v6080
    %v6082 = vrot.slane %v6072, %v6081
    %v6084 = vunpack.c.l.s4 1966171168
    %v6085 = vunpack.c.0.s8 %v6084
    %v6086 = vlaneseq
    %v6087 = vshrl.u32 %v6086, 7
    %v6088 = vsub.s32 %v6085, %v6087
    %v6089 = vrot.slane %v6073, %v6088
    %v6091 = vunpack.c.l.s4 1966171168
    %v6092 = vunpack.c.0.s8 %v6091
    %v6093 = vlaneseq
    %v6094 = vshrl.u32 %v6093, 7
    %v6095 = vsub.s32 %v6092, %v6094
    %v6096 = vrot.slane %v6074, %v6095
    %v6098 = vunpack.c.l.s4 1966171168
    %v6099 = vunpack.c.0.s8 %v6098
    %v6100 = vlaneseq
    %v6101 = vshrl.u32 %v6100, 7
    %v6102 = vsub.s32 %v6099, %v6101
    %v6103 = vrot.slane %v6075, %v6102
    %v6104 = vcombine.low %v6082, %v6089
    %v6105 = vcombine.low %v6096, %v6103
    %v6107 = vunpack.c.l.s4 1966171168
    %v6108 = vunpack.c.0.s8 %v6107
    %v6109 = vlaneseq
    %v6110 = vshrl.u32 %v6109, 7
    %v6111 = vsub.s32 %v6108, %v6110
    %v6112 = vrot.slane %v6104, %v6111
    %v6114 = vunpack.c.l.s4 1966171168
    %v6115 = vunpack.c.0.s8 %v6114
    %v6116 = vlaneseq
    %v6117 = vshrl.u32 %v6116, 7
    %v6118 = vsub.s32 %v6115, %v6117
    %v6119 = vrot.slane %v6105, %v6118
    %v6120 = vcombine.low %v6112, %v6119
    %v6121 = vcombine.low %v5662, %v5663
    %v6122 = vcombine.low %v5664, %v5665
    %v6124 = vunpack.c.l.s4 1966171168
    %v6125 = vunpack.c.0.s8 %v6124
    %v6126 = vlaneseq
    %v6127 = vshrl.u32 %v6126, 7
    %v6128 = vsub.s32 %v6125, %v6127
    %v6129 = vrot.slane %v6121, %v6128
    %v6131 = vunpack.c.l.s4 1966171168
    %v6132 = vunpack.c.0.s8 %v6131
    %v6133 = vlaneseq
    %v6134 = vshrl.u32 %v6133, 7
    %v6135 = vsub.s32 %v6132, %v6134
    %v6136 = vrot.slane %v6122, %v6135
    %v6138 = vunpack.c.l.s4 1966171168
    %v6139 = vunpack.c.0.s8 %v6138
    %v6140 = vlaneseq
    %v6141 = vshrl.u32 %v6140, 7
    %v6142 = vsub.s32 %v6139, %v6141
    %v6143 = vrot.slane %v5666, %v6142
    %v6144 = vcombine.low %v6129, %v6136
    %v6146 = vunpack.c.l.s4 1966171168
    %v6147 = vunpack.c.0.s8 %v6146
    %v6148 = vlaneseq
    %v6149 = vshrl.u32 %v6148, 7
    %v6150 = vsub.s32 %v6147, %v6149
    %v6151 = vrot.slane %v6144, %v6150
    %v6153 = vunpack.c.l.s4 1966171168
    %v6154 = vunpack.c.0.s8 %v6153
    %v6155 = vlaneseq
    %v6156 = vshrl.u32 %v6155, 7
    %v6157 = vsub.s32 %v6154, %v6156
    %v6158 = vrot.slane %v6143, %v6157
    %v6159 = vcombine.low %v6151, %v6158
    %v6160 = vcombine.low %v5667, %v5668
    %v6161 = vcombine.low %v5669, %v5670
    %v6162 = vcombine.low %v5671, %v5672
    %v6163 = vcombine.low %v5673, %v5674
    %v6165 = vunpack.c.l.s4 1966171168
    %v6166 = vunpack.c.0.s8 %v6165
    %v6167 = vlaneseq
    %v6168 = vshrl.u32 %v6167, 7
    %v6169 = vsub.s32 %v6166, %v6168
    %v6170 = vrot.slane %v6160, %v6169
    %v6172 = vunpack.c.l.s4 1966171168
    %v6173 = vunpack.c.0.s8 %v6172
    %v6174 = vlaneseq
    %v6175 = vshrl.u32 %v6174, 7
    %v6176 = vsub.s32 %v6173, %v6175
    %v6177 = vrot.slane %v6161, %v6176
    %v6179 = vunpack.c.l.s4 1966171168
    %v6180 = vunpack.c.0.s8 %v6179
    %v6181 = vlaneseq
    %v6182 = vshrl.u32 %v6181, 7
    %v6183 = vsub.s32 %v6180, %v6182
    %v6184 = vrot.slane %v6162, %v6183
    %v6186 = vunpack.c.l.s4 1966171168
    %v6187 = vunpack.c.0.s8 %v6186
    %v6188 = vlaneseq
    %v6189 = vshrl.u32 %v6188, 7
    %v6190 = vsub.s32 %v6187, %v6189
    %v6191 = vrot.slane %v6163, %v6190
    %v6192 = vcombine.low %v6170, %v6177
    %v6193 = vcombine.low %v6184, %v6191
    %v6195 = vunpack.c.l.s4 1966171168
    %v6196 = vunpack.c.0.s8 %v6195
    %v6197 = vlaneseq
    %v6198 = vshrl.u32 %v6197, 7
    %v6199 = vsub.s32 %v6196, %v6198
    %v6200 = vrot.slane %v6192, %v6199
    %v6202 = vunpack.c.l.s4 1966171168
    %v6203 = vunpack.c.0.s8 %v6202
    %v6204 = vlaneseq
    %v6205 = vshrl.u32 %v6204, 7
    %v6206 = vsub.s32 %v6203, %v6205
    %v6207 = vrot.slane %v6193, %v6206
    %v6208 = vcombine.low %v6200, %v6207
    %v6209 = vcombine.low %v5675, %v5676
    %v6210 = vcombine.low %v5677, %v5678
    %v6211 = vcombine.low %v5679, %v5680
    %v6212 = vcombine.low %v5681, %v5682
    %v6214 = vunpack.c.l.s4 1966171168
    %v6215 = vunpack.c.0.s8 %v6214
    %v6216 = vlaneseq
    %v6217 = vshrl.u32 %v6216, 7
    %v6218 = vsub.s32 %v6215, %v6217
    %v6219 = vrot.slane %v6209, %v6218
    %v6221 = vunpack.c.l.s4 1966171168
    %v6222 = vunpack.c.0.s8 %v6221
    %v6223 = vlaneseq
    %v6224 = vshrl.u32 %v6223, 7
    %v6225 = vsub.s32 %v6222, %v6224
    %v6226 = vrot.slane %v6210, %v6225
    %v6228 = vunpack.c.l.s4 1966171168
    %v6229 = vunpack.c.0.s8 %v6228
    %v6230 = vlaneseq
    %v6231 = vshrl.u32 %v6230, 7
    %v6232 = vsub.s32 %v6229, %v6231
    %v6233 = vrot.slane %v6211, %v6232
    %v6235 = vunpack.c.l.s4 1966171168
    %v6236 = vunpack.c.0.s8 %v6235
    %v6237 = vlaneseq
    %v6238 = vshrl.u32 %v6237, 7
    %v6239 = vsub.s32 %v6236, %v6238
    %v6240 = vrot.slane %v6212, %v6239
    %v6241 = vcombine.low %v6219, %v6226
    %v6242 = vcombine.low %v6233, %v6240
    %v6244 = vunpack.c.l.s4 1966171168
    %v6245 = vunpack.c.0.s8 %v6244
    %v6246 = vlaneseq
    %v6247 = vshrl.u32 %v6246, 7
    %v6248 = vsub.s32 %v6245, %v6247
    %v6249 = vrot.slane %v6241, %v6248
    %v6251 = vunpack.c.l.s4 1966171168
    %v6252 = vunpack.c.0.s8 %v6251
    %v6253 = vlaneseq
    %v6254 = vshrl.u32 %v6253, 7
    %v6255 = vsub.s32 %v6252, %v6254
    %v6256 = vrot.slane %v6242, %v6255
    %v6257 = vcombine.low %v6249, %v6256
    %v6258 = vcombine.low %v5683, %v5684
    %v6259 = vcombine.low %v5685, %v5686
    %v6260 = vcombine.low %v5687, %v5688
    %v6261 = vcombine.low %v5689, %v5690
    %v6263 = vunpack.c.l.s4 1966171168
    %v6264 = vunpack.c.0.s8 %v6263
    %v6265 = vlaneseq
    %v6266 = vshrl.u32 %v6265, 7
    %v6267 = vsub.s32 %v6264, %v6266
    %v6268 = vrot.slane %v6258, %v6267
    %v6270 = vunpack.c.l.s4 1966171168
    %v6271 = vunpack.c.0.s8 %v6270
    %v6272 = vlaneseq
    %v6273 = vshrl.u32 %v6272, 7
    %v6274 = vsub.s32 %v6271, %v6273
    %v6275 = vrot.slane %v6259, %v6274
    %v6277 = vunpack.c.l.s4 1966171168
    %v6278 = vunpack.c.0.s8 %v6277
    %v6279 = vlaneseq
    %v6280 = vshrl.u32 %v6279, 7
    %v6281 = vsub.s32 %v6278, %v6280
    %v6282 = vrot.slane %v6260, %v6281
    %v6284 = vunpack.c.l.s4 1966171168
    %v6285 = vunpack.c.0.s8 %v6284
    %v6286 = vlaneseq
    %v6287 = vshrl.u32 %v6286, 7
    %v6288 = vsub.s32 %v6285, %v6287
    %v6289 = vrot.slane %v6261, %v6288
    %v6290 = vcombine.low %v6268, %v6275
    %v6291 = vcombine.low %v6282, %v6289
    %v6293 = vunpack.c.l.s4 1966171168
    %v6294 = vunpack.c.0.s8 %v6293
    %v6295 = vlaneseq
    %v6296 = vshrl.u32 %v6295, 7
    %v6297 = vsub.s32 %v6294, %v6296
    %v6298 = vrot.slane %v6290, %v6297
    %v6300 = vunpack.c.l.s4 1966171168
    %v6301 = vunpack.c.0.s8 %v6300
    %v6302 = vlaneseq
    %v6303 = vshrl.u32 %v6302, 7
    %v6304 = vsub.s32 %v6301, %v6303
    %v6305 = vrot.slane %v6291, %v6304
    %v6306 = vcombine.low %v6298, %v6305
    %v6307 = vcombine.low %v5691, %v5692
    %v6308 = vcombine.low %v5693, %v5694
    %v6309 = vcombine.low %v5695, %v5696
    %v6310 = vcombine.low %v5697, %v5698
    %v6312 = vunpack.c.l.s4 1966171168
    %v6313 = vunpack.c.0.s8 %v6312
    %v6314 = vlaneseq
    %v6315 = vshrl.u32 %v6314, 7
    %v6316 = vsub.s32 %v6313, %v6315
    %v6317 = vrot.slane %v6307, %v6316
    %v6319 = vunpack.c.l.s4 1966171168
    %v6320 = vunpack.c.0.s8 %v6319
    %v6321 = vlaneseq
    %v6322 = vshrl.u32 %v6321, 7
    %v6323 = vsub.s32 %v6320, %v6322
    %v6324 = vrot.slane %v6308, %v6323
    %v6326 = vunpack.c.l.s4 1966171168
    %v6327 = vunpack.c.0.s8 %v6326
    %v6328 = vlaneseq
    %v6329 = vshrl.u32 %v6328, 7
    %v6330 = vsub.s32 %v6327, %v6329
    %v6331 = vrot.slane %v6309, %v6330
    %v6333 = vunpack.c.l.s4 1966171168
    %v6334 = vunpack.c.0.s8 %v6333
    %v6335 = vlaneseq
    %v6336 = vshrl.u32 %v6335, 7
    %v6337 = vsub.s32 %v6334, %v6336
    %v6338 = vrot.slane %v6310, %v6337
    %v6339 = vcombine.low %v6317, %v6324
    %v6340 = vcombine.low %v6331, %v6338
    %v6342 = vunpack.c.l.s4 1966171168
    %v6343 = vunpack.c.0.s8 %v6342
    %v6344 = vlaneseq
    %v6345 = vshrl.u32 %v6344, 7
    %v6346 = vsub.s32 %v6343, %v6345
    %v6347 = vrot.slane %v6339, %v6346
    %v6349 = vunpack.c.l.s4 1966171168
    %v6350 = vunpack.c.0.s8 %v6349
    %v6351 = vlaneseq
    %v6352 = vshrl.u32 %v6351, 7
    %v6353 = vsub.s32 %v6350, %v6352
    %v6354 = vrot.slane %v6340, %v6353
    %v6355 = vcombine.low %v6347, %v6354
    %v6356 = vcombine.low %v5699, %v5700
    %v6357 = vcombine.low %v5701, %v5702
    %v6358 = vcombine.low %v5703, %v5704
    %v6359 = vcombine.low %v5705, %v5706
    %v6361 = vunpack.c.l.s4 1966171168
    %v6362 = vunpack.c.0.s8 %v6361
    %v6363 = vlaneseq
    %v6364 = vshrl.u32 %v6363, 7
    %v6365 = vsub.s32 %v6362, %v6364
    %v6366 = vrot.slane %v6356, %v6365
    %v6368 = vunpack.c.l.s4 1966171168
    %v6369 = vunpack.c.0.s8 %v6368
    %v6370 = vlaneseq
    %v6371 = vshrl.u32 %v6370, 7
    %v6372 = vsub.s32 %v6369, %v6371
    %v6373 = vrot.slane %v6357, %v6372
    %v6375 = vunpack.c.l.s4 1966171168
    %v6376 = vunpack.c.0.s8 %v6375
    %v6377 = vlaneseq
    %v6378 = vshrl.u32 %v6377, 7
    %v6379 = vsub.s32 %v6376, %v6378
    %v6380 = vrot.slane %v6358, %v6379
    %v6382 = vunpack.c.l.s4 1966171168
    %v6383 = vunpack.c.0.s8 %v6382
    %v6384 = vlaneseq
    %v6385 = vshrl.u32 %v6384, 7
    %v6386 = vsub.s32 %v6383, %v6385
    %v6387 = vrot.slane %v6359, %v6386
    %v6388 = vcombine.low %v6366, %v6373
    %v6389 = vcombine.low %v6380, %v6387
    %v6391 = vunpack.c.l.s4 1966171168
    %v6392 = vunpack.c.0.s8 %v6391
    %v6393 = vlaneseq
    %v6394 = vshrl.u32 %v6393, 7
    %v6395 = vsub.s32 %v6392, %v6394
    %v6396 = vrot.slane %v6388, %v6395
    %v6398 = vunpack.c.l.s4 1966171168
    %v6399 = vunpack.c.0.s8 %v6398
    %v6400 = vlaneseq
    %v6401 = vshrl.u32 %v6400, 7
    %v6402 = vsub.s32 %v6399, %v6401
    %v6403 = vrot.slane %v6389, %v6402
    %v6404 = vcombine.low %v6396, %v6403
    %v6405 = vcombine.low %v5707, %v5708
    %v6406 = vcombine.low %v5709, %v5710
    %v6407 = vcombine.low %v5711, %v5712
    %v6408 = vcombine.low %v5713, %v5714
    %v6410 = vunpack.c.l.s4 1966171168
    %v6411 = vunpack.c.0.s8 %v6410
    %v6412 = vlaneseq
    %v6413 = vshrl.u32 %v6412, 7
    %v6414 = vsub.s32 %v6411, %v6413
    %v6415 = vrot.slane %v6405, %v6414
    %v6417 = vunpack.c.l.s4 1966171168
    %v6418 = vunpack.c.0.s8 %v6417
    %v6419 = vlaneseq
    %v6420 = vshrl.u32 %v6419, 7
    %v6421 = vsub.s32 %v6418, %v6420
    %v6422 = vrot.slane %v6406, %v6421
    %v6424 = vunpack.c.l.s4 1966171168
    %v6425 = vunpack.c.0.s8 %v6424
    %v6426 = vlaneseq
    %v6427 = vshrl.u32 %v6426, 7
    %v6428 = vsub.s32 %v6425, %v6427
    %v6429 = vrot.slane %v6407, %v6428
    %v6431 = vunpack.c.l.s4 1966171168
    %v6432 = vunpack.c.0.s8 %v6431
    %v6433 = vlaneseq
    %v6434 = vshrl.u32 %v6433, 7
    %v6435 = vsub.s32 %v6432, %v6434
    %v6436 = vrot.slane %v6408, %v6435
    %v6437 = vcombine.low %v6415, %v6422
    %v6438 = vcombine.low %v6429, %v6436
    %v6440 = vunpack.c.l.s4 1966171168
    %v6441 = vunpack.c.0.s8 %v6440
    %v6442 = vlaneseq
    %v6443 = vshrl.u32 %v6442, 7
    %v6444 = vsub.s32 %v6441, %v6443
    %v6445 = vrot.slane %v6437, %v6444
    %v6447 = vunpack.c.l.s4 1966171168
    %v6448 = vunpack.c.0.s8 %v6447
    %v6449 = vlaneseq
    %v6450 = vshrl.u32 %v6449, 7
    %v6451 = vsub.s32 %v6448, %v6450
    %v6452 = vrot.slane %v6438, %v6451
    %v6453 = vcombine.low %v6445, %v6452
    %v6454 = vcombine.low %v5715, %v5716
    %v6455 = vcombine.low %v5717, %v5718
    %v6457 = vunpack.c.l.s4 1966171168
    %v6458 = vunpack.c.0.s8 %v6457
    %v6459 = vlaneseq
    %v6460 = vshrl.u32 %v6459, 7
    %v6461 = vsub.s32 %v6458, %v6460
    %v6462 = vrot.slane %v6454, %v6461
    %v6464 = vunpack.c.l.s4 1966171168
    %v6465 = vunpack.c.0.s8 %v6464
    %v6466 = vlaneseq
    %v6467 = vshrl.u32 %v6466, 7
    %v6468 = vsub.s32 %v6465, %v6467
    %v6469 = vrot.slane %v6455, %v6468
    %v6471 = vunpack.c.l.s4 1966171168
    %v6472 = vunpack.c.0.s8 %v6471
    %v6473 = vlaneseq
    %v6474 = vshrl.u32 %v6473, 7
    %v6475 = vsub.s32 %v6472, %v6474
    %v6476 = vrot.slane %v5719, %v6475
    %v6477 = vcombine.low %v6462, %v6469
    %v6479 = vunpack.c.l.s4 1966171168
    %v6480 = vunpack.c.0.s8 %v6479
    %v6481 = vlaneseq
    %v6482 = vshrl.u32 %v6481, 7
    %v6483 = vsub.s32 %v6480, %v6482
    %v6484 = vrot.slane %v6477, %v6483
    %v6486 = vunpack.c.l.s4 1966171168
    %v6487 = vunpack.c.0.s8 %v6486
    %v6488 = vlaneseq
    %v6489 = vshrl.u32 %v6488, 7
    %v6490 = vsub.s32 %v6487, %v6489
    %v6491 = vrot.slane %v6476, %v6490
    %v6492 = vcombine.low %v6484, %v6491
    %vm6507 = vcmask 523264
    %v6508 = vsel %vm6507, %v5875, -inf
    %v6509 = vsel %vm6507, %v5924, -inf
    %v6510 = vsel %vm6507, %v5973, -inf
    %v6511 = vmax.f32 %v6508, %v6510
    %v6512 = vsel %vm6507, %v6022, -inf
    %v6513 = vmax.f32 %v6509, %v6512
    %v6514 = vsel %vm6507, %v6071, -inf
    %v6515 = vmax.f32 %v6511, %v6514
    %v6516 = vsel %vm6507, %v6120, -inf
    %v6517 = vmax.f32 %v6513, %v6516
    %vm6518 = vcmask 520192
    %v6519 = vsel %vm6518, %v6159, -inf
    %v6520 = vmax.f32 %v6515, %v6519
    %v6521 = vmax.f32 %v6520, %v6517
    %v6522 = vrot.slane %v6521, 4
    %v6523 = vmax.f32 %v6521, %v6522
    %v6524 = vrot.slane %v6523, 2
    %v6525 = vmax.f32 %v6523, %v6524
    %v6526 = vrot.slane %v6525, 1
    %v6527 = vmax.f32 %v6525, %v6526
    %v6528 = vsel %vm6507, %v6208, -inf
    %v6529 = vsel %vm6507, %v6257, -inf
    %v6530 = vsel %vm6507, %v6306, -inf
    %v6531 = vmax.f32 %v6528, %v6530
    %v6532 = vsel %vm6507, %v6355, -inf
    %v6533 = vmax.f32 %v6529, %v6532
    %v6534 = vsel %vm6507, %v6404, -inf
    %v6535 = vmax.f32 %v6531, %v6534
    %v6536 = vsel %vm6507, %v6453, -inf
    %v6537 = vmax.f32 %v6533, %v6536
    %v6538 = vsel %vm6518, %v6492, -inf
    %v6539 = vmax.f32 %v6535, %v6538
    %v6540 = vmax.f32 %v6539, %v6537
    %v6541 = vrot.slane %v6540, 4
    %v6542 = vmax.f32 %v6540, %v6541
    %v6543 = vrot.slane %v6542, 2
    %v6544 = vmax.f32 %v6542, %v6543
    %v6545 = vrot.slane %v6544, 1
    %v6546 = vmax.f32 %v6544, %v6545
    %vm6549 = vcmask 1041409
    %v6550 = vsel %vm6549, %v6546, %v6527
    %v6552 = vmax.f32 %v5720, %v6550
    %vm6553 = vcmask 517120
    %6554 = vst.msk [vmem:[#allocation2] sm:$0x3] %vm6553, %v6552
    // Predicated region
    $region70: #{tpu_custom_call.1} parent=1 // pred_check
      %p6555 = pneg %p129
    $region71: #{tpu_custom_call.1} parent=1 // pred_check_branch
      %6557 = sbr.rel (%p6555) target = $region73
    $region72: #{tpu_custom_call.1} parent=1 // pred_region
      %v6558 = vld [vmem:[#allocation2] sm:$0x3]
      %v6559 = vld [vmem:[#allocation14] sm:$0xff]
      %v6560 = vld [vmem:[#allocation14 + $0x8] sm:$0xff]
      %v6561 = vld [vmem:[#allocation14 + $0x10] sm:$0xff]
      %v6562 = vld [vmem:[#allocation14 + $0x18] sm:$0xff]
      %v6563 = vld [vmem:[#allocation14 + $0x20] sm:$0xff]
      %v6564 = vld [vmem:[#allocation14 + $0x28] sm:$0xff]
      %v6565 = vld [vmem:[#allocation14 + $0x30] sm:$0xff]
      %v6566 = vld [vmem:[#allocation14 + $0x38] sm:$0xff]
      %v6567 = vld [vmem:[#allocation15] sm:$0x1]
      %v6569 = vlaneseq
      %v6570 = vshrl.u32 %v6569, 7
      %v6571 = vsub.s32 0, %v6570
      %v6572 = vrot.slane %v6567, %v6571
      %v6575 = vsel %vm6507, %v6558, 0
      %6577 = vmatprep.subr.mxu0 0.0
      %6578 = vmatpush1.msra.mxu0 %v6559
      %6579 = vmatprep.subr.mxu0 0.0
      %6580 = vmatpush1.msra.mxu0 %v6560
      %6581 = vmatprep.subr.mxu0 0.0
      %6582 = vmatpush1.msra.mxu0 %v6561
      %6583 = vmatprep.subr.mxu0 0.0
      %6584 = vmatpush1.msra.mxu0 %v6562
      %6585 = vmatprep.subr.mxu0 0.0
      %6586 = vmatpush1.msra.mxu0 %v6563
      %6587 = vmatprep.subr.mxu0 0.0
      %6588 = vmatpush1.msra.mxu0 %v6564
      %6589 = vmatprep.subr.mxu0 0.0
      %6590 = vmatpush1.msra.mxu0 %v6565
      %6591 = vmatprep.subr.mxu0 0.0
      %6592 = vmatpush1.msra.mxu0 %v6566
      %6593 = vmatprep.subr.mxu0 0.0
      %6594 = vmatpush1.msra.mxu0 0.0
      %6595 = vmatprep.subr.mxu0 0.0
      %6596 = vmatpush1.msra.mxu0 0.0
      %6597 = vmatprep.subr.mxu0 0.0
      %6598 = vmatpush1.msra.mxu0 0.0
      %6599 = vmatprep.subr.mxu0 0.0
      %6600 = vmatpush1.msra.mxu0 0.0
      %6601 = vmatprep.subr.mxu0 0.0
      %6602 = vmatpush1.msra.mxu0 0.0
      %6603 = vmatprep.subr.mxu0 0.0
      %6604 = vmatpush1.msra.mxu0 0.0
      %6605 = vmatprep.subr.mxu0 0.0
      %6606 = vmatpush1.msra.mxu0 0.0
      %6607 = vmatprep.subr.mxu0 0.0
      %6608 = vmatpush1.msra.mxu0 0.0
      %6609 = vmatprep.subr.mxu0 0.0
      %6610 = vmatpush1.msra.mxu0 0.0
      %6611 = vmatprep.subr.mxu0 0.0
      %6612 = vmatpush1.msra.mxu0 0.0
      %6613 = vmatprep.subr.mxu0 0.0
      %6614 = vmatpush1.msra.mxu0 0.0
      %6615 = vmatprep.subr.mxu0 0.0
      %6616 = vmatpush1.msra.mxu0 0.0
      %6617 = vmatprep.subr.mxu0 0.0
      %6618 = vmatpush1.msra.mxu0 0.0
      %6619 = vmatprep.subr.mxu0 0.0
      %6620 = vmatpush1.msra.mxu0 0.0
      %6621 = vmatprep.subr.mxu0 0.0
      %6622 = vmatpush1.msra.mxu0 0.0
      %6623 = vmatprep.subr.mxu0 0.0
      %6624 = vmatpush1.msra.mxu0 0.0
      %6625 = vmatprep.subr.mxu0 0.0
      %6626 = vmatpush1.msra.mxu0 0.0
      %6627 = vmatprep.subr.mxu0 0.0
      %6628 = vmatpush1.msra.mxu0 0.0
      %6629 = vmatprep.subr.mxu0 0.0
      %6630 = vmatpush1.msra.mxu0 0.0
      %6631 = vmatprep.subr.mxu0 0.0
      %6632 = vmatpush1.msra.mxu0 0.0
      %6633 = vmatprep.subr.mxu0 0.0
      %6634 = vmatpush1.msra.mxu0 0.0
      %6635 = vmatprep.subr.mxu0 0.0
      %6636 = vmatpush1.msra.mxu0 0.0
      %6637 = vmatprep.subr.mxu0 0.0
      %6638 = vmatpush1.msra.mxu0 0.0
      %6639 = vmatprep.subr.mxu0 0.0
      %6640 = vmatpush1.msra.mxu0 0.0
      %6641 = vmatprep.mubr.f32.mxu0 0.0
      %6642 = vmatmul.mubr.f32.gmra.mrb[0].mxu0 %v6575
      %v6643 = vpop.f32.mrb[0].mxu0
      %v6644 = vadd.f32 %v6572, %v6643
      %v6645 = vpop.f32.mrb[0].mxu0
      %6646 = vdwg.mxu0
      %6647 = vst [vmem:[#allocation17] sm:$0x3] %v6644
    $region73: #{tpu_custom_call.1} parent=1 // pred_fallthru
      _
    // Predicated region
    $region74: #{tpu_custom_call.1} parent=1 // pred_check
      _
    $region75: #{tpu_custom_call.1} parent=1 // pred_check_branch
      %6649 = sbr.rel (0) target = $region77
    $region76: #{tpu_custom_call.1} parent=1 // pred_region
      %s6651 = ssub.s32 32, 32
      %6652 = vsyncadd [#allocation5], %s6651
      %s6654 = sshll.u32 [#allocation17], 4
      %s6655 = int_to_ptr.vmem [resolvable:$true] %s6654
      %6657 = dma.vmem_to_hbm [thread:$0]  %s6655, 32, %s8, [#allocation5]
    $region77: #{tpu_custom_call.1} parent=1 // pred_fallthru
      _
    // Predicated region
    $region78: #{tpu_custom_call.1} parent=1 // pred_check
      _
    $region79: #{tpu_custom_call.1} parent=1 // pred_check_branch
      %6659 = sbr.rel (0) target = $region81
    $region80: #{tpu_custom_call.1} parent=1 // pred_region
      %6660 = dma.done [#allocation5], 32
    $region81: #{tpu_custom_call.1} parent=1 // pred_fallthru
      _
    %6661 = vsyncpa [#allocation4], 1
    %6662 = vsyncpa [#allocation7], 1
    %6663 = vsyncpa [#allocation10], 1
    %6664 = vsyncpa [#allocation13], 1
    %6665 = vsyncpa [#allocation16], 1
    %6666 = vsyncpa [#allocation5], 1

</llo_original>
